<compile_context>
chip_gen: v5e
topology: v5e:2x2
jax: 0.10.0
libtpu: 0.0.40
codegen_flags: <defaults>
</compile_context>

<pallas_src>
import functools

import jax
import jax.numpy as jnp
import numpy as np
from jax import lax
from jax.experimental import pallas as pl
from jax.experimental.pallas import tpu as pltpu


def _round_up(x, m):
    return (x + m - 1) // m * m


def _pick_row_tiles(H, Ho):
    """Number of row tiles per image: keep tile_h even (bf16 packing-aligned
    tile bases) and at least 4 image rows per step."""
    for T in (8, 4, 2):
        if Ho % T == 0 and H % T == 0 and (H // T) % 2 == 0 and (H // T) >= 4:
            return T
    return 1


# ----------------------------------------------------------------------------
# Pallas kernels
# ----------------------------------------------------------------------------
def _conv3x3_kernel(x_ref, w_ref, b_ref, o_ref, xs_ref, ys_ref, hs_ref=None, *,
                    Wp, W, tile_h, pool):
    """Fused 3x3 'same' conv + bias + ReLU (+ 2x2/s2 maxpool) for one row tile.

    x_ref : (rows_in, Cin) bf16  whole padded image, flattened (row stride Wp)
    w_ref : (9, Cin, Cout) bf16  per-tap weights
    b_ref : (1, Cout) f32        bias
    o_ref : (tile_ho, Wo, Cout) bf16
    xs_ref: (rows_ext, Cin) f32  staged input slab (tile + halo)
    ys_ref: (tile_rows, Cout) f32  conv+bias+ReLU result for this tile
    hs_ref: (tile_rows//2, Cout) f32  horizontal-pair max (pool only)
    """
    cout = o_ref.shape[-1]
    tile_rows = tile_h * Wp
    rows_ext = xs_ref.shape[0]

    # Stage this tile's bf16 slab (plus 2-row halo) into f32 scratch so all
    # shifted tap views below use plain 32-bit, statically-offset slices.
    align = 16 if tile_rows % 16 == 0 else 8
    base = pl.multiple_of(pl.program_id(1) * tile_rows, align)
    xs_ref[...] = x_ref[pl.ds(base, rows_ext), :].astype(jnp.float32)

    # 9 shifted-window taps, each a bf16 x bf16 MXU matmul with f32 accumulate.
    acc = jnp.zeros((tile_rows, cout), jnp.float32)
    for tap in range(9):
        di, dj = divmod(tap, 3)
        win = xs_ref[pl.ds(di * Wp + dj, tile_rows), :].astype(jnp.bfloat16)
        acc = acc + jnp.dot(win, w_ref[tap], preferred_element_type=jnp.float32)

    y = jnp.maximum(acc + b_ref[...], 0.0)          # bias + ReLU epilogue (f32)
    ys_ref[...] = y

    if pool:
        # 2x2/s2 maxpool on the VPU:
        #  1) horizontal pair max via two stride-2 row views of the flat result
        #  2) vertical pair max + compaction via contiguous row views.
        half = tile_rows // 2
        hs_ref[...] = jnp.maximum(
            ys_ref[pl.ds(0, half, stride=2), :],
            ys_ref[pl.ds(1, half, stride=2), :])
        Wh = Wp // 2
        Wo = W // 2
        for ho in range(tile_h // 2):
            top = hs_ref[pl.ds((2 * ho) * Wh, Wo), :]
            bot = hs_ref[pl.ds((2 * ho + 1) * Wh, Wo), :]
            o_ref[ho] = jnp.maximum(top, bot).astype(o_ref.dtype)
    else:
        # Valid-column extraction only (drop the Wp - W pad/garbage columns).
        for h in range(tile_h):
            o_ref[h] = ys_ref[pl.ds(h * Wp, W), :].astype(o_ref.dtype)


def _linear_kernel(x_ref, w_ref, b_ref, o_ref, *, relu):
    # x: (M, K) bf16, w: (K, tn) bf16, b: (1, tn) f32 -> o: (M, tn)
    acc = jnp.dot(x_ref[...], w_ref[...], preferred_element_type=jnp.float32)
    acc = acc + b_ref[...]
    if relu:
        acc = jnp.maximum(acc, 0.0)
    o_ref[...] = acc.astype(o_ref.dtype)


# ----------------------------------------------------------------------------
# Wrappers
# ----------------------------------------------------------------------------
def conv3x3_bias_relu(x_nhwc, w9, b_row, *, pool):
    """relu(conv3x3_same(x) + b), optionally followed by a fused 2x2/s2 maxpool.

    x_nhwc: (N, H, W, Cin) bf16/float; w9: (9, Cin, Cout) bf16; b_row: (1, Cout) f32.
    Returns (N, Ho, Wo, Cout) bf16.
    """
    N, H, W, Cin = x_nhwc.shape
    Cout = w9.shape[-1]
    Wp = _round_up(W + 2, 8)               # padded row stride (sublane aligned)
    Ho, Wo = (H // 2, W // 2) if pool else (H, W)

    T = _pick_row_tiles(H, Ho)
    assert Ho % T == 0 and H % T == 0
    tile_ho = Ho // T
    tile_h = H // T
    tile_rows = tile_h * Wp
    rows_in = (H + 3) * Wp                 # 1 top + 2 bottom pad rows
    rows_ext = tile_rows + 2 * Wp + 8      # tile + halo for the 9 taps

    xp = jnp.pad(x_nhwc.astype(jnp.bfloat16),
                 ((0, 0), (1, 2), (1, Wp - W - 1), (0, 0)))
    xf = xp.reshape(N, rows_in, Cin)

    scratch = [pltpu.VMEM((rows_ext, Cin), jnp.float32),
               pltpu.VMEM((tile_rows, Cout), jnp.float32)]
    if pool:
        scratch.append(pltpu.VMEM((tile_rows // 2, Cout), jnp.float32))

    flops = 2 * 9 * N * H * Wp * Cin * Cout
    bytes_accessed = (N * rows_in * Cin * 2 + 9 * Cin * Cout * 2 + Cout * 4
                      + N * Ho * Wo * Cout * 2)

    out = pl.pallas_call(
        functools.partial(_conv3x3_kernel, Wp=Wp, W=W, tile_h=tile_h, pool=pool),
        out_shape=jax.ShapeDtypeStruct((N, Ho, Wo, Cout), jnp.bfloat16),
        grid_spec=pltpu.PrefetchScalarGridSpec(
            num_scalar_prefetch=0,
            grid=(N, T),                   # batch x row-tiles, both parallel
            in_specs=[
                # Whole padded image stays resident across its row tiles
                # (same block index along axis 1 -> no re-DMA).
                pl.BlockSpec((None, rows_in, Cin), lambda n, t: (n, 0, 0)),
                pl.BlockSpec((9, Cin, Cout), lambda n, t: (0, 0, 0)),
                pl.BlockSpec((1, Cout), lambda n, t: (0, 0)),
            ],
            out_specs=pl.BlockSpec((None, tile_ho, Wo, Cout),
                                   lambda n, t: (n, t, 0, 0)),
            scratch_shapes=scratch,
        ),
        compiler_params=pltpu.CompilerParams(
            dimension_semantics=("parallel", "parallel")),
        cost_estimate=pl.CostEstimate(flops=flops, transcendentals=0,
                                      bytes_accessed=bytes_accessed),
    )(xf, w9, b_row)
    return out


def linear(x, w, b, *, relu, out_dtype=jnp.bfloat16):
    """relu?(x @ w + b): bf16 operands, f32 accumulate, tiled 128-wide over N."""
    M, K = x.shape
    _, Np = w.shape                        # Np already padded to a mult. of 128
    tn = 128 if Np % 128 == 0 else Np
    grid = (Np // tn,)
    out = pl.pallas_call(
        functools.partial(_linear_kernel, relu=relu),
        out_shape=jax.ShapeDtypeStruct((M, Np), out_dtype),
        grid_spec=pltpu.PrefetchScalarGridSpec(
            num_scalar_prefetch=0,
            grid=grid,
            in_specs=[
                pl.BlockSpec((M, K), lambda j: (0, 0)),
                pl.BlockSpec((K, tn), lambda j: (0, j)),
                pl.BlockSpec((1, tn), lambda j: (0, j)),
            ],
            out_specs=pl.BlockSpec((M, tn), lambda j: (0, j)),
        ),
        compiler_params=pltpu.CompilerParams(dimension_semantics=("parallel",)),
        cost_estimate=pl.CostEstimate(
            flops=2 * M * K * Np, transcendentals=0,
            bytes_accessed=M * K * 2 + K * Np * 2 + Np * 4 + M * Np * 2),
    )(x.astype(jnp.bfloat16), w, b)
    return out


# ----------------------------------------------------------------------------
# Parameter preparation (done once, outside the jitted forward)
# ----------------------------------------------------------------------------
def prepare_params(params, arch):
    """Cast/reshape weights once: conv -> (9, Cin, Cout) bf16, FC -> bf16 with
    output features zero-padded to a multiple of 128 (lane-dense fc3 stores)."""
    prep = {}
    for i, (num_convs, _, _) in enumerate(arch):
        for j in range(num_convs):
            w = params[f"w{i}_{j}"]
            prep[f"cw{i}_{j}"] = w.reshape(9, w.shape[2], w.shape[3]).astype(
                jnp.bfloat16)
            prep[f"cb{i}_{j}"] = params[f"b{i}_{j}"].reshape(1, -1).astype(
                jnp.float32)
    for n in (1, 2, 3):
        w = params[f"fc{n}_w"].astype(jnp.bfloat16)
        b = params[f"fc{n}_b"].reshape(1, -1).astype(jnp.float32)
        Nf = w.shape[1]
        Np = _round_up(Nf, 128)
        if Np != Nf:
            w = jnp.pad(w, ((0, 0), (0, Np - Nf)))
            b = jnp.pad(b, ((0, 0), (0, Np - Nf)))
        prep[f"fc{n}_w"] = w
        prep[f"fc{n}_b"] = b
    return prep


# ----------------------------------------------------------------------------
# VGG11 forward (conv blocks -> flatten -> 3 FC layers)
# ----------------------------------------------------------------------------
def vgg11_forward(x_nchw, prepared, arch, num_classes):
    # One entry transpose; channels-last bf16 end-to-end afterwards.
    x = jnp.transpose(x_nchw, (0, 2, 3, 1)).astype(jnp.bfloat16)
    for i, (num_convs, _, _) in enumerate(arch):
        for j in range(num_convs):
            x = conv3x3_bias_relu(x, prepared[f"cw{i}_{j}"], prepared[f"cb{i}_{j}"],
                                  pool=(j == num_convs - 1))
    # Flatten (NHWC order; equivalent to PyTorch's NCHW flatten up to a fixed
    # permutation of fc1 weight rows, which are defined in this script).
    feat = x.reshape(x.shape[0], -1)
    h = linear(feat, prepared["fc1_w"], prepared["fc1_b"], relu=True)
    # Dropout(p=0.5) is identity in inference mode.
    h = linear(h, prepared["fc2_w"], prepared["fc2_b"], relu=True)
    logits = linear(h, prepared["fc3_w"], prepared["fc3_b"], relu=False,
                    out_dtype=jnp.float32)
    return logits[:, :num_classes]


# ----------------------------------------------------------------------------
# Pure-JAX reference (mirrors the bf16 quantization points of the Pallas path)
# ----------------------------------------------------------------------------
def vgg11_reference(x_nchw, params, arch):
    bf = lambda a: a.astype(jnp.bfloat16).astype(jnp.float32)
    hp = lax.Precision.HIGHEST
    x = bf(x_nchw)
    for i, (num_convs, _, _) in enumerate(arch):
        for j in range(num_convs):
            w = bf(params[f"w{i}_{j}"])
            bb = params[f"b{i}_{j}"].astype(jnp.float32)
            x = lax.conv_general_dilated(
                x, w, (1, 1), [(1, 1), (1, 1)],
                dimension_numbers=("NCHW", "HWIO", "NCHW"), precision=hp)
            x = jax.nn.relu(x + bb.reshape(1, -1, 1, 1))
            if j == num_convs - 1:
                x = lax.reduce_window(x, -jnp.inf, lax.max,
                                      (1, 1, 2, 2), (1, 1, 2, 2), "VALID")
            x = bf(x)                        # activations stored as bf16
    feat = jnp.transpose(x, (0, 2, 3, 1)).reshape(x.shape[0], -1)
    h = bf(jax.nn.relu(jnp.dot(bf(feat), bf(params["fc1_w"]), precision=hp)
                       + params["fc1_b"]))
    h = bf(jax.nn.relu(jnp.dot(bf(h), bf(params["fc2_w"]), precision=hp)
                       + params["fc2_b"]))
    return jnp.dot(bf(h), bf(params["fc3_w"]), precision=hp) + params["fc3_b"]


# ----------------------------------------------------------------------------
# Parameter init (Xavier-style, HWIO conv weights, (K, N) linear weights)
# ----------------------------------------------------------------------------
def init_params(key, arch, fc_features, fc_hidden, num_classes):
    params = {}
    keys = iter(jax.random.split(key, 64))

    def xavier(k, shape, fan_in, fan_out):
        std = float(np.sqrt(2.0 / (fan_in + fan_out)))
        return std * jax.random.normal(k, shape, jnp.float32)

    for i, (num_convs, cin, cout) in enumerate(arch):
        c_in = cin
        for j in range(num_convs):
            params[f"w{i}_{j}"] = xavier(next(keys), (3, 3, c_in, cout),
                                         9 * c_in, 9 * cout)
            params[f"b{i}_{j}"] = 0.1 * jax.random.normal(next(keys), (cout,),
                                                          jnp.float32)
            c_in = cout
    dims = [(fc_features, fc_hidden), (fc_hidden, fc_hidden),
            (fc_hidden, num_classes)]
    for n, (kin, kout) in enumerate(dims, start=1):
        params[f"fc{n}_w"] = xavier(next(keys), (kin, kout), kin, kout)
        params[f"fc{n}_b"] = 0.1 * jax.random.normal(next(keys), (kout,),
                                                     jnp.float32)
    return params


if __name__ == "__main__":
    key = jax.random.PRNGKey(0)
    k_x, k_p = jax.random.split(key)

    # Small VGG11-style config: arch entries = (num_convs, in_ch, out_ch).
    arch = ((1, 4, 16), (2, 16, 32))
    batch, in_c, hw = 2, 4, 16
    num_classes = 10
    fc_hidden = 256                            # scaled-down stand-in for 4096
    spatial_out = hw // (2 ** len(arch))       # one 2x2/s2 pool per block
    fc_features = arch[-1][2] * spatial_out * spatial_out

    x = jax.random.normal(k_x, (batch, in_c, hw, hw), jnp.float32)  # NCHW
    params = init_params(k_p, arch, fc_features, fc_hidden, num_classes)
    prepared = prepare_params(params, arch)    # one-time bf16 weight prep

    fwd = jax.jit(lambda a, p: vgg11_forward(a, p, arch, num_classes))
    out = jax.block_until_ready(fwd(x, prepared))

    ref = vgg11_reference(x, params, arch)
    assert out.shape == (batch, num_classes), out.shape
    if not jnp.allclose(out, ref, atol=2e-2, rtol=2e-2):
        err = float(jnp.max(jnp.abs(out - ref)))
        raise RuntimeError(f"Pallas VGG11 output mismatch vs reference "
                           f"(max abs err {err})")

    print("KERNEL_OK")
</pallas_src>

<mosaic_0001>
module attributes {stable_mosaic.version = 11 : i64} {
  func.func @_conv3x3_kernel(%arg0: i32, %arg1: i32, %arg2: memref<1x456x4xbf16, #tpu.memory_space<vmem>>, %arg3: memref<9x4x16xbf16, #tpu.memory_space<vmem>>, %arg4: memref<1x16xf32, #tpu.memory_space<vmem>>, %arg5: memref<1x2x8x16xbf16, #tpu.memory_space<vmem>>, %arg6: memref<152x4xf32, #tpu.memory_space<vmem>>, %arg7: memref<96x16xf32, #tpu.memory_space<vmem>>, %arg8: memref<48x16xf32, #tpu.memory_space<vmem>>) attributes {dimension_semantics = [#tpu.dimension_semantics<parallel>, #tpu.dimension_semantics<parallel>], iteration_bounds = array<i64: 2, 4>, scalar_prefetch = 0 : i64, scratch_operands = 3 : i64, tpu.core_type = #tpu.core_type<tc>, window_params = [{transform_indices = @transform_0, window_bounds = array<i64: 1, 456, 4>}, {pipeline_mode = #tpu.pipeline_mode<synchronous>, transform_indices = @transform_1, window_bounds = array<i64: 9, 4, 16>}, {pipeline_mode = #tpu.pipeline_mode<synchronous>, transform_indices = @transform_2, window_bounds = array<i64: 1, 16>}, {transform_indices = @transform_3, window_bounds = array<i64: 1, 2, 8, 16>}]} {
    %c96_i32 = arith.constant 96 : i32
    %0 = arith.muli %arg1, %c96_i32 : i32
    %1 = tpu.assume_multiple %0, 16 : i32
    %c0 = arith.constant 0 : index
    %2 = arith.index_cast %1 : i32 to index
    %c0_0 = arith.constant 0 : index
    %3 = vector.load %arg2[%c0, %2, %c0_0] : memref<1x456x4xbf16, #tpu.memory_space<vmem>>, vector<1x152x4xbf16>
    %4 = vector.shape_cast %3 : vector<1x152x4xbf16> to vector<152x4xbf16>
    %5 = arith.extf %4 : vector<152x4xbf16> to vector<152x4xf32>
    %c0_1 = arith.constant 0 : index
    %c0_2 = arith.constant 0 : index
    %6 = vector.load %arg6[%c0_1, %c0_2] : memref<152x4xf32, #tpu.memory_space<vmem>>, vector<152x4xf32>
    tpu.vector_store %arg6[%c0_1, %c0_2], %5 {strides = array<i32>} : memref<152x4xf32, #tpu.memory_space<vmem>>, vector<152x4xf32>,
    %cst = arith.constant 0.000000e+00 : f32
    %7 = vector.broadcast %cst : f32 to vector<96x16xf32>
    %c0_3 = arith.constant 0 : index
    %c0_4 = arith.constant 0 : index
    %8 = vector.load %arg6[%c0_3, %c0_4] : memref<152x4xf32, #tpu.memory_space<vmem>>, vector<96x4xf32>
    %9 = arith.truncf %8 : vector<96x4xf32> to vector<96x4xbf16>
    %c0_5 = arith.constant 0 : index
    %c0_6 = arith.constant 0 : index
    %c0_7 = arith.constant 0 : index
    %10 = vector.load %arg3[%c0_5, %c0_6, %c0_7] : memref<9x4x16xbf16, #tpu.memory_space<vmem>>, vector<1x4x16xbf16>
    %11 = vector.shape_cast %10 : vector<1x4x16xbf16> to vector<4x16xbf16>
    %cst_8 = arith.constant dense<0.000000e+00> : vector<96x16xf32>
    %12 = tpu.matmul %9, %11, %cst_8 {dimension_numbers = #tpu.dot_dimension_numbers<[1], [0], [0], [1], [0, 0, 1, 1], [], []>} : vector<96x4xbf16>, vector<4x16xbf16>, vector<96x16xf32> -> vector<96x16xf32>
    %13 = arith.addf %7, %12 : vector<96x16xf32>
    %c1 = arith.constant 1 : index
    %c0_9 = arith.constant 0 : index
    %14 = vector.load %arg6[%c1, %c0_9] : memref<152x4xf32, #tpu.memory_space<vmem>>, vector<96x4xf32>
    %15 = arith.truncf %14 : vector<96x4xf32> to vector<96x4xbf16>
    %c1_10 = arith.constant 1 : index
    %c0_11 = arith.constant 0 : index
    %c0_12 = arith.constant 0 : index
    %16 = vector.load %arg3[%c1_10, %c0_11, %c0_12] : memref<9x4x16xbf16, #tpu.memory_space<vmem>>, vector<1x4x16xbf16>
    %17 = vector.shape_cast %16 : vector<1x4x16xbf16> to vector<4x16xbf16>
    %cst_13 = arith.constant dense<0.000000e+00> : vector<96x16xf32>
    %18 = tpu.matmul %15, %17, %cst_13 {dimension_numbers = #tpu.dot_dimension_numbers<[1], [0], [0], [1], [0, 0, 1, 1], [], []>} : vector<96x4xbf16>, vector<4x16xbf16>, vector<96x16xf32> -> vector<96x16xf32>
    %19 = arith.addf %13, %18 : vector<96x16xf32>
    %c2 = arith.constant 2 : index
    %c0_14 = arith.constant 0 : index
    %20 = vector.load %arg6[%c2, %c0_14] : memref<152x4xf32, #tpu.memory_space<vmem>>, vector<96x4xf32>
    %21 = arith.truncf %20 : vector<96x4xf32> to vector<96x4xbf16>
    %c2_15 = arith.constant 2 : index
    %c0_16 = arith.constant 0 : index
    %c0_17 = arith.constant 0 : index
    %22 = vector.load %arg3[%c2_15, %c0_16, %c0_17] : memref<9x4x16xbf16, #tpu.memory_space<vmem>>, vector<1x4x16xbf16>
    %23 = vector.shape_cast %22 : vector<1x4x16xbf16> to vector<4x16xbf16>
    %cst_18 = arith.constant dense<0.000000e+00> : vector<96x16xf32>
    %24 = tpu.matmul %21, %23, %cst_18 {dimension_numbers = #tpu.dot_dimension_numbers<[1], [0], [0], [1], [0, 0, 1, 1], [], []>} : vector<96x4xbf16>, vector<4x16xbf16>, vector<96x16xf32> -> vector<96x16xf32>
    %25 = arith.addf %19, %24 : vector<96x16xf32>
    %c24 = arith.constant 24 : index
    %c0_19 = arith.constant 0 : index
    %26 = vector.load %arg6[%c24, %c0_19] : memref<152x4xf32, #tpu.memory_space<vmem>>, vector<96x4xf32>
    %27 = arith.truncf %26 : vector<96x4xf32> to vector<96x4xbf16>
    %c3 = arith.constant 3 : index
    %c0_20 = arith.constant 0 : index
    %c0_21 = arith.constant 0 : index
    %28 = vector.load %arg3[%c3, %c0_20, %c0_21] : memref<9x4x16xbf16, #tpu.memory_space<vmem>>, vector<1x4x16xbf16>
    %29 = vector.shape_cast %28 : vector<1x4x16xbf16> to vector<4x16xbf16>
    %cst_22 = arith.constant dense<0.000000e+00> : vector<96x16xf32>
    %30 = tpu.matmul %27, %29, %cst_22 {dimension_numbers = #tpu.dot_dimension_numbers<[1], [0], [0], [1], [0, 0, 1, 1], [], []>} : vector<96x4xbf16>, vector<4x16xbf16>, vector<96x16xf32> -> vector<96x16xf32>
    %31 = arith.addf %25, %30 : vector<96x16xf32>
    %c25 = arith.constant 25 : index
    %c0_23 = arith.constant 0 : index
    %32 = vector.load %arg6[%c25, %c0_23] : memref<152x4xf32, #tpu.memory_space<vmem>>, vector<96x4xf32>
    %33 = arith.truncf %32 : vector<96x4xf32> to vector<96x4xbf16>
    %c4 = arith.constant 4 : index
    %c0_24 = arith.constant 0 : index
    %c0_25 = arith.constant 0 : index
    %34 = vector.load %arg3[%c4, %c0_24, %c0_25] : memref<9x4x16xbf16, #tpu.memory_space<vmem>>, vector<1x4x16xbf16>
    %35 = vector.shape_cast %34 : vector<1x4x16xbf16> to vector<4x16xbf16>
    %cst_26 = arith.constant dense<0.000000e+00> : vector<96x16xf32>
    %36 = tpu.matmul %33, %35, %cst_26 {dimension_numbers = #tpu.dot_dimension_numbers<[1], [0], [0], [1], [0, 0, 1, 1], [], []>} : vector<96x4xbf16>, vector<4x16xbf16>, vector<96x16xf32> -> vector<96x16xf32>
    %37 = arith.addf %31, %36 : vector<96x16xf32>
    %c26 = arith.constant 26 : index
    %c0_27 = arith.constant 0 : index
    %38 = vector.load %arg6[%c26, %c0_27] : memref<152x4xf32, #tpu.memory_space<vmem>>, vector<96x4xf32>
    %39 = arith.truncf %38 : vector<96x4xf32> to vector<96x4xbf16>
    %c5 = arith.constant 5 : index
    %c0_28 = arith.constant 0 : index
    %c0_29 = arith.constant 0 : index
    %40 = vector.load %arg3[%c5, %c0_28, %c0_29] : memref<9x4x16xbf16, #tpu.memory_space<vmem>>, vector<1x4x16xbf16>
    %41 = vector.shape_cast %40 : vector<1x4x16xbf16> to vector<4x16xbf16>
    %cst_30 = arith.constant dense<0.000000e+00> : vector<96x16xf32>
    %42 = tpu.matmul %39, %41, %cst_30 {dimension_numbers = #tpu.dot_dimension_numbers<[1], [0], [0], [1], [0, 0, 1, 1], [], []>} : vector<96x4xbf16>, vector<4x16xbf16>, vector<96x16xf32> -> vector<96x16xf32>
    %43 = arith.addf %37, %42 : vector<96x16xf32>
    %c48 = arith.constant 48 : index
    %c0_31 = arith.constant 0 : index
    %44 = vector.load %arg6[%c48, %c0_31] : memref<152x4xf32, #tpu.memory_space<vmem>>, vector<96x4xf32>
    %45 = arith.truncf %44 : vector<96x4xf32> to vector<96x4xbf16>
    %c6 = arith.constant 6 : index
    %c0_32 = arith.constant 0 : index
    %c0_33 = arith.constant 0 : index
    %46 = vector.load %arg3[%c6, %c0_32, %c0_33] : memref<9x4x16xbf16, #tpu.memory_space<vmem>>, vector<1x4x16xbf16>
    %47 = vector.shape_cast %46 : vector<1x4x16xbf16> to vector<4x16xbf16>
    %cst_34 = arith.constant dense<0.000000e+00> : vector<96x16xf32>
    %48 = tpu.matmul %45, %47, %cst_34 {dimension_numbers = #tpu.dot_dimension_numbers<[1], [0], [0], [1], [0, 0, 1, 1], [], []>} : vector<96x4xbf16>, vector<4x16xbf16>, vector<96x16xf32> -> vector<96x16xf32>
    %49 = arith.addf %43, %48 : vector<96x16xf32>
    %c49 = arith.constant 49 : index
    %c0_35 = arith.constant 0 : index
    %50 = vector.load %arg6[%c49, %c0_35] : memref<152x4xf32, #tpu.memory_space<vmem>>, vector<96x4xf32>
    %51 = arith.truncf %50 : vector<96x4xf32> to vector<96x4xbf16>
    %c7 = arith.constant 7 : index
    %c0_36 = arith.constant 0 : index
    %c0_37 = arith.constant 0 : index
    %52 = vector.load %arg3[%c7, %c0_36, %c0_37] : memref<9x4x16xbf16, #tpu.memory_space<vmem>>, vector<1x4x16xbf16>
    %53 = vector.shape_cast %52 : vector<1x4x16xbf16> to vector<4x16xbf16>
    %cst_38 = arith.constant dense<0.000000e+00> : vector<96x16xf32>
    %54 = tpu.matmul %51, %53, %cst_38 {dimension_numbers = #tpu.dot_dimension_numbers<[1], [0], [0], [1], [0, 0, 1, 1], [], []>} : vector<96x4xbf16>, vector<4x16xbf16>, vector<96x16xf32> -> vector<96x16xf32>
    %55 = arith.addf %49, %54 : vector<96x16xf32>
    %c50 = arith.constant 50 : index
    %c0_39 = arith.constant 0 : index
    %56 = vector.load %arg6[%c50, %c0_39] : memref<152x4xf32, #tpu.memory_space<vmem>>, vector<96x4xf32>
    %57 = arith.truncf %56 : vector<96x4xf32> to vector<96x4xbf16>
    %c8 = arith.constant 8 : index
    %c0_40 = arith.constant 0 : index
    %c0_41 = arith.constant 0 : index
    %58 = vector.load %arg3[%c8, %c0_40, %c0_41] : memref<9x4x16xbf16, #tpu.memory_space<vmem>>, vector<1x4x16xbf16>
    %59 = vector.shape_cast %58 : vector<1x4x16xbf16> to vector<4x16xbf16>
    %cst_42 = arith.constant dense<0.000000e+00> : vector<96x16xf32>
    %60 = tpu.matmul %57, %59, %cst_42 {dimension_numbers = #tpu.dot_dimension_numbers<[1], [0], [0], [1], [0, 0, 1, 1], [], []>} : vector<96x4xbf16>, vector<4x16xbf16>, vector<96x16xf32> -> vector<96x16xf32>
    %61 = arith.addf %55, %60 : vector<96x16xf32>
    %c0_43 = arith.constant 0 : index
    %c0_44 = arith.constant 0 : index
    %62 = vector.load %arg4[%c0_43, %c0_44] : memref<1x16xf32, #tpu.memory_space<vmem>>, vector<1x16xf32>
    %63 = vector.broadcast %62 : vector<1x16xf32> to vector<96x16xf32>
    %64 = arith.addf %61, %63 : vector<96x16xf32>
    %cst_45 = arith.constant 0.000000e+00 : f32
    %65 = vector.broadcast %cst_45 : f32 to vector<96x16xf32>
    %66 = arith.maximumf %64, %65 : vector<96x16xf32>
    %c0_46 = arith.constant 0 : index
    %c0_47 = arith.constant 0 : index
    %67 = vector.load %arg7[%c0_46, %c0_47] : memref<96x16xf32, #tpu.memory_space<vmem>>, vector<96x16xf32>
    tpu.vector_store %arg7[%c0_46, %c0_47], %66 {strides = array<i32>} : memref<96x16xf32, #tpu.memory_space<vmem>>, vector<96x16xf32>,
    %c0_48 = arith.constant 0 : index
    %c0_49 = arith.constant 0 : index
    %68 = tpu.strided_load %arg7[%c0_48, %c0_49] {strides = array<i32: 2, 1>} : memref<96x16xf32, #tpu.memory_space<vmem>>, vector<48x16xf32>
    %c1_50 = arith.constant 1 : index
    %c0_51 = arith.constant 0 : index
    %69 = tpu.strided_load %arg7[%c1_50, %c0_51] {strides = array<i32: 2, 1>} : memref<96x16xf32, #tpu.memory_space<vmem>>, vector<48x16xf32>
    %70 = arith.maximumf %68, %69 : vector<48x16xf32>
    %c0_52 = arith.constant 0 : index
    %c0_53 = arith.constant 0 : index
    %71 = vector.load %arg8[%c0_52, %c0_53] : memref<48x16xf32, #tpu.memory_space<vmem>>, vector<48x16xf32>
    tpu.vector_store %arg8[%c0_52, %c0_53], %70 {strides = array<i32>} : memref<48x16xf32, #tpu.memory_space<vmem>>, vector<48x16xf32>,
    %c0_54 = arith.constant 0 : index
    %c0_55 = arith.constant 0 : index
    %72 = vector.load %arg8[%c0_54, %c0_55] : memref<48x16xf32, #tpu.memory_space<vmem>>, vector<8x16xf32>
    %c12 = arith.constant 12 : index
    %c0_56 = arith.constant 0 : index
    %73 = vector.load %arg8[%c12, %c0_56] : memref<48x16xf32, #tpu.memory_space<vmem>>, vector<8x16xf32>
    %74 = arith.maximumf %72, %73 : vector<8x16xf32>
    %75 = arith.truncf %74 : vector<8x16xf32> to vector<8x16xbf16>
    %c0_57 = arith.constant 0 : index
    %c0_58 = arith.constant 0 : index
    %c0_59 = arith.constant 0 : index
    %c0_60 = arith.constant 0 : index
    %76 = vector.load %arg5[%c0_57, %c0_58, %c0_59, %c0_60] : memref<1x2x8x16xbf16, #tpu.memory_space<vmem>>, vector<1x1x8x16xbf16>
    %77 = vector.shape_cast %76 : vector<1x1x8x16xbf16> to vector<8x16xbf16>
    %78 = vector.shape_cast %75 : vector<8x16xbf16> to vector<1x1x8x16xbf16>
    tpu.vector_store %arg5[%c0_57, %c0_58, %c0_59, %c0_60], %78 {strides = array<i32>} : memref<1x2x8x16xbf16, #tpu.memory_space<vmem>>, vector<1x1x8x16xbf16>,
    %c24_61 = arith.constant 24 : index
    %c0_62 = arith.constant 0 : index
    %79 = vector.load %arg8[%c24_61, %c0_62] : memref<48x16xf32, #tpu.memory_space<vmem>>, vector<8x16xf32>
    %c36 = arith.constant 36 : index
    %c0_63 = arith.constant 0 : index
    %80 = vector.load %arg8[%c36, %c0_63] : memref<48x16xf32, #tpu.memory_space<vmem>>, vector<8x16xf32>
    %81 = arith.maximumf %79, %80 : vector<8x16xf32>
    %82 = arith.truncf %81 : vector<8x16xf32> to vector<8x16xbf16>
    %c0_64 = arith.constant 0 : index
    %c1_65 = arith.constant 1 : index
    %c0_66 = arith.constant 0 : index
    %c0_67 = arith.constant 0 : index
    %83 = vector.load %arg5[%c0_64, %c1_65, %c0_66, %c0_67] : memref<1x2x8x16xbf16, #tpu.memory_space<vmem>>, vector<1x1x8x16xbf16>
    %84 = vector.shape_cast %83 : vector<1x1x8x16xbf16> to vector<8x16xbf16>
    %85 = vector.shape_cast %82 : vector<8x16xbf16> to vector<1x1x8x16xbf16>
    tpu.vector_store %arg5[%c0_64, %c1_65, %c0_66, %c0_67], %85 {strides = array<i32>} : memref<1x2x8x16xbf16, #tpu.memory_space<vmem>>, vector<1x1x8x16xbf16>,
    return
  }
  func.func @transform_0(%arg0: i32, %arg1: i32) -> (i32, i32, i32) {
    %c0_i32 = arith.constant 0 : i32
    %c0_i32_0 = arith.constant 0 : i32
    %c0_i32_1 = arith.constant 0 : i32
    return %arg0, %c0_i32, %c0_i32_0 : i32, i32, i32
  }
  func.func @transform_1(%arg0: i32, %arg1: i32) -> (i32, i32, i32) {
    %c0_i32 = arith.constant 0 : i32
    %c0_i32_0 = arith.constant 0 : i32
    %c0_i32_1 = arith.constant 0 : i32
    %c0_i32_2 = arith.constant 0 : i32
    return %c0_i32, %c0_i32_0, %c0_i32_1 : i32, i32, i32
  }
  func.func @transform_2(%arg0: i32, %arg1: i32) -> (i32, i32) {
    %c0_i32 = arith.constant 0 : i32
    %c0_i32_0 = arith.constant 0 : i32
    %c0_i32_1 = arith.constant 0 : i32
    return %c0_i32, %c0_i32_0 : i32, i32
  }
  func.func @transform_3(%arg0: i32, %arg1: i32) -> (i32, i32, i32, i32) {
    %c0_i32 = arith.constant 0 : i32
    %c0_i32_0 = arith.constant 0 : i32
    %c0_i32_1 = arith.constant 0 : i32
    return %arg0, %arg1, %c0_i32, %c0_i32_0 : i32, i32, i32, i32
  }
}

module attributes {stable_mosaic.version = 11 : i64} {
  func.func @_conv3x3_kernel(%arg0: i32, %arg1: i32, %arg2: memref<1x176x16xbf16, #tpu.memory_space<vmem>>, %arg3: memref<9x16x32xbf16, #tpu.memory_space<vmem>>, %arg4: memref<1x32xf32, #tpu.memory_space<vmem>>, %arg5: memref<1x4x8x32xbf16, #tpu.memory_space<vmem>>, %arg6: memref<104x16xf32, #tpu.memory_space<vmem>>, %arg7: memref<64x32xf32, #tpu.memory_space<vmem>>) attributes {dimension_semantics = [#tpu.dimension_semantics<parallel>, #tpu.dimension_semantics<parallel>], iteration_bounds = array<i64: 2, 2>, scalar_prefetch = 0 : i64, scratch_operands = 2 : i64, tpu.core_type = #tpu.core_type<tc>, window_params = [{transform_indices = @transform_0, window_bounds = array<i64: 1, 176, 16>}, {pipeline_mode = #tpu.pipeline_mode<synchronous>, transform_indices = @transform_1, window_bounds = array<i64: 9, 16, 32>}, {pipeline_mode = #tpu.pipeline_mode<synchronous>, transform_indices = @transform_2, window_bounds = array<i64: 1, 32>}, {transform_indices = @transform_3, window_bounds = array<i64: 1, 4, 8, 32>}]} {
    %c64_i32 = arith.constant 64 : i32
    %0 = arith.muli %arg1, %c64_i32 : i32
    %1 = tpu.assume_multiple %0, 16 : i32
    %c0 = arith.constant 0 : index
    %2 = arith.index_cast %1 : i32 to index
    %c0_0 = arith.constant 0 : index
    %3 = vector.load %arg2[%c0, %2, %c0_0] : memref<1x176x16xbf16, #tpu.memory_space<vmem>>, vector<1x104x16xbf16>
    %4 = vector.shape_cast %3 : vector<1x104x16xbf16> to vector<104x16xbf16>
    %5 = arith.extf %4 : vector<104x16xbf16> to vector<104x16xf32>
    %c0_1 = arith.constant 0 : index
    %c0_2 = arith.constant 0 : index
    %6 = vector.load %arg6[%c0_1, %c0_2] : memref<104x16xf32, #tpu.memory_space<vmem>>, vector<104x16xf32>
    tpu.vector_store %arg6[%c0_1, %c0_2], %5 {strides = array<i32>} : memref<104x16xf32, #tpu.memory_space<vmem>>, vector<104x16xf32>,
    %cst = arith.constant 0.000000e+00 : f32
    %7 = vector.broadcast %cst : f32 to vector<64x32xf32>
    %c0_3 = arith.constant 0 : index
    %c0_4 = arith.constant 0 : index
    %8 = vector.load %arg6[%c0_3, %c0_4] : memref<104x16xf32, #tpu.memory_space<vmem>>, vector<64x16xf32>
    %9 = arith.truncf %8 : vector<64x16xf32> to vector<64x16xbf16>
    %c0_5 = arith.constant 0 : index
    %c0_6 = arith.constant 0 : index
    %c0_7 = arith.constant 0 : index
    %10 = vector.load %arg3[%c0_5, %c0_6, %c0_7] : memref<9x16x32xbf16, #tpu.memory_space<vmem>>, vector<1x16x32xbf16>
    %11 = vector.shape_cast %10 : vector<1x16x32xbf16> to vector<16x32xbf16>
    %cst_8 = arith.constant dense<0.000000e+00> : vector<64x32xf32>
    %12 = tpu.matmul %9, %11, %cst_8 {dimension_numbers = #tpu.dot_dimension_numbers<[1], [0], [0], [1], [0, 0, 1, 1], [], []>} : vector<64x16xbf16>, vector<16x32xbf16>, vector<64x32xf32> -> vector<64x32xf32>
    %13 = arith.addf %7, %12 : vector<64x32xf32>
    %c1 = arith.constant 1 : index
    %c0_9 = arith.constant 0 : index
    %14 = vector.load %arg6[%c1, %c0_9] : memref<104x16xf32, #tpu.memory_space<vmem>>, vector<64x16xf32>
    %15 = arith.truncf %14 : vector<64x16xf32> to vector<64x16xbf16>
    %c1_10 = arith.constant 1 : index
    %c0_11 = arith.constant 0 : index
    %c0_12 = arith.constant 0 : index
    %16 = vector.load %arg3[%c1_10, %c0_11, %c0_12] : memref<9x16x32xbf16, #tpu.memory_space<vmem>>, vector<1x16x32xbf16>
    %17 = vector.shape_cast %16 : vector<1x16x32xbf16> to vector<16x32xbf16>
    %cst_13 = arith.constant dense<0.000000e+00> : vector<64x32xf32>
    %18 = tpu.matmul %15, %17, %cst_13 {dimension_numbers = #tpu.dot_dimension_numbers<[1], [0], [0], [1], [0, 0, 1, 1], [], []>} : vector<64x16xbf16>, vector<16x32xbf16>, vector<64x32xf32> -> vector<64x32xf32>
    %19 = arith.addf %13, %18 : vector<64x32xf32>
    %c2 = arith.constant 2 : index
    %c0_14 = arith.constant 0 : index
    %20 = vector.load %arg6[%c2, %c0_14] : memref<104x16xf32, #tpu.memory_space<vmem>>, vector<64x16xf32>
    %21 = arith.truncf %20 : vector<64x16xf32> to vector<64x16xbf16>
    %c2_15 = arith.constant 2 : index
    %c0_16 = arith.constant 0 : index
    %c0_17 = arith.constant 0 : index
    %22 = vector.load %arg3[%c2_15, %c0_16, %c0_17] : memref<9x16x32xbf16, #tpu.memory_space<vmem>>, vector<1x16x32xbf16>
    %23 = vector.shape_cast %22 : vector<1x16x32xbf16> to vector<16x32xbf16>
    %cst_18 = arith.constant dense<0.000000e+00> : vector<64x32xf32>
    %24 = tpu.matmul %21, %23, %cst_18 {dimension_numbers = #tpu.dot_dimension_numbers<[1], [0], [0], [1], [0, 0, 1, 1], [], []>} : vector<64x16xbf16>, vector<16x32xbf16>, vector<64x32xf32> -> vector<64x32xf32>
    %25 = arith.addf %19, %24 : vector<64x32xf32>
    %c16 = arith.constant 16 : index
    %c0_19 = arith.constant 0 : index
    %26 = vector.load %arg6[%c16, %c0_19] : memref<104x16xf32, #tpu.memory_space<vmem>>, vector<64x16xf32>
    %27 = arith.truncf %26 : vector<64x16xf32> to vector<64x16xbf16>
    %c3 = arith.constant 3 : index
    %c0_20 = arith.constant 0 : index
    %c0_21 = arith.constant 0 : index
    %28 = vector.load %arg3[%c3, %c0_20, %c0_21] : memref<9x16x32xbf16, #tpu.memory_space<vmem>>, vector<1x16x32xbf16>
    %29 = vector.shape_cast %28 : vector<1x16x32xbf16> to vector<16x32xbf16>
    %cst_22 = arith.constant dense<0.000000e+00> : vector<64x32xf32>
    %30 = tpu.matmul %27, %29, %cst_22 {dimension_numbers = #tpu.dot_dimension_numbers<[1], [0], [0], [1], [0, 0, 1, 1], [], []>} : vector<64x16xbf16>, vector<16x32xbf16>, vector<64x32xf32> -> vector<64x32xf32>
    %31 = arith.addf %25, %30 : vector<64x32xf32>
    %c17 = arith.constant 17 : index
    %c0_23 = arith.constant 0 : index
    %32 = vector.load %arg6[%c17, %c0_23] : memref<104x16xf32, #tpu.memory_space<vmem>>, vector<64x16xf32>
    %33 = arith.truncf %32 : vector<64x16xf32> to vector<64x16xbf16>
    %c4 = arith.constant 4 : index
    %c0_24 = arith.constant 0 : index
    %c0_25 = arith.constant 0 : index
    %34 = vector.load %arg3[%c4, %c0_24, %c0_25] : memref<9x16x32xbf16, #tpu.memory_space<vmem>>, vector<1x16x32xbf16>
    %35 = vector.shape_cast %34 : vector<1x16x32xbf16> to vector<16x32xbf16>
    %cst_26 = arith.constant dense<0.000000e+00> : vector<64x32xf32>
    %36 = tpu.matmul %33, %35, %cst_26 {dimension_numbers = #tpu.dot_dimension_numbers<[1], [0], [0], [1], [0, 0, 1, 1], [], []>} : vector<64x16xbf16>, vector<16x32xbf16>, vector<64x32xf32> -> vector<64x32xf32>
    %37 = arith.addf %31, %36 : vector<64x32xf32>
    %c18 = arith.constant 18 : index
    %c0_27 = arith.constant 0 : index
    %38 = vector.load %arg6[%c18, %c0_27] : memref<104x16xf32, #tpu.memory_space<vmem>>, vector<64x16xf32>
    %39 = arith.truncf %38 : vector<64x16xf32> to vector<64x16xbf16>
    %c5 = arith.constant 5 : index
    %c0_28 = arith.constant 0 : index
    %c0_29 = arith.constant 0 : index
    %40 = vector.load %arg3[%c5, %c0_28, %c0_29] : memref<9x16x32xbf16, #tpu.memory_space<vmem>>, vector<1x16x32xbf16>
    %41 = vector.shape_cast %40 : vector<1x16x32xbf16> to vector<16x32xbf16>
    %cst_30 = arith.constant dense<0.000000e+00> : vector<64x32xf32>
    %42 = tpu.matmul %39, %41, %cst_30 {dimension_numbers = #tpu.dot_dimension_numbers<[1], [0], [0], [1], [0, 0, 1, 1], [], []>} : vector<64x16xbf16>, vector<16x32xbf16>, vector<64x32xf32> -> vector<64x32xf32>
    %43 = arith.addf %37, %42 : vector<64x32xf32>
    %c32 = arith.constant 32 : index
    %c0_31 = arith.constant 0 : index
    %44 = vector.load %arg6[%c32, %c0_31] : memref<104x16xf32, #tpu.memory_space<vmem>>, vector<64x16xf32>
    %45 = arith.truncf %44 : vector<64x16xf32> to vector<64x16xbf16>
    %c6 = arith.constant 6 : index
    %c0_32 = arith.constant 0 : index
    %c0_33 = arith.constant 0 : index
    %46 = vector.load %arg3[%c6, %c0_32, %c0_33] : memref<9x16x32xbf16, #tpu.memory_space<vmem>>, vector<1x16x32xbf16>
    %47 = vector.shape_cast %46 : vector<1x16x32xbf16> to vector<16x32xbf16>
    %cst_34 = arith.constant dense<0.000000e+00> : vector<64x32xf32>
    %48 = tpu.matmul %45, %47, %cst_34 {dimension_numbers = #tpu.dot_dimension_numbers<[1], [0], [0], [1], [0, 0, 1, 1], [], []>} : vector<64x16xbf16>, vector<16x32xbf16>, vector<64x32xf32> -> vector<64x32xf32>
    %49 = arith.addf %43, %48 : vector<64x32xf32>
    %c33 = arith.constant 33 : index
    %c0_35 = arith.constant 0 : index
    %50 = vector.load %arg6[%c33, %c0_35] : memref<104x16xf32, #tpu.memory_space<vmem>>, vector<64x16xf32>
    %51 = arith.truncf %50 : vector<64x16xf32> to vector<64x16xbf16>
    %c7 = arith.constant 7 : index
    %c0_36 = arith.constant 0 : index
    %c0_37 = arith.constant 0 : index
    %52 = vector.load %arg3[%c7, %c0_36, %c0_37] : memref<9x16x32xbf16, #tpu.memory_space<vmem>>, vector<1x16x32xbf16>
    %53 = vector.shape_cast %52 : vector<1x16x32xbf16> to vector<16x32xbf16>
    %cst_38 = arith.constant dense<0.000000e+00> : vector<64x32xf32>
    %54 = tpu.matmul %51, %53, %cst_38 {dimension_numbers = #tpu.dot_dimension_numbers<[1], [0], [0], [1], [0, 0, 1, 1], [], []>} : vector<64x16xbf16>, vector<16x32xbf16>, vector<64x32xf32> -> vector<64x32xf32>
    %55 = arith.addf %49, %54 : vector<64x32xf32>
    %c34 = arith.constant 34 : index
    %c0_39 = arith.constant 0 : index
    %56 = vector.load %arg6[%c34, %c0_39] : memref<104x16xf32, #tpu.memory_space<vmem>>, vector<64x16xf32>
    %57 = arith.truncf %56 : vector<64x16xf32> to vector<64x16xbf16>
    %c8 = arith.constant 8 : index
    %c0_40 = arith.constant 0 : index
    %c0_41 = arith.constant 0 : index
    %58 = vector.load %arg3[%c8, %c0_40, %c0_41] : memref<9x16x32xbf16, #tpu.memory_space<vmem>>, vector<1x16x32xbf16>
    %59 = vector.shape_cast %58 : vector<1x16x32xbf16> to vector<16x32xbf16>
    %cst_42 = arith.constant dense<0.000000e+00> : vector<64x32xf32>
    %60 = tpu.matmul %57, %59, %cst_42 {dimension_numbers = #tpu.dot_dimension_numbers<[1], [0], [0], [1], [0, 0, 1, 1], [], []>} : vector<64x16xbf16>, vector<16x32xbf16>, vector<64x32xf32> -> vector<64x32xf32>
    %61 = arith.addf %55, %60 : vector<64x32xf32>
    %c0_43 = arith.constant 0 : index
    %c0_44 = arith.constant 0 : index
    %62 = vector.load %arg4[%c0_43, %c0_44] : memref<1x32xf32, #tpu.memory_space<vmem>>, vector<1x32xf32>
    %63 = vector.broadcast %62 : vector<1x32xf32> to vector<64x32xf32>
    %64 = arith.addf %61, %63 : vector<64x32xf32>
    %cst_45 = arith.constant 0.000000e+00 : f32
    %65 = vector.broadcast %cst_45 : f32 to vector<64x32xf32>
    %66 = arith.maximumf %64, %65 : vector<64x32xf32>
    %c0_46 = arith.constant 0 : index
    %c0_47 = arith.constant 0 : index
    %67 = vector.load %arg7[%c0_46, %c0_47] : memref<64x32xf32, #tpu.memory_space<vmem>>, vector<64x32xf32>
    tpu.vector_store %arg7[%c0_46, %c0_47], %66 {strides = array<i32>} : memref<64x32xf32, #tpu.memory_space<vmem>>, vector<64x32xf32>,
    %c0_48 = arith.constant 0 : index
    %c0_49 = arith.constant 0 : index
    %68 = vector.load %arg7[%c0_48, %c0_49] : memref<64x32xf32, #tpu.memory_space<vmem>>, vector<8x32xf32>
    %69 = arith.truncf %68 : vector<8x32xf32> to vector<8x32xbf16>
    %c0_50 = arith.constant 0 : index
    %c0_51 = arith.constant 0 : index
    %c0_52 = arith.constant 0 : index
    %c0_53 = arith.constant 0 : index
    %70 = vector.load %arg5[%c0_50, %c0_51, %c0_52, %c0_53] : memref<1x4x8x32xbf16, #tpu.memory_space<vmem>>, vector<1x1x8x32xbf16>
    %71 = vector.shape_cast %70 : vector<1x1x8x32xbf16> to vector<8x32xbf16>
    %72 = vector.shape_cast %69 : vector<8x32xbf16> to vector<1x1x8x32xbf16>
    tpu.vector_store %arg5[%c0_50, %c0_51, %c0_52, %c0_53], %72 {strides = array<i32>} : memref<1x4x8x32xbf16, #tpu.memory_space<vmem>>, vector<1x1x8x32xbf16>,
    %c16_54 = arith.constant 16 : index
    %c0_55 = arith.constant 0 : index
    %73 = vector.load %arg7[%c16_54, %c0_55] : memref<64x32xf32, #tpu.memory_space<vmem>>, vector<8x32xf32>
    %74 = arith.truncf %73 : vector<8x32xf32> to vector<8x32xbf16>
    %c0_56 = arith.constant 0 : index
    %c1_57 = arith.constant 1 : index
    %c0_58 = arith.constant 0 : index
    %c0_59 = arith.constant 0 : index
    %75 = vector.load %arg5[%c0_56, %c1_57, %c0_58, %c0_59] : memref<1x4x8x32xbf16, #tpu.memory_space<vmem>>, vector<1x1x8x32xbf16>
    %76 = vector.shape_cast %75 : vector<1x1x8x32xbf16> to vector<8x32xbf16>
    %77 = vector.shape_cast %74 : vector<8x32xbf16> to vector<1x1x8x32xbf16>
    tpu.vector_store %arg5[%c0_56, %c1_57, %c0_58, %c0_59], %77 {strides = array<i32>} : memref<1x4x8x32xbf16, #tpu.memory_space<vmem>>, vector<1x1x8x32xbf16>,
    %c32_60 = arith.constant 32 : index
    %c0_61 = arith.constant 0 : index
    %78 = vector.load %arg7[%c32_60, %c0_61] : memref<64x32xf32, #tpu.memory_space<vmem>>, vector<8x32xf32>
    %79 = arith.truncf %78 : vector<8x32xf32> to vector<8x32xbf16>
    %c0_62 = arith.constant 0 : index
    %c2_63 = arith.constant 2 : index
    %c0_64 = arith.constant 0 : index
    %c0_65 = arith.constant 0 : index
    %80 = vector.load %arg5[%c0_62, %c2_63, %c0_64, %c0_65] : memref<1x4x8x32xbf16, #tpu.memory_space<vmem>>, vector<1x1x8x32xbf16>
    %81 = vector.shape_cast %80 : vector<1x1x8x32xbf16> to vector<8x32xbf16>
    %82 = vector.shape_cast %79 : vector<8x32xbf16> to vector<1x1x8x32xbf16>
    tpu.vector_store %arg5[%c0_62, %c2_63, %c0_64, %c0_65], %82 {strides = array<i32>} : memref<1x4x8x32xbf16, #tpu.memory_space<vmem>>, vector<1x1x8x32xbf16>,
    %c48 = arith.constant 48 : index
    %c0_66 = arith.constant 0 : index
    %83 = vector.load %arg7[%c48, %c0_66] : memref<64x32xf32, #tpu.memory_space<vmem>>, vector<8x32xf32>
    %84 = arith.truncf %83 : vector<8x32xf32> to vector<8x32xbf16>
    %c0_67 = arith.constant 0 : index
    %c3_68 = arith.constant 3 : index
    %c0_69 = arith.constant 0 : index
    %c0_70 = arith.constant 0 : index
    %85 = vector.load %arg5[%c0_67, %c3_68, %c0_69, %c0_70] : memref<1x4x8x32xbf16, #tpu.memory_space<vmem>>, vector<1x1x8x32xbf16>
    %86 = vector.shape_cast %85 : vector<1x1x8x32xbf16> to vector<8x32xbf16>
    %87 = vector.shape_cast %84 : vector<8x32xbf16> to vector<1x1x8x32xbf16>
    tpu.vector_store %arg5[%c0_67, %c3_68, %c0_69, %c0_70], %87 {strides = array<i32>} : memref<1x4x8x32xbf16, #tpu.memory_space<vmem>>, vector<1x1x8x32xbf16>,
    return
  }
  func.func @transform_0(%arg0: i32, %arg1: i32) -> (i32, i32, i32) {
    %c0_i32 = arith.constant 0 : i32
    %c0_i32_0 = arith.constant 0 : i32
    %c0_i32_1 = arith.constant 0 : i32
    return %arg0, %c0_i32, %c0_i32_0 : i32, i32, i32
  }
  func.func @transform_1(%arg0: i32, %arg1: i32) -> (i32, i32, i32) {
    %c0_i32 = arith.constant 0 : i32
    %c0_i32_0 = arith.constant 0 : i32
    %c0_i32_1 = arith.constant 0 : i32
    %c0_i32_2 = arith.constant 0 : i32
    return %c0_i32, %c0_i32_0, %c0_i32_1 : i32, i32, i32
  }
  func.func @transform_2(%arg0: i32, %arg1: i32) -> (i32, i32) {
    %c0_i32 = arith.constant 0 : i32
    %c0_i32_0 = arith.constant 0 : i32
    %c0_i32_1 = arith.constant 0 : i32
    return %c0_i32, %c0_i32_0 : i32, i32
  }
  func.func @transform_3(%arg0: i32, %arg1: i32) -> (i32, i32, i32, i32) {
    %c0_i32 = arith.constant 0 : i32
    %c0_i32_0 = arith.constant 0 : i32
    %c0_i32_1 = arith.constant 0 : i32
    return %arg0, %arg1, %c0_i32, %c0_i32_0 : i32, i32, i32, i32
  }
}

module attributes {stable_mosaic.version = 11 : i64} {
  func.func @_conv3x3_kernel(%arg0: i32, %arg1: i32, %arg2: memref<1x176x32xbf16, #tpu.memory_space<vmem>>, %arg3: memref<9x32x32xbf16, #tpu.memory_space<vmem>>, %arg4: memref<1x32xf32, #tpu.memory_space<vmem>>, %arg5: memref<1x2x4x32xbf16, #tpu.memory_space<vmem>>, %arg6: memref<104x32xf32, #tpu.memory_space<vmem>>, %arg7: memref<64x32xf32, #tpu.memory_space<vmem>>, %arg8: memref<32x32xf32, #tpu.memory_space<vmem>>) attributes {dimension_semantics = [#tpu.dimension_semantics<parallel>, #tpu.dimension_semantics<parallel>], iteration_bounds = array<i64: 2, 2>, scalar_prefetch = 0 : i64, scratch_operands = 3 : i64, tpu.core_type = #tpu.core_type<tc>, window_params = [{transform_indices = @transform_0, window_bounds = array<i64: 1, 176, 32>}, {pipeline_mode = #tpu.pipeline_mode<synchronous>, transform_indices = @transform_1, window_bounds = array<i64: 9, 32, 32>}, {pipeline_mode = #tpu.pipeline_mode<synchronous>, transform_indices = @transform_2, window_bounds = array<i64: 1, 32>}, {transform_indices = @transform_3, window_bounds = array<i64: 1, 2, 4, 32>}]} {
    %c64_i32 = arith.constant 64 : i32
    %0 = arith.muli %arg1, %c64_i32 : i32
    %1 = tpu.assume_multiple %0, 16 : i32
    %c0 = arith.constant 0 : index
    %2 = arith.index_cast %1 : i32 to index
    %c0_0 = arith.constant 0 : index
    %3 = vector.load %arg2[%c0, %2, %c0_0] : memref<1x176x32xbf16, #tpu.memory_space<vmem>>, vector<1x104x32xbf16>
    %4 = vector.shape_cast %3 : vector<1x104x32xbf16> to vector<104x32xbf16>
    %5 = arith.extf %4 : vector<104x32xbf16> to vector<104x32xf32>
    %c0_1 = arith.constant 0 : index
    %c0_2 = arith.constant 0 : index
    %6 = vector.load %arg6[%c0_1, %c0_2] : memref<104x32xf32, #tpu.memory_space<vmem>>, vector<104x32xf32>
    tpu.vector_store %arg6[%c0_1, %c0_2], %5 {strides = array<i32>} : memref<104x32xf32, #tpu.memory_space<vmem>>, vector<104x32xf32>,
    %cst = arith.constant 0.000000e+00 : f32
    %7 = vector.broadcast %cst : f32 to vector<64x32xf32>
    %c0_3 = arith.constant 0 : index
    %c0_4 = arith.constant 0 : index
    %8 = vector.load %arg6[%c0_3, %c0_4] : memref<104x32xf32, #tpu.memory_space<vmem>>, vector<64x32xf32>
    %9 = arith.truncf %8 : vector<64x32xf32> to vector<64x32xbf16>
    %c0_5 = arith.constant 0 : index
    %c0_6 = arith.constant 0 : index
    %c0_7 = arith.constant 0 : index
    %10 = vector.load %arg3[%c0_5, %c0_6, %c0_7] : memref<9x32x32xbf16, #tpu.memory_space<vmem>>, vector<1x32x32xbf16>
    %11 = vector.shape_cast %10 : vector<1x32x32xbf16> to vector<32x32xbf16>
    %cst_8 = arith.constant dense<0.000000e+00> : vector<64x32xf32>
    %12 = tpu.matmul %9, %11, %cst_8 {dimension_numbers = #tpu.dot_dimension_numbers<[1], [0], [0], [1], [0, 0, 1, 1], [], []>} : vector<64x32xbf16>, vector<32x32xbf16>, vector<64x32xf32> -> vector<64x32xf32>
    %13 = arith.addf %7, %12 : vector<64x32xf32>
    %c1 = arith.constant 1 : index
    %c0_9 = arith.constant 0 : index
    %14 = vector.load %arg6[%c1, %c0_9] : memref<104x32xf32, #tpu.memory_space<vmem>>, vector<64x32xf32>
    %15 = arith.truncf %14 : vector<64x32xf32> to vector<64x32xbf16>
    %c1_10 = arith.constant 1 : index
    %c0_11 = arith.constant 0 : index
    %c0_12 = arith.constant 0 : index
    %16 = vector.load %arg3[%c1_10, %c0_11, %c0_12] : memref<9x32x32xbf16, #tpu.memory_space<vmem>>, vector<1x32x32xbf16>
    %17 = vector.shape_cast %16 : vector<1x32x32xbf16> to vector<32x32xbf16>
    %cst_13 = arith.constant dense<0.000000e+00> : vector<64x32xf32>
    %18 = tpu.matmul %15, %17, %cst_13 {dimension_numbers = #tpu.dot_dimension_numbers<[1], [0], [0], [1], [0, 0, 1, 1], [], []>} : vector<64x32xbf16>, vector<32x32xbf16>, vector<64x32xf32> -> vector<64x32xf32>
    %19 = arith.addf %13, %18 : vector<64x32xf32>
    %c2 = arith.constant 2 : index
    %c0_14 = arith.constant 0 : index
    %20 = vector.load %arg6[%c2, %c0_14] : memref<104x32xf32, #tpu.memory_space<vmem>>, vector<64x32xf32>
    %21 = arith.truncf %20 : vector<64x32xf32> to vector<64x32xbf16>
    %c2_15 = arith.constant 2 : index
    %c0_16 = arith.constant 0 : index
    %c0_17 = arith.constant 0 : index
    %22 = vector.load %arg3[%c2_15, %c0_16, %c0_17] : memref<9x32x32xbf16, #tpu.memory_space<vmem>>, vector<1x32x32xbf16>
    %23 = vector.shape_cast %22 : vector<1x32x32xbf16> to vector<32x32xbf16>
    %cst_18 = arith.constant dense<0.000000e+00> : vector<64x32xf32>
    %24 = tpu.matmul %21, %23, %cst_18 {dimension_numbers = #tpu.dot_dimension_numbers<[1], [0], [0], [1], [0, 0, 1, 1], [], []>} : vector<64x32xbf16>, vector<32x32xbf16>, vector<64x32xf32> -> vector<64x32xf32>
    %25 = arith.addf %19, %24 : vector<64x32xf32>
    %c16 = arith.constant 16 : index
    %c0_19 = arith.constant 0 : index
    %26 = vector.load %arg6[%c16, %c0_19] : memref<104x32xf32, #tpu.memory_space<vmem>>, vector<64x32xf32>
    %27 = arith.truncf %26 : vector<64x32xf32> to vector<64x32xbf16>
    %c3 = arith.constant 3 : index
    %c0_20 = arith.constant 0 : index
    %c0_21 = arith.constant 0 : index
    %28 = vector.load %arg3[%c3, %c0_20, %c0_21] : memref<9x32x32xbf16, #tpu.memory_space<vmem>>, vector<1x32x32xbf16>
    %29 = vector.shape_cast %28 : vector<1x32x32xbf16> to vector<32x32xbf16>
    %cst_22 = arith.constant dense<0.000000e+00> : vector<64x32xf32>
    %30 = tpu.matmul %27, %29, %cst_22 {dimension_numbers = #tpu.dot_dimension_numbers<[1], [0], [0], [1], [0, 0, 1, 1], [], []>} : vector<64x32xbf16>, vector<32x32xbf16>, vector<64x32xf32> -> vector<64x32xf32>
    %31 = arith.addf %25, %30 : vector<64x32xf32>
    %c17 = arith.constant 17 : index
    %c0_23 = arith.constant 0 : index
    %32 = vector.load %arg6[%c17, %c0_23] : memref<104x32xf32, #tpu.memory_space<vmem>>, vector<64x32xf32>
    %33 = arith.truncf %32 : vector<64x32xf32> to vector<64x32xbf16>
    %c4 = arith.constant 4 : index
    %c0_24 = arith.constant 0 : index
    %c0_25 = arith.constant 0 : index
    %34 = vector.load %arg3[%c4, %c0_24, %c0_25] : memref<9x32x32xbf16, #tpu.memory_space<vmem>>, vector<1x32x32xbf16>
    %35 = vector.shape_cast %34 : vector<1x32x32xbf16> to vector<32x32xbf16>
    %cst_26 = arith.constant dense<0.000000e+00> : vector<64x32xf32>
    %36 = tpu.matmul %33, %35, %cst_26 {dimension_numbers = #tpu.dot_dimension_numbers<[1], [0], [0], [1], [0, 0, 1, 1], [], []>} : vector<64x32xbf16>, vector<32x32xbf16>, vector<64x32xf32> -> vector<64x32xf32>
    %37 = arith.addf %31, %36 : vector<64x32xf32>
    %c18 = arith.constant 18 : index
    %c0_27 = arith.constant 0 : index
    %38 = vector.load %arg6[%c18, %c0_27] : memref<104x32xf32, #tpu.memory_space<vmem>>, vector<64x32xf32>
    %39 = arith.truncf %38 : vector<64x32xf32> to vector<64x32xbf16>
    %c5 = arith.constant 5 : index
    %c0_28 = arith.constant 0 : index
    %c0_29 = arith.constant 0 : index
    %40 = vector.load %arg3[%c5, %c0_28, %c0_29] : memref<9x32x32xbf16, #tpu.memory_space<vmem>>, vector<1x32x32xbf16>
    %41 = vector.shape_cast %40 : vector<1x32x32xbf16> to vector<32x32xbf16>
    %cst_30 = arith.constant dense<0.000000e+00> : vector<64x32xf32>
    %42 = tpu.matmul %39, %41, %cst_30 {dimension_numbers = #tpu.dot_dimension_numbers<[1], [0], [0], [1], [0, 0, 1, 1], [], []>} : vector<64x32xbf16>, vector<32x32xbf16>, vector<64x32xf32> -> vector<64x32xf32>
    %43 = arith.addf %37, %42 : vector<64x32xf32>
    %c32 = arith.constant 32 : index
    %c0_31 = arith.constant 0 : index
    %44 = vector.load %arg6[%c32, %c0_31] : memref<104x32xf32, #tpu.memory_space<vmem>>, vector<64x32xf32>
    %45 = arith.truncf %44 : vector<64x32xf32> to vector<64x32xbf16>
    %c6 = arith.constant 6 : index
    %c0_32 = arith.constant 0 : index
    %c0_33 = arith.constant 0 : index
    %46 = vector.load %arg3[%c6, %c0_32, %c0_33] : memref<9x32x32xbf16, #tpu.memory_space<vmem>>, vector<1x32x32xbf16>
    %47 = vector.shape_cast %46 : vector<1x32x32xbf16> to vector<32x32xbf16>
    %cst_34 = arith.constant dense<0.000000e+00> : vector<64x32xf32>
    %48 = tpu.matmul %45, %47, %cst_34 {dimension_numbers = #tpu.dot_dimension_numbers<[1], [0], [0], [1], [0, 0, 1, 1], [], []>} : vector<64x32xbf16>, vector<32x32xbf16>, vector<64x32xf32> -> vector<64x32xf32>
    %49 = arith.addf %43, %48 : vector<64x32xf32>
    %c33 = arith.constant 33 : index
    %c0_35 = arith.constant 0 : index
    %50 = vector.load %arg6[%c33, %c0_35] : memref<104x32xf32, #tpu.memory_space<vmem>>, vector<64x32xf32>
    %51 = arith.truncf %50 : vector<64x32xf32> to vector<64x32xbf16>
    %c7 = arith.constant 7 : index
    %c0_36 = arith.constant 0 : index
    %c0_37 = arith.constant 0 : index
    %52 = vector.load %arg3[%c7, %c0_36, %c0_37] : memref<9x32x32xbf16, #tpu.memory_space<vmem>>, vector<1x32x32xbf16>
    %53 = vector.shape_cast %52 : vector<1x32x32xbf16> to vector<32x32xbf16>
    %cst_38 = arith.constant dense<0.000000e+00> : vector<64x32xf32>
    %54 = tpu.matmul %51, %53, %cst_38 {dimension_numbers = #tpu.dot_dimension_numbers<[1], [0], [0], [1], [0, 0, 1, 1], [], []>} : vector<64x32xbf16>, vector<32x32xbf16>, vector<64x32xf32> -> vector<64x32xf32>
    %55 = arith.addf %49, %54 : vector<64x32xf32>
    %c34 = arith.constant 34 : index
    %c0_39 = arith.constant 0 : index
    %56 = vector.load %arg6[%c34, %c0_39] : memref<104x32xf32, #tpu.memory_space<vmem>>, vector<64x32xf32>
    %57 = arith.truncf %56 : vector<64x32xf32> to vector<64x32xbf16>
    %c8 = arith.constant 8 : index
    %c0_40 = arith.constant 0 : index
    %c0_41 = arith.constant 0 : index
    %58 = vector.load %arg3[%c8, %c0_40, %c0_41] : memref<9x32x32xbf16, #tpu.memory_space<vmem>>, vector<1x32x32xbf16>
    %59 = vector.shape_cast %58 : vector<1x32x32xbf16> to vector<32x32xbf16>
    %cst_42 = arith.constant dense<0.000000e+00> : vector<64x32xf32>
    %60 = tpu.matmul %57, %59, %cst_42 {dimension_numbers = #tpu.dot_dimension_numbers<[1], [0], [0], [1], [0, 0, 1, 1], [], []>} : vector<64x32xbf16>, vector<32x32xbf16>, vector<64x32xf32> -> vector<64x32xf32>
    %61 = arith.addf %55, %60 : vector<64x32xf32>
    %c0_43 = arith.constant 0 : index
    %c0_44 = arith.constant 0 : index
    %62 = vector.load %arg4[%c0_43, %c0_44] : memref<1x32xf32, #tpu.memory_space<vmem>>, vector<1x32xf32>
    %63 = vector.broadcast %62 : vector<1x32xf32> to vector<64x32xf32>
    %64 = arith.addf %61, %63 : vector<64x32xf32>
    %cst_45 = arith.constant 0.000000e+00 : f32
    %65 = vector.broadcast %cst_45 : f32 to vector<64x32xf32>
    %66 = arith.maximumf %64, %65 : vector<64x32xf32>
    %c0_46 = arith.constant 0 : index
    %c0_47 = arith.constant 0 : index
    %67 = vector.load %arg7[%c0_46, %c0_47] : memref<64x32xf32, #tpu.memory_space<vmem>>, vector<64x32xf32>
    tpu.vector_store %arg7[%c0_46, %c0_47], %66 {strides = array<i32>} : memref<64x32xf32, #tpu.memory_space<vmem>>, vector<64x32xf32>,
    %c0_48 = arith.constant 0 : index
    %c0_49 = arith.constant 0 : index
    %68 = tpu.strided_load %arg7[%c0_48, %c0_49] {strides = array<i32: 2, 1>} : memref<64x32xf32, #tpu.memory_space<vmem>>, vector<32x32xf32>
    %c1_50 = arith.constant 1 : index
    %c0_51 = arith.constant 0 : index
    %69 = tpu.strided_load %arg7[%c1_50, %c0_51] {strides = array<i32: 2, 1>} : memref<64x32xf32, #tpu.memory_space<vmem>>, vector<32x32xf32>
    %70 = arith.maximumf %68, %69 : vector<32x32xf32>
    %c0_52 = arith.constant 0 : index
    %c0_53 = arith.constant 0 : index
    %71 = vector.load %arg8[%c0_52, %c0_53] : memref<32x32xf32, #tpu.memory_space<vmem>>, vector<32x32xf32>
    tpu.vector_store %arg8[%c0_52, %c0_53], %70 {strides = array<i32>} : memref<32x32xf32, #tpu.memory_space<vmem>>, vector<32x32xf32>,
    %c0_54 = arith.constant 0 : index
    %c0_55 = arith.constant 0 : index
    %72 = vector.load %arg8[%c0_54, %c0_55] : memref<32x32xf32, #tpu.memory_space<vmem>>, vector<4x32xf32>
    %c8_56 = arith.constant 8 : index
    %c0_57 = arith.constant 0 : index
    %73 = vector.load %arg8[%c8_56, %c0_57] : memref<32x32xf32, #tpu.memory_space<vmem>>, vector<4x32xf32>
    %74 = arith.maximumf %72, %73 : vector<4x32xf32>
    %75 = arith.truncf %74 : vector<4x32xf32> to vector<4x32xbf16>
    %c0_58 = arith.constant 0 : index
    %c0_59 = arith.constant 0 : index
    %c0_60 = arith.constant 0 : index
    %c0_61 = arith.constant 0 : index
    %76 = vector.load %arg5[%c0_58, %c0_59, %c0_60, %c0_61] : memref<1x2x4x32xbf16, #tpu.memory_space<vmem>>, vector<1x1x4x32xbf16>
    %77 = vector.shape_cast %76 : vector<1x1x4x32xbf16> to vector<4x32xbf16>
    %78 = vector.shape_cast %75 : vector<4x32xbf16> to vector<1x1x4x32xbf16>
    tpu.vector_store %arg5[%c0_58, %c0_59, %c0_60, %c0_61], %78 {strides = array<i32>} : memref<1x2x4x32xbf16, #tpu.memory_space<vmem>>, vector<1x1x4x32xbf16>,
    %c16_62 = arith.constant 16 : index
    %c0_63 = arith.constant 0 : index
    %79 = vector.load %arg8[%c16_62, %c0_63] : memref<32x32xf32, #tpu.memory_space<vmem>>, vector<4x32xf32>
    %c24 = arith.constant 24 : index
    %c0_64 = arith.constant 0 : index
    %80 = vector.load %arg8[%c24, %c0_64] : memref<32x32xf32, #tpu.memory_space<vmem>>, vector<4x32xf32>
    %81 = arith.maximumf %79, %80 : vector<4x32xf32>
    %82 = arith.truncf %81 : vector<4x32xf32> to vector<4x32xbf16>
    %c0_65 = arith.constant 0 : index
    %c1_66 = arith.constant 1 : index
    %c0_67 = arith.constant 0 : index
    %c0_68 = arith.constant 0 : index
    %83 = vector.load %arg5[%c0_65, %c1_66, %c0_67, %c0_68] : memref<1x2x4x32xbf16, #tpu.memory_space<vmem>>, vector<1x1x4x32xbf16>
    %84 = vector.shape_cast %83 : vector<1x1x4x32xbf16> to vector<4x32xbf16>
    %85 = vector.shape_cast %82 : vector<4x32xbf16> to vector<1x1x4x32xbf16>
    tpu.vector_store %arg5[%c0_65, %c1_66, %c0_67, %c0_68], %85 {strides = array<i32>} : memref<1x2x4x32xbf16, #tpu.memory_space<vmem>>, vector<1x1x4x32xbf16>,
    return
  }
  func.func @transform_0(%arg0: i32, %arg1: i32) -> (i32, i32, i32) {
    %c0_i32 = arith.constant 0 : i32
    %c0_i32_0 = arith.constant 0 : i32
    %c0_i32_1 = arith.constant 0 : i32
    return %arg0, %c0_i32, %c0_i32_0 : i32, i32, i32
  }
  func.func @transform_1(%arg0: i32, %arg1: i32) -> (i32, i32, i32) {
    %c0_i32 = arith.constant 0 : i32
    %c0_i32_0 = arith.constant 0 : i32
    %c0_i32_1 = arith.constant 0 : i32
    %c0_i32_2 = arith.constant 0 : i32
    return %c0_i32, %c0_i32_0, %c0_i32_1 : i32, i32, i32
  }
  func.func @transform_2(%arg0: i32, %arg1: i32) -> (i32, i32) {
    %c0_i32 = arith.constant 0 : i32
    %c0_i32_0 = arith.constant 0 : i32
    %c0_i32_1 = arith.constant 0 : i32
    return %c0_i32, %c0_i32_0 : i32, i32
  }
  func.func @transform_3(%arg0: i32, %arg1: i32) -> (i32, i32, i32, i32) {
    %c0_i32 = arith.constant 0 : i32
    %c0_i32_0 = arith.constant 0 : i32
    %c0_i32_1 = arith.constant 0 : i32
    return %arg0, %arg1, %c0_i32, %c0_i32_0 : i32, i32, i32, i32
  }
}

module attributes {stable_mosaic.version = 11 : i64} {
  func.func @_linear_kernel(%arg0: i32, %arg1: memref<2x512xbf16, #tpu.memory_space<vmem>>, %arg2: memref<512x128xbf16, #tpu.memory_space<vmem>>, %arg3: memref<1x128xf32, #tpu.memory_space<vmem>>, %arg4: memref<2x128xbf16, #tpu.memory_space<vmem>>) attributes {dimension_semantics = [#tpu.dimension_semantics<parallel>], iteration_bounds = array<i64: 2>, scalar_prefetch = 0 : i64, scratch_operands = 0 : i64, tpu.core_type = #tpu.core_type<tc>, window_params = [{pipeline_mode = #tpu.pipeline_mode<synchronous>, transform_indices = @transform_0, window_bounds = array<i64: 2, 512>}, {transform_indices = @transform_1, window_bounds = array<i64: 512, 128>}, {transform_indices = @transform_2, window_bounds = array<i64: 1, 128>}, {transform_indices = @transform_3, window_bounds = array<i64: 2, 128>}]} {
    %c0 = arith.constant 0 : index
    %c0_0 = arith.constant 0 : index
    %0 = vector.load %arg1[%c0, %c0_0] : memref<2x512xbf16, #tpu.memory_space<vmem>>, vector<2x512xbf16>
    %c0_1 = arith.constant 0 : index
    %c0_2 = arith.constant 0 : index
    %1 = vector.load %arg2[%c0_1, %c0_2] : memref<512x128xbf16, #tpu.memory_space<vmem>>, vector<512x128xbf16>
    %cst = arith.constant dense<0.000000e+00> : vector<2x128xf32>
    %2 = tpu.matmul %0, %1, %cst {dimension_numbers = #tpu.dot_dimension_numbers<[1], [0], [0], [1], [0, 0, 1, 1], [], []>} : vector<2x512xbf16>, vector<512x128xbf16>, vector<2x128xf32> -> vector<2x128xf32>
    %c0_3 = arith.constant 0 : index
    %c0_4 = arith.constant 0 : index
    %3 = vector.load %arg3[%c0_3, %c0_4] : memref<1x128xf32, #tpu.memory_space<vmem>>, vector<1x128xf32>
    %4 = vector.broadcast %3 : vector<1x128xf32> to vector<2x128xf32>
    %5 = arith.addf %2, %4 : vector<2x128xf32>
    %cst_5 = arith.constant 0.000000e+00 : f32
    %6 = vector.broadcast %cst_5 : f32 to vector<2x128xf32>
    %7 = arith.maximumf %5, %6 : vector<2x128xf32>
    %8 = arith.truncf %7 : vector<2x128xf32> to vector<2x128xbf16>
    %c0_6 = arith.constant 0 : index
    %c0_7 = arith.constant 0 : index
    %9 = vector.load %arg4[%c0_6, %c0_7] : memref<2x128xbf16, #tpu.memory_space<vmem>>, vector<2x128xbf16>
    tpu.vector_store %arg4[%c0_6, %c0_7], %8 {strides = array<i32>} : memref<2x128xbf16, #tpu.memory_space<vmem>>, vector<2x128xbf16>,
    return
  }
  func.func @transform_0(%arg0: i32) -> (i32, i32) {
    %c0_i32 = arith.constant 0 : i32
    %c0_i32_0 = arith.constant 0 : i32
    %c0_i32_1 = arith.constant 0 : i32
    return %c0_i32, %c0_i32_0 : i32, i32
  }
  func.func @transform_1(%arg0: i32) -> (i32, i32) {
    %c0_i32 = arith.constant 0 : i32
    %c0_i32_0 = arith.constant 0 : i32
    return %c0_i32, %arg0 : i32, i32
  }
  func.func @transform_2(%arg0: i32) -> (i32, i32) {
    %c0_i32 = arith.constant 0 : i32
    %c0_i32_0 = arith.constant 0 : i32
    return %c0_i32, %arg0 : i32, i32
  }
  func.func @transform_3(%arg0: i32) -> (i32, i32) {
    %c0_i32 = arith.constant 0 : i32
    %c0_i32_0 = arith.constant 0 : i32
    return %c0_i32, %arg0 : i32, i32
  }
}

module attributes {stable_mosaic.version = 11 : i64} {
  func.func @_linear_kernel(%arg0: i32, %arg1: memref<2x256xbf16, #tpu.memory_space<vmem>>, %arg2: memref<256x128xbf16, #tpu.memory_space<vmem>>, %arg3: memref<1x128xf32, #tpu.memory_space<vmem>>, %arg4: memref<2x128xbf16, #tpu.memory_space<vmem>>) attributes {dimension_semantics = [#tpu.dimension_semantics<parallel>], iteration_bounds = array<i64: 2>, scalar_prefetch = 0 : i64, scratch_operands = 0 : i64, tpu.core_type = #tpu.core_type<tc>, window_params = [{pipeline_mode = #tpu.pipeline_mode<synchronous>, transform_indices = @transform_0, window_bounds = array<i64: 2, 256>}, {transform_indices = @transform_1, window_bounds = array<i64: 256, 128>}, {transform_indices = @transform_2, window_bounds = array<i64: 1, 128>}, {transform_indices = @transform_3, window_bounds = array<i64: 2, 128>}]} {
    %c0 = arith.constant 0 : index
    %c0_0 = arith.constant 0 : index
    %0 = vector.load %arg1[%c0, %c0_0] : memref<2x256xbf16, #tpu.memory_space<vmem>>, vector<2x256xbf16>
    %c0_1 = arith.constant 0 : index
    %c0_2 = arith.constant 0 : index
    %1 = vector.load %arg2[%c0_1, %c0_2] : memref<256x128xbf16, #tpu.memory_space<vmem>>, vector<256x128xbf16>
    %cst = arith.constant dense<0.000000e+00> : vector<2x128xf32>
    %2 = tpu.matmul %0, %1, %cst {dimension_numbers = #tpu.dot_dimension_numbers<[1], [0], [0], [1], [0, 0, 1, 1], [], []>} : vector<2x256xbf16>, vector<256x128xbf16>, vector<2x128xf32> -> vector<2x128xf32>
    %c0_3 = arith.constant 0 : index
    %c0_4 = arith.constant 0 : index
    %3 = vector.load %arg3[%c0_3, %c0_4] : memref<1x128xf32, #tpu.memory_space<vmem>>, vector<1x128xf32>
    %4 = vector.broadcast %3 : vector<1x128xf32> to vector<2x128xf32>
    %5 = arith.addf %2, %4 : vector<2x128xf32>
    %cst_5 = arith.constant 0.000000e+00 : f32
    %6 = vector.broadcast %cst_5 : f32 to vector<2x128xf32>
    %7 = arith.maximumf %5, %6 : vector<2x128xf32>
    %8 = arith.truncf %7 : vector<2x128xf32> to vector<2x128xbf16>
    %c0_6 = arith.constant 0 : index
    %c0_7 = arith.constant 0 : index
    %9 = vector.load %arg4[%c0_6, %c0_7] : memref<2x128xbf16, #tpu.memory_space<vmem>>, vector<2x128xbf16>
    tpu.vector_store %arg4[%c0_6, %c0_7], %8 {strides = array<i32>} : memref<2x128xbf16, #tpu.memory_space<vmem>>, vector<2x128xbf16>,
    return
  }
  func.func @transform_0(%arg0: i32) -> (i32, i32) {
    %c0_i32 = arith.constant 0 : i32
    %c0_i32_0 = arith.constant 0 : i32
    %c0_i32_1 = arith.constant 0 : i32
    return %c0_i32, %c0_i32_0 : i32, i32
  }
  func.func @transform_1(%arg0: i32) -> (i32, i32) {
    %c0_i32 = arith.constant 0 : i32
    %c0_i32_0 = arith.constant 0 : i32
    return %c0_i32, %arg0 : i32, i32
  }
  func.func @transform_2(%arg0: i32) -> (i32, i32) {
    %c0_i32 = arith.constant 0 : i32
    %c0_i32_0 = arith.constant 0 : i32
    return %c0_i32, %arg0 : i32, i32
  }
  func.func @transform_3(%arg0: i32) -> (i32, i32) {
    %c0_i32 = arith.constant 0 : i32
    %c0_i32_0 = arith.constant 0 : i32
    return %c0_i32, %arg0 : i32, i32
  }
}

module attributes {stable_mosaic.version = 11 : i64} {
  func.func @_linear_kernel(%arg0: i32, %arg1: memref<2x256xbf16, #tpu.memory_space<vmem>>, %arg2: memref<256x128xbf16, #tpu.memory_space<vmem>>, %arg3: memref<1x128xf32, #tpu.memory_space<vmem>>, %arg4: memref<2x128xf32, #tpu.memory_space<vmem>>) attributes {dimension_semantics = [#tpu.dimension_semantics<parallel>], iteration_bounds = array<i64: 1>, scalar_prefetch = 0 : i64, scratch_operands = 0 : i64, tpu.core_type = #tpu.core_type<tc>, window_params = [{pipeline_mode = #tpu.pipeline_mode<synchronous>, transform_indices = @transform_0, window_bounds = array<i64: 2, 256>}, {transform_indices = @transform_1, window_bounds = array<i64: 256, 128>}, {transform_indices = @transform_2, window_bounds = array<i64: 1, 128>}, {transform_indices = @transform_3, window_bounds = array<i64: 2, 128>}]} {
    %c0 = arith.constant 0 : index
    %c0_0 = arith.constant 0 : index
    %0 = vector.load %arg1[%c0, %c0_0] : memref<2x256xbf16, #tpu.memory_space<vmem>>, vector<2x256xbf16>
    %c0_1 = arith.constant 0 : index
    %c0_2 = arith.constant 0 : index
    %1 = vector.load %arg2[%c0_1, %c0_2] : memref<256x128xbf16, #tpu.memory_space<vmem>>, vector<256x128xbf16>
    %cst = arith.constant dense<0.000000e+00> : vector<2x128xf32>
    %2 = tpu.matmul %0, %1, %cst {dimension_numbers = #tpu.dot_dimension_numbers<[1], [0], [0], [1], [0, 0, 1, 1], [], []>} : vector<2x256xbf16>, vector<256x128xbf16>, vector<2x128xf32> -> vector<2x128xf32>
    %c0_3 = arith.constant 0 : index
    %c0_4 = arith.constant 0 : index
    %3 = vector.load %arg3[%c0_3, %c0_4] : memref<1x128xf32, #tpu.memory_space<vmem>>, vector<1x128xf32>
    %4 = vector.broadcast %3 : vector<1x128xf32> to vector<2x128xf32>
    %5 = arith.addf %2, %4 : vector<2x128xf32>
    %c0_5 = arith.constant 0 : index
    %c0_6 = arith.constant 0 : index
    %6 = vector.load %arg4[%c0_5, %c0_6] : memref<2x128xf32, #tpu.memory_space<vmem>>, vector<2x128xf32>
    tpu.vector_store %arg4[%c0_5, %c0_6], %5 {strides = array<i32>} : memref<2x128xf32, #tpu.memory_space<vmem>>, vector<2x128xf32>,
    return
  }
  func.func @transform_0(%arg0: i32) -> (i32, i32) {
    %c0_i32 = arith.constant 0 : i32
    %c0_i32_0 = arith.constant 0 : i32
    %c0_i32_1 = arith.constant 0 : i32
    return %c0_i32, %c0_i32_0 : i32, i32
  }
  func.func @transform_1(%arg0: i32) -> (i32, i32) {
    %c0_i32 = arith.constant 0 : i32
    %c0_i32_0 = arith.constant 0 : i32
    return %c0_i32, %arg0 : i32, i32
  }
  func.func @transform_2(%arg0: i32) -> (i32, i32) {
    %c0_i32 = arith.constant 0 : i32
    %c0_i32_0 = arith.constant 0 : i32
    return %c0_i32, %arg0 : i32, i32
  }
  func.func @transform_3(%arg0: i32) -> (i32, i32) {
    %c0_i32 = arith.constant 0 : i32
    %c0_i32_0 = arith.constant 0 : i32
    return %c0_i32, %arg0 : i32, i32
  }
}

</mosaic_0001>

<llo_original>
// kernel: _lambda_.7
$region0: #{_lambda_.7}
  #allocation0 [shape = 'u32[]', space=smem, size = 0x4, offset = 0x4, fixed_abs, tag = 'smem constant byte address 0x4 - core index']
  #allocation1 [shape = 'u32[72,128]{1,0:T(1,128)}', space=vmem, size = 0x9000, scoped, tag = 'internal scratch']
  #allocation2 [shape = 'f32[104,16]{1,0:T(8,128)}', space=vmem, size = 0xd000, scoped, tag = 'scratch operand']
  #allocation3 [shape = 'f32[64,32]{1,0:T(8,128)}', space=vmem, size = 0x8000, scoped, tag = 'scratch operand']
  %s0 = inlined_call_operand.vmem [shape: bf16[2,176,16], index: 0, kind: input, shape index: {}]
  %s1 = inlined_call_operand.vmem [shape: bf16[9,16,32], index: 1, kind: input, shape index: {}]
  %s2 = inlined_call_operand.vmem [shape: f32[1,32], index: 2, kind: input, shape index: {}]
  %s3 = inlined_call_operand.vmem [shape: bf16[2,8,8,32], index: 3, kind: output, shape index: {}]
  %s4 = sld [smem:[#allocation0]]
  $region45: #{_lambda_.7} parent=0
    _
  %s6 = ssub.s32 1, %s4
  %s7 = scalar_select 0, %s6, %s4
  loop: start=0, step=1, limit=6
  $region2: #{_lambda_.7} parent=0 // loop_pre_header
    _
  $region3: #{_lambda_.7} parent=0 // loop_header
    %s9 = sphi 0, %s13
    %p10 = scmp.ge.s32.totalorder %s9, 6
    %s16 = sphi 0, %s28
    %s17 = sphi 0, %s24
    %s18 = sphi 0, %s16
    %s19 = sphi 0, %s17
    %s20 = sphi 0, %s18
    %s21 = sphi 0, %s19
    %s31 = sphi 0, %s33
    %s34 = sphi 0, %s31
    %s35 = sphi 0, %s34
    %s51 = sphi 0, %s35
    %s55 = sphi 0, %s55
    %s57 = sphi 0, %s55
    %s58 = sphi 0, %s57
    %s72 = sphi 0, %s58
    %s76 = sphi 0, %s76
    %s78 = sphi 0, %s76
    %s79 = sphi 0, %s78
    %s93 = sphi 0, %s79
    %s101 = sphi 0, %s103
    %s104 = sphi 0, %s101
    %s105 = sphi 0, %s104
    %s121 = sphi 0, %s105
  $region4: #{_lambda_.7} parent=0 // loop_header_branch
    %12 = sbr.rel (%p10) target = $region8
  $region5: #{_lambda_.7} parent=0 // loop_body
    %s14 = ssub.s32 %s9, 1
    %s15 = ssub.s32 %s9, 2
    %s22 = sadd.s32 1, %s17
    %p23 = scmp.ge.s32.totalorder %s22, 2
    %s24 = scalar_select %p23, 0, %s22
    %s25 = sadd.s32 1, %s16
    %s26 = scalar_select %p23, %s25, %s16
    %p27 = scmp.ge.s32.totalorder %s26, 2
    %s28 = scalar_select %p27, 0, %s26
    %s29 = ssub.s32 %s16, %s28
    %p30 = scmp.eq.s32.totalorder %s29, 0
    %s32 = sadd.s32 %s31, 1
    %s33 = scalar_select %p30, %s31, %s32
    %p36 = pneg %p30
    %p37 = scmp.eq.s32.totalorder %s9, 3
    %p38 = por %p36, %p37
    %p39 = scmp.ne.s32.totalorder %s31, %s34
    %p40 = scmp.eq.s32.totalorder %s9, 0
    %p41 = por %p39, %p40
    %p42 = scmp.ne.s32.totalorder %s31, %s34
    %p43 = scmp.eq.s32.totalorder %s14, 3
    %p44 = por %p42, %p43
    %p45 = scmp.ne.s32.totalorder %s34, %s35
    %p46 = scmp.eq.s32.totalorder %s14, 0
    %p47 = por %p45, %p46
    %p48 = scmp.ne.s32.totalorder %s34, %s35
    %p49 = scmp.eq.s32.totalorder %s15, 3
    %p50 = por %p48, %p49
    %p52 = scmp.ne.s32.totalorder %s35, %s51
    %p53 = scmp.eq.s32.totalorder %s15, 0
    %p54 = por %p52, %p53
    %s56 = sadd.s32 %s55, 1
    %p59 = scmp.eq.s32.totalorder %s9, 3
    %p60 = scmp.ne.s32.totalorder %s55, %s57
    %p61 = scmp.eq.s32.totalorder %s9, 0
    %p62 = por %p60, %p61
    %p63 = scmp.ne.s32.totalorder %s55, %s57
    %p64 = scmp.eq.s32.totalorder %s14, 3
    %p65 = por %p63, %p64
    %p66 = scmp.ne.s32.totalorder %s57, %s58
    %p67 = scmp.eq.s32.totalorder %s14, 0
    %p68 = por %p66, %p67
    %p69 = scmp.ne.s32.totalorder %s57, %s58
    %p70 = scmp.eq.s32.totalorder %s15, 3
    %p71 = por %p69, %p70
    %p73 = scmp.ne.s32.totalorder %s58, %s72
    %p74 = scmp.eq.s32.totalorder %s15, 0
    %p75 = por %p73, %p74
    %s77 = sadd.s32 %s76, 1
    %p80 = scmp.eq.s32.totalorder %s9, 3
    %p81 = scmp.ne.s32.totalorder %s76, %s78
    %p82 = scmp.eq.s32.totalorder %s9, 0
    %p83 = por %p81, %p82
    %p84 = scmp.ne.s32.totalorder %s76, %s78
    %p85 = scmp.eq.s32.totalorder %s14, 3
    %p86 = por %p84, %p85
    %p87 = scmp.ne.s32.totalorder %s78, %s79
    %p88 = scmp.eq.s32.totalorder %s14, 0
    %p89 = por %p87, %p88
    %p90 = scmp.ne.s32.totalorder %s78, %s79
    %p91 = scmp.eq.s32.totalorder %s15, 3
    %p92 = por %p90, %p91
    %p94 = scmp.ne.s32.totalorder %s79, %s93
    %p95 = scmp.eq.s32.totalorder %s15, 0
    %p96 = por %p94, %p95
    %s97 = ssub.s32 %s16, %s28
    %s98 = ssub.s32 %s17, %s24
    %s99 = sor.u32 %s97, %s98
    %p100 = scmp.eq.s32.totalorder %s99, 0
    %s102 = sadd.s32 %s101, 1
    %s103 = scalar_select %p100, %s101, %s102
    %p106 = pneg %p100
    %p107 = scmp.eq.s32.totalorder %s9, 3
    %p108 = por %p106, %p107
    %p109 = scmp.ne.s32.totalorder %s101, %s104
    %p110 = scmp.eq.s32.totalorder %s9, 0
    %p111 = por %p109, %p110
    %p112 = scmp.ne.s32.totalorder %s101, %s104
    %p113 = scmp.eq.s32.totalorder %s14, 3
    %p114 = por %p112, %p113
    %p115 = scmp.ne.s32.totalorder %s104, %s105
    %p116 = scmp.eq.s32.totalorder %s14, 0
    %p117 = por %p115, %p116
    %p118 = scmp.ne.s32.totalorder %s104, %s105
    %p119 = scmp.eq.s32.totalorder %s15, 3
    %p120 = por %p118, %p119
    %p122 = scmp.ne.s32.totalorder %s105, %s121
    %p123 = scmp.eq.s32.totalorder %s15, 0
    %p124 = por %p122, %p123
    %p125 = scmp.le.s32.totalorder 1, %s9
    %p126 = scmp.lt.s32.totalorder %s9, 5
    %p127 = pnand %p125, %p126
    %p128 = pneg %p127
    // Predicated region
    $region9: #{_lambda_.7} parent=5 // pred_check
      _
    $region10: #{_lambda_.7} parent=5 // pred_check_branch
      %130 = sbr.rel (%p127) target = $region12
    $region11: #{_lambda_.7} parent=5 // pred_region
      %s131 = ssub.s32 %s9, 1
      // Predicated region
      $region13: #{_lambda_.7} parent=11 // pred_check
        %p132 = pneg %p68
      $region14: #{_lambda_.7} parent=11 // pred_check_branch
        %134 = sbr.rel (%p132) target = $region16
      $region15: #{_lambda_.7} parent=11 // pred_region
        _
      $region16: #{_lambda_.7} parent=11 // pred_fallthru
        _
      // Predicated region
      $region17: #{_lambda_.7} parent=11 // pred_check
        %p135 = pneg %p89
      $region18: #{_lambda_.7} parent=11 // pred_check_branch
        %137 = sbr.rel (%p135) target = $region20
      $region19: #{_lambda_.7} parent=11 // pred_region
        _
      $region20: #{_lambda_.7} parent=11 // pred_fallthru
        _
    $region12: #{_lambda_.7} parent=5 // pred_fallthru
      _
    %p138 = scmp.lt.s32.totalorder %s9, 4
    // Predicated region
    $region21: #{_lambda_.7} parent=5 // pred_check
      %p139 = pneg %p138
    $region22: #{_lambda_.7} parent=5 // pred_check_branch
      %141 = sbr.rel (%p139) target = $region24
    $region23: #{_lambda_.7} parent=5 // pred_region
      // Predicated region
      $region25: #{_lambda_.7} parent=23 // pred_check
        %p142 = pneg %p41
      $region26: #{_lambda_.7} parent=23 // pred_check_branch
        %144 = sbr.rel (%p142) target = $region28
      $region27: #{_lambda_.7} parent=23 // pred_region
        %p145 = scmp.lt.s32.totalorder %s16, 1
        %s146 = scalar_select %p145, %s16, 1
        %s147 = smul.addr %s146, 22
        %s148 = smul.addr %s147, 4
        %s149 = scalar_lea.vmem %s0, %s148
      $region28: #{_lambda_.7} parent=23 // pred_fallthru
        _
    $region24: #{_lambda_.7} parent=5 // pred_fallthru
      _
    %p150 = scmp.le.s32.totalorder 1, %s9
    %p151 = scmp.lt.s32.totalorder %s9, 5
    %p152 = pnand %p150, %p151
    %p153 = pneg %p152
    // Predicated region
    $region29: #{_lambda_.7} parent=5 // pred_check
      _
    $region30: #{_lambda_.7} parent=5 // pred_check_branch
      %155 = sbr.rel (%p152) target = $region32
    $region31: #{_lambda_.7} parent=5 // pred_region
      %s156 = ssub.s32 %s9, 1
      %p157 = scmp.lt.s32.totalorder %s18, 1
      %s158 = scalar_select %p157, %s18, 1
      %s159 = smul.addr %s158, 22
      %s160 = smul.addr %s159, 4
      %s161 = scalar_lea.vmem %s0, %s160
      %p162 = pneg %p47
      %p163 = pneg %p44
      %p164 = pneg %p68
      %p165 = pneg %p65
      %p166 = pneg %p89
      %p167 = pneg %p86
      %p168 = pneg %p117
      %p169 = pneg %p114
      %s170 = smul.u32 4, %s19
      %p171 = scmp.lt.s32.totalorder %s18, 1
      %s172 = scalar_select %p171, %s18, 1
      %p173 = scmp.lt.s32.totalorder %s170, 7
      %s174 = scalar_select %p173, %s170, 7
      %s175 = smul.addr %s172, 8
      %s176 = sadd.s32 %s174, %s175
      %s177 = smul.addr %s176, 4
      %s178 = scalar_lea.vmem %s3, %s177
      %p179 = scmp.lt.s32.totalorder %s18, 1
      %s180 = scalar_select %p179, %s18, 1
      %s181 = smul.addr %s180, 22
      %s182 = smul.addr %s181, 4
      %s183 = scalar_lea.vmem %s0, %s182
      %s184 = smul.u32 4, %s19
      %p185 = scmp.lt.s32.totalorder %s18, 1
      %s186 = scalar_select %p185, %s18, 1
      %p187 = scmp.lt.s32.totalorder %s184, 7
      %s188 = scalar_select %p187, %s184, 7
      %s189 = smul.addr %s186, 8
      %s190 = sadd.s32 %s188, %s189
      %s191 = smul.addr %s190, 4
      %s192 = scalar_lea.vmem %s3, %s191
      %s193 = smul.u32 4, %s19
      %s195 = smul.u32 %s19, 64
      %s196 = sshra.s32 %s195, 3
      %s197 = sand.u32 %s195, 7
      %s198 = smul.addr %s196, 4
      %s199 = scalar_lea.vmem %s183, %s198
      %v200 = vld [vmem:[%s199] sm:$0xf]
      %v201 = vld [vmem:[%s199 + $0x4] sm:$0xf]
      %v202 = vld [vmem:[%s199 + $0x8] sm:$0xf]
      %v203 = vld [vmem:[%s199 + $0xc] sm:$0xf]
      %v204 = vld [vmem:[%s199 + $0x10] sm:$0xf]
      %v205 = vld [vmem:[%s199 + $0x14] sm:$0xf]
      %v206 = vld [vmem:[%s199 + $0x18] sm:$0xf]
      %v207 = vld [vmem:[%s199 + $0x1c] sm:$0xf]
      %v208 = vld [vmem:[%s199 + $0x20] sm:$0xf]
      %v209 = vld [vmem:[%s199 + $0x24] sm:$0xf]
      %v210 = vld [vmem:[%s199 + $0x28] sm:$0xf]
      %v211 = vld [vmem:[%s199 + $0x2c] sm:$0xf]
      %v212 = vld [vmem:[%s199 + $0x30] sm:$0xf]
      %v213 = vunpack.c.l.bf16 %v200
      %v214 = vunpack.c.l.bf16 %v201
      %v215 = vunpack.c.l.bf16 %v202
      %v216 = vunpack.c.l.bf16 %v203
      %v217 = vunpack.c.l.bf16 %v204
      %v218 = vunpack.c.l.bf16 %v205
      %v219 = vunpack.c.l.bf16 %v206
      %v220 = vunpack.c.l.bf16 %v207
      %v221 = vunpack.c.l.bf16 %v208
      %v222 = vunpack.c.l.bf16 %v209
      %v223 = vunpack.c.l.bf16 %v210
      %v224 = vunpack.c.l.bf16 %v211
      %v225 = vunpack.c.l.bf16 %v212
      %vm226 = vcmask 130048
      %227 = vst.msk [vmem:[#allocation2] sm:$0xff] %vm226, %v213
      %228 = vst.msk [vmem:[#allocation2 + $0x8] sm:$0xff] %vm226, %v214
      %229 = vst.msk [vmem:[#allocation2 + $0x10] sm:$0xff] %vm226, %v215
      %230 = vst.msk [vmem:[#allocation2 + $0x18] sm:$0xff] %vm226, %v216
      %231 = vst.msk [vmem:[#allocation2 + $0x20] sm:$0xff] %vm226, %v217
      %232 = vst.msk [vmem:[#allocation2 + $0x28] sm:$0xff] %vm226, %v218
      %233 = vst.msk [vmem:[#allocation2 + $0x30] sm:$0xff] %vm226, %v219
      %234 = vst.msk [vmem:[#allocation2 + $0x38] sm:$0xff] %vm226, %v220
      %235 = vst.msk [vmem:[#allocation2 + $0x40] sm:$0xff] %vm226, %v221
      %236 = vst.msk [vmem:[#allocation2 + $0x48] sm:$0xff] %vm226, %v222
      %237 = vst.msk [vmem:[#allocation2 + $0x50] sm:$0xff] %vm226, %v223
      %238 = vst.msk [vmem:[#allocation2 + $0x58] sm:$0xff] %vm226, %v224
      %239 = vst.msk [vmem:[#allocation2 + $0x60] sm:$0xff] %vm226, %v225
      %v240 = vld [vmem:[#allocation2] sm:$0xff]
      %v241 = vld [vmem:[#allocation2 + $0x8] sm:$0xff]
      %v242 = vld [vmem:[#allocation2 + $0x10] sm:$0xff]
      %v243 = vld [vmem:[#allocation2 + $0x18] sm:$0xff]
      %v244 = vld [vmem:[#allocation2 + $0x20] sm:$0xff]
      %v245 = vld [vmem:[#allocation2 + $0x28] sm:$0xff]
      %v246 = vld [vmem:[#allocation2 + $0x30] sm:$0xff]
      %v247 = vld [vmem:[#allocation2 + $0x38] sm:$0xff]
      %v248 = vpack.c.bf16 %v241, %v240
      %v249 = vpack.c.bf16 %v243, %v242
      %v250 = vpack.c.bf16 %v245, %v244
      %v251 = vpack.c.bf16 %v247, %v246
      %v252 = vld [vmem:[%s1] sm:$0xf]
      %v253 = vld [vmem:[%s1 + $0x4] sm:$0xf]
      %v254 = vld [vmem:[#allocation2 + $0x1] sm:$0xff]
      %v255 = vld [vmem:[#allocation2 + $0x9] sm:$0xff]
      %v256 = vld [vmem:[#allocation2 + $0x11] sm:$0xff]
      %v257 = vld [vmem:[#allocation2 + $0x19] sm:$0xff]
      %v258 = vld [vmem:[#allocation2 + $0x21] sm:$0xff]
      %v259 = vld [vmem:[#allocation2 + $0x29] sm:$0xff]
      %v260 = vld [vmem:[#allocation2 + $0x31] sm:$0xff]
      %v261 = vld [vmem:[#allocation2 + $0x39] sm:$0xff]
      %v262 = vpack.c.bf16 %v255, %v254
      %v263 = vpack.c.bf16 %v257, %v256
      %v264 = vpack.c.bf16 %v259, %v258
      %v265 = vpack.c.bf16 %v261, %v260
      %s266 = scalar_lea.vmem %s1, 8
      %v267 = vld [vmem:[%s266] sm:$0xf]
      %v268 = vld [vmem:[%s266 + $0x4] sm:$0xf]
      %v271 = vunpack.c.l.b16 %v267
      %v272 = vunpack.c.l.b16 %v268
      %v273 = vpack.c.b16 %v272, %v271
      %v276 = vsel %vm226, %v262, 0
      %v279 = vsel %vm226, %v263, 0
      %v282 = vsel %vm226, %v264, 0
      %v285 = vsel %vm226, %v265, 0
      %287 = vmatpush.bf16.msra.mxu0 0
      %288 = vmatpush.bf16.msra.mxu0 0
      %289 = vmatpush.bf16.msra.mxu0 0
      %290 = vmatpush.bf16.msra.mxu0 0
      %291 = vmatpush.bf16.msra.mxu0 0
      %292 = vmatpush.bf16.msra.mxu0 0
      %293 = vmatpush.bf16.msra.mxu0 0
      %294 = vmatpush.bf16.msra.mxu0 %v273
      %295 = vmatmul.bf16.gmra.mxu0 %v276
      %v296 = vpop.f32.mrf.mxu0
      %v297 = vadd.f32 0.0, %v296
      %v298 = vpop.f32.mrf.mxu0
      %v299 = vadd.f32 0.0, %v298
      %300 = vmatmul.bf16.gmra.mxu0 %v279
      %v301 = vpop.f32.mrf.mxu0
      %v302 = vadd.f32 0.0, %v301
      %v303 = vpop.f32.mrf.mxu0
      %v304 = vadd.f32 0.0, %v303
      %305 = vmatmul.bf16.gmra.mxu0 %v282
      %v306 = vpop.f32.mrf.mxu0
      %v307 = vadd.f32 0.0, %v306
      %v308 = vpop.f32.mrf.mxu0
      %v309 = vadd.f32 0.0, %v308
      %310 = vmatmul.bf16.gmra.mxu0 %v285
      %v311 = vpop.f32.mrf.mxu0
      %v312 = vadd.f32 0.0, %v311
      %v313 = vpop.f32.mrf.mxu0
      %v314 = vadd.f32 0.0, %v313
      %315 = vdwg.mxu0
      %v318 = vunpack.c.l.b16 %v252
      %v319 = vunpack.c.l.b16 %v253
      %v320 = vpack.c.b16 %v319, %v318
      %v323 = vsel %vm226, %v248, 0
      %v326 = vsel %vm226, %v249, 0
      %v329 = vsel %vm226, %v250, 0
      %v332 = vsel %vm226, %v251, 0
      %334 = vmatpush.bf16.msra.mxu0 0
      %335 = vmatpush.bf16.msra.mxu0 0
      %336 = vmatpush.bf16.msra.mxu0 0
      %337 = vmatpush.bf16.msra.mxu0 0
      %338 = vmatpush.bf16.msra.mxu0 0
      %339 = vmatpush.bf16.msra.mxu0 0
      %340 = vmatpush.bf16.msra.mxu0 0
      %341 = vmatpush.bf16.msra.mxu0 %v320
      %342 = vmatmul.bf16.gmra.mxu0 %v323
      %v343 = vpop.f32.mrf.mxu0
      %v344 = vadd.f32 %v297, %v343
      %v345 = vpop.f32.mrf.mxu0
      %v346 = vadd.f32 %v299, %v345
      %347 = vmatmul.bf16.gmra.mxu0 %v326
      %v348 = vpop.f32.mrf.mxu0
      %v349 = vadd.f32 %v302, %v348
      %v350 = vpop.f32.mrf.mxu0
      %v351 = vadd.f32 %v304, %v350
      %352 = vmatmul.bf16.gmra.mxu0 %v329
      %v353 = vpop.f32.mrf.mxu0
      %v354 = vadd.f32 %v307, %v353
      %v355 = vpop.f32.mrf.mxu0
      %v356 = vadd.f32 %v309, %v355
      %357 = vmatmul.bf16.gmra.mxu0 %v332
      %v358 = vpop.f32.mrf.mxu0
      %v359 = vadd.f32 %v312, %v358
      %v360 = vpop.f32.mrf.mxu0
      %v361 = vadd.f32 %v314, %v360
      %362 = vdwg.mxu0
      %v363 = vld [vmem:[#allocation2 + $0x2] sm:$0xff]
      %v364 = vld [vmem:[#allocation2 + $0xa] sm:$0xff]
      %v365 = vld [vmem:[#allocation2 + $0x12] sm:$0xff]
      %v366 = vld [vmem:[#allocation2 + $0x1a] sm:$0xff]
      %v367 = vld [vmem:[#allocation2 + $0x22] sm:$0xff]
      %v368 = vld [vmem:[#allocation2 + $0x2a] sm:$0xff]
      %v369 = vld [vmem:[#allocation2 + $0x32] sm:$0xff]
      %v370 = vld [vmem:[#allocation2 + $0x3a] sm:$0xff]
      %v371 = vpack.c.bf16 %v364, %v363
      %v372 = vpack.c.bf16 %v366, %v365
      %v373 = vpack.c.bf16 %v368, %v367
      %v374 = vpack.c.bf16 %v370, %v369
      %s375 = scalar_lea.vmem %s1, 16
      %v376 = vld [vmem:[%s375] sm:$0xf]
      %v377 = vld [vmem:[%s375 + $0x4] sm:$0xf]
      %v380 = vunpack.c.l.b16 %v376
      %v381 = vunpack.c.l.b16 %v377
      %v382 = vpack.c.b16 %v381, %v380
      %v385 = vsel %vm226, %v371, 0
      %v388 = vsel %vm226, %v372, 0
      %v391 = vsel %vm226, %v373, 0
      %v394 = vsel %vm226, %v374, 0
      %396 = vmatpush.bf16.msra.mxu0 0
      %397 = vmatpush.bf16.msra.mxu0 0
      %398 = vmatpush.bf16.msra.mxu0 0
      %399 = vmatpush.bf16.msra.mxu0 0
      %400 = vmatpush.bf16.msra.mxu0 0
      %401 = vmatpush.bf16.msra.mxu0 0
      %402 = vmatpush.bf16.msra.mxu0 0
      %403 = vmatpush.bf16.msra.mxu0 %v382
      %404 = vmatmul.bf16.gmra.mxu0 %v385
      %v405 = vpop.f32.mrf.mxu0
      %v406 = vadd.f32 0.0, %v405
      %v407 = vpop.f32.mrf.mxu0
      %v408 = vadd.f32 0.0, %v407
      %409 = vmatmul.bf16.gmra.mxu0 %v388
      %v410 = vpop.f32.mrf.mxu0
      %v411 = vadd.f32 0.0, %v410
      %v412 = vpop.f32.mrf.mxu0
      %v413 = vadd.f32 0.0, %v412
      %414 = vmatmul.bf16.gmra.mxu0 %v391
      %v415 = vpop.f32.mrf.mxu0
      %v416 = vadd.f32 0.0, %v415
      %v417 = vpop.f32.mrf.mxu0
      %v418 = vadd.f32 0.0, %v417
      %419 = vmatmul.bf16.gmra.mxu0 %v394
      %v420 = vpop.f32.mrf.mxu0
      %v421 = vadd.f32 0.0, %v420
      %v422 = vpop.f32.mrf.mxu0
      %v423 = vadd.f32 0.0, %v422
      %424 = vdwg.mxu0
      %v425 = vadd.f32 %v344, %v406
      %v426 = vadd.f32 %v346, %v408
      %v427 = vadd.f32 %v349, %v411
      %v428 = vadd.f32 %v351, %v413
      %v429 = vadd.f32 %v354, %v416
      %v430 = vadd.f32 %v356, %v418
      %v431 = vadd.f32 %v359, %v421
      %v432 = vadd.f32 %v361, %v423
      %v433 = vld [vmem:[#allocation2 + $0x10] sm:$0xff]
      %v434 = vld [vmem:[#allocation2 + $0x18] sm:$0xff]
      %v435 = vld [vmem:[#allocation2 + $0x20] sm:$0xff]
      %v436 = vld [vmem:[#allocation2 + $0x28] sm:$0xff]
      %v437 = vld [vmem:[#allocation2 + $0x30] sm:$0xff]
      %v438 = vld [vmem:[#allocation2 + $0x38] sm:$0xff]
      %v439 = vld [vmem:[#allocation2 + $0x40] sm:$0xff]
      %v440 = vld [vmem:[#allocation2 + $0x48] sm:$0xff]
      %v441 = vpack.c.bf16 %v434, %v433
      %v442 = vpack.c.bf16 %v436, %v435
      %v443 = vpack.c.bf16 %v438, %v437
      %v444 = vpack.c.bf16 %v440, %v439
      %s445 = scalar_lea.vmem %s1, 24
      %v446 = vld [vmem:[%s445] sm:$0xf]
      %v447 = vld [vmem:[%s445 + $0x4] sm:$0xf]
      %v450 = vunpack.c.l.b16 %v446
      %v451 = vunpack.c.l.b16 %v447
      %v452 = vpack.c.b16 %v451, %v450
      %v455 = vsel %vm226, %v441, 0
      %v458 = vsel %vm226, %v442, 0
      %v461 = vsel %vm226, %v443, 0
      %v464 = vsel %vm226, %v444, 0
      %466 = vmatpush.bf16.msra.mxu0 0
      %467 = vmatpush.bf16.msra.mxu0 0
      %468 = vmatpush.bf16.msra.mxu0 0
      %469 = vmatpush.bf16.msra.mxu0 0
      %470 = vmatpush.bf16.msra.mxu0 0
      %471 = vmatpush.bf16.msra.mxu0 0
      %472 = vmatpush.bf16.msra.mxu0 0
      %473 = vmatpush.bf16.msra.mxu0 %v452
      %474 = vmatmul.bf16.gmra.mxu0 %v455
      %v475 = vpop.f32.mrf.mxu0
      %v476 = vadd.f32 0.0, %v475
      %v477 = vpop.f32.mrf.mxu0
      %v478 = vadd.f32 0.0, %v477
      %479 = vmatmul.bf16.gmra.mxu0 %v458
      %v480 = vpop.f32.mrf.mxu0
      %v481 = vadd.f32 0.0, %v480
      %v482 = vpop.f32.mrf.mxu0
      %v483 = vadd.f32 0.0, %v482
      %484 = vmatmul.bf16.gmra.mxu0 %v461
      %v485 = vpop.f32.mrf.mxu0
      %v486 = vadd.f32 0.0, %v485
      %v487 = vpop.f32.mrf.mxu0
      %v488 = vadd.f32 0.0, %v487
      %489 = vmatmul.bf16.gmra.mxu0 %v464
      %v490 = vpop.f32.mrf.mxu0
      %v491 = vadd.f32 0.0, %v490
      %v492 = vpop.f32.mrf.mxu0
      %v493 = vadd.f32 0.0, %v492
      %494 = vdwg.mxu0
      %v495 = vadd.f32 %v425, %v476
      %v496 = vadd.f32 %v426, %v478
      %v497 = vadd.f32 %v427, %v481
      %v498 = vadd.f32 %v428, %v483
      %v499 = vadd.f32 %v429, %v486
      %v500 = vadd.f32 %v430, %v488
      %v501 = vadd.f32 %v431, %v491
      %v502 = vadd.f32 %v432, %v493
      %v503 = vld [vmem:[#allocation2 + $0x11] sm:$0xff]
      %v504 = vld [vmem:[#allocation2 + $0x19] sm:$0xff]
      %v505 = vld [vmem:[#allocation2 + $0x21] sm:$0xff]
      %v506 = vld [vmem:[#allocation2 + $0x29] sm:$0xff]
      %v507 = vld [vmem:[#allocation2 + $0x31] sm:$0xff]
      %v508 = vld [vmem:[#allocation2 + $0x39] sm:$0xff]
      %v509 = vld [vmem:[#allocation2 + $0x41] sm:$0xff]
      %v510 = vld [vmem:[#allocation2 + $0x49] sm:$0xff]
      %v511 = vpack.c.bf16 %v504, %v503
      %v512 = vpack.c.bf16 %v506, %v505
      %v513 = vpack.c.bf16 %v508, %v507
      %v514 = vpack.c.bf16 %v510, %v509
      %s515 = scalar_lea.vmem %s1, 32
      %v516 = vld [vmem:[%s515] sm:$0xf]
      %v517 = vld [vmem:[%s515 + $0x4] sm:$0xf]
      %v520 = vunpack.c.l.b16 %v516
      %v521 = vunpack.c.l.b16 %v517
      %v522 = vpack.c.b16 %v521, %v520
      %v525 = vsel %vm226, %v511, 0
      %v528 = vsel %vm226, %v512, 0
      %v531 = vsel %vm226, %v513, 0
      %v534 = vsel %vm226, %v514, 0
      %536 = vmatpush.bf16.msra.mxu0 0
      %537 = vmatpush.bf16.msra.mxu0 0
      %538 = vmatpush.bf16.msra.mxu0 0
      %539 = vmatpush.bf16.msra.mxu0 0
      %540 = vmatpush.bf16.msra.mxu0 0
      %541 = vmatpush.bf16.msra.mxu0 0
      %542 = vmatpush.bf16.msra.mxu0 0
      %543 = vmatpush.bf16.msra.mxu0 %v522
      %544 = vmatmul.bf16.gmra.mxu0 %v525
      %v545 = vpop.f32.mrf.mxu0
      %v546 = vadd.f32 0.0, %v545
      %v547 = vpop.f32.mrf.mxu0
      %v548 = vadd.f32 0.0, %v547
      %549 = vmatmul.bf16.gmra.mxu0 %v528
      %v550 = vpop.f32.mrf.mxu0
      %v551 = vadd.f32 0.0, %v550
      %v552 = vpop.f32.mrf.mxu0
      %v553 = vadd.f32 0.0, %v552
      %554 = vmatmul.bf16.gmra.mxu0 %v531
      %v555 = vpop.f32.mrf.mxu0
      %v556 = vadd.f32 0.0, %v555
      %v557 = vpop.f32.mrf.mxu0
      %v558 = vadd.f32 0.0, %v557
      %559 = vmatmul.bf16.gmra.mxu0 %v534
      %v560 = vpop.f32.mrf.mxu0
      %v561 = vadd.f32 0.0, %v560
      %v562 = vpop.f32.mrf.mxu0
      %v563 = vadd.f32 0.0, %v562
      %564 = vdwg.mxu0
      %v565 = vadd.f32 %v495, %v546
      %v566 = vadd.f32 %v496, %v548
      %v567 = vadd.f32 %v497, %v551
      %v568 = vadd.f32 %v498, %v553
      %v569 = vadd.f32 %v499, %v556
      %v570 = vadd.f32 %v500, %v558
      %v571 = vadd.f32 %v501, %v561
      %v572 = vadd.f32 %v502, %v563
      %v573 = vld [vmem:[#allocation2 + $0x12] sm:$0xff]
      %v574 = vld [vmem:[#allocation2 + $0x1a] sm:$0xff]
      %v575 = vld [vmem:[#allocation2 + $0x22] sm:$0xff]
      %v576 = vld [vmem:[#allocation2 + $0x2a] sm:$0xff]
      %v577 = vld [vmem:[#allocation2 + $0x32] sm:$0xff]
      %v578 = vld [vmem:[#allocation2 + $0x3a] sm:$0xff]
      %v579 = vld [vmem:[#allocation2 + $0x42] sm:$0xff]
      %v580 = vld [vmem:[#allocation2 + $0x4a] sm:$0xff]
      %v581 = vpack.c.bf16 %v574, %v573
      %v582 = vpack.c.bf16 %v576, %v575
      %v583 = vpack.c.bf16 %v578, %v577
      %v584 = vpack.c.bf16 %v580, %v579
      %s585 = scalar_lea.vmem %s1, 40
      %v586 = vld [vmem:[%s585] sm:$0xf]
      %v587 = vld [vmem:[%s585 + $0x4] sm:$0xf]
      %v590 = vunpack.c.l.b16 %v586
      %v591 = vunpack.c.l.b16 %v587
      %v592 = vpack.c.b16 %v591, %v590
      %v595 = vsel %vm226, %v581, 0
      %v598 = vsel %vm226, %v582, 0
      %v601 = vsel %vm226, %v583, 0
      %v604 = vsel %vm226, %v584, 0
      %606 = vmatpush.bf16.msra.mxu0 0
      %607 = vmatpush.bf16.msra.mxu0 0
      %608 = vmatpush.bf16.msra.mxu0 0
      %609 = vmatpush.bf16.msra.mxu0 0
      %610 = vmatpush.bf16.msra.mxu0 0
      %611 = vmatpush.bf16.msra.mxu0 0
      %612 = vmatpush.bf16.msra.mxu0 0
      %613 = vmatpush.bf16.msra.mxu0 %v592
      %614 = vmatmul.bf16.gmra.mxu0 %v595
      %v615 = vpop.f32.mrf.mxu0
      %v616 = vadd.f32 0.0, %v615
      %v617 = vpop.f32.mrf.mxu0
      %v618 = vadd.f32 0.0, %v617
      %619 = vmatmul.bf16.gmra.mxu0 %v598
      %v620 = vpop.f32.mrf.mxu0
      %v621 = vadd.f32 0.0, %v620
      %v622 = vpop.f32.mrf.mxu0
      %v623 = vadd.f32 0.0, %v622
      %624 = vmatmul.bf16.gmra.mxu0 %v601
      %v625 = vpop.f32.mrf.mxu0
      %v626 = vadd.f32 0.0, %v625
      %v627 = vpop.f32.mrf.mxu0
      %v628 = vadd.f32 0.0, %v627
      %629 = vmatmul.bf16.gmra.mxu0 %v604
      %v630 = vpop.f32.mrf.mxu0
      %v631 = vadd.f32 0.0, %v630
      %v632 = vpop.f32.mrf.mxu0
      %v633 = vadd.f32 0.0, %v632
      %634 = vdwg.mxu0
      %v635 = vadd.f32 %v565, %v616
      %v636 = vadd.f32 %v566, %v618
      %v637 = vadd.f32 %v567, %v621
      %v638 = vadd.f32 %v568, %v623
      %v639 = vadd.f32 %v569, %v626
      %v640 = vadd.f32 %v570, %v628
      %v641 = vadd.f32 %v571, %v631
      %v642 = vadd.f32 %v572, %v633
      %v643 = vld [vmem:[#allocation2 + $0x20] sm:$0xff]
      %v644 = vld [vmem:[#allocation2 + $0x28] sm:$0xff]
      %v645 = vld [vmem:[#allocation2 + $0x30] sm:$0xff]
      %v646 = vld [vmem:[#allocation2 + $0x38] sm:$0xff]
      %v647 = vld [vmem:[#allocation2 + $0x40] sm:$0xff]
      %v648 = vld [vmem:[#allocation2 + $0x48] sm:$0xff]
      %v649 = vld [vmem:[#allocation2 + $0x50] sm:$0xff]
      %v650 = vld [vmem:[#allocation2 + $0x58] sm:$0xff]
      %v651 = vpack.c.bf16 %v644, %v643
      %v652 = vpack.c.bf16 %v646, %v645
      %v653 = vpack.c.bf16 %v648, %v647
      %v654 = vpack.c.bf16 %v650, %v649
      %s655 = scalar_lea.vmem %s1, 48
      %v656 = vld [vmem:[%s655] sm:$0xf]
      %v657 = vld [vmem:[%s655 + $0x4] sm:$0xf]
      %v660 = vunpack.c.l.b16 %v656
      %v661 = vunpack.c.l.b16 %v657
      %v662 = vpack.c.b16 %v661, %v660
      %v665 = vsel %vm226, %v651, 0
      %v668 = vsel %vm226, %v652, 0
      %v671 = vsel %vm226, %v653, 0
      %v674 = vsel %vm226, %v654, 0
      %676 = vmatpush.bf16.msra.mxu0 0
      %677 = vmatpush.bf16.msra.mxu0 0
      %678 = vmatpush.bf16.msra.mxu0 0
      %679 = vmatpush.bf16.msra.mxu0 0
      %680 = vmatpush.bf16.msra.mxu0 0
      %681 = vmatpush.bf16.msra.mxu0 0
      %682 = vmatpush.bf16.msra.mxu0 0
      %683 = vmatpush.bf16.msra.mxu0 %v662
      %684 = vmatmul.bf16.gmra.mxu0 %v665
      %v685 = vpop.f32.mrf.mxu0
      %v686 = vadd.f32 0.0, %v685
      %v687 = vpop.f32.mrf.mxu0
      %v688 = vadd.f32 0.0, %v687
      %689 = vmatmul.bf16.gmra.mxu0 %v668
      %v690 = vpop.f32.mrf.mxu0
      %v691 = vadd.f32 0.0, %v690
      %v692 = vpop.f32.mrf.mxu0
      %v693 = vadd.f32 0.0, %v692
      %694 = vmatmul.bf16.gmra.mxu0 %v671
      %v695 = vpop.f32.mrf.mxu0
      %v696 = vadd.f32 0.0, %v695
      %v697 = vpop.f32.mrf.mxu0
      %v698 = vadd.f32 0.0, %v697
      %699 = vmatmul.bf16.gmra.mxu0 %v674
      %v700 = vpop.f32.mrf.mxu0
      %v701 = vadd.f32 0.0, %v700
      %v702 = vpop.f32.mrf.mxu0
      %v703 = vadd.f32 0.0, %v702
      %704 = vdwg.mxu0
      %v705 = vadd.f32 %v635, %v686
      %v706 = vadd.f32 %v636, %v688
      %v707 = vadd.f32 %v637, %v691
      %v708 = vadd.f32 %v638, %v693
      %v709 = vadd.f32 %v639, %v696
      %v710 = vadd.f32 %v640, %v698
      %v711 = vadd.f32 %v641, %v701
      %v712 = vadd.f32 %v642, %v703
      %v713 = vld [vmem:[#allocation2 + $0x21] sm:$0xff]
      %v714 = vld [vmem:[#allocation2 + $0x29] sm:$0xff]
      %v715 = vld [vmem:[#allocation2 + $0x31] sm:$0xff]
      %v716 = vld [vmem:[#allocation2 + $0x39] sm:$0xff]
      %v717 = vld [vmem:[#allocation2 + $0x41] sm:$0xff]
      %v718 = vld [vmem:[#allocation2 + $0x49] sm:$0xff]
      %v719 = vld [vmem:[#allocation2 + $0x51] sm:$0xff]
      %v720 = vld [vmem:[#allocation2 + $0x59] sm:$0xff]
      %v721 = vpack.c.bf16 %v714, %v713
      %v722 = vpack.c.bf16 %v716, %v715
      %v723 = vpack.c.bf16 %v718, %v717
      %v724 = vpack.c.bf16 %v720, %v719
      %s725 = scalar_lea.vmem %s1, 56
      %v726 = vld [vmem:[%s725] sm:$0xf]
      %v727 = vld [vmem:[%s725 + $0x4] sm:$0xf]
      %v730 = vunpack.c.l.b16 %v726
      %v731 = vunpack.c.l.b16 %v727
      %v732 = vpack.c.b16 %v731, %v730
      %v735 = vsel %vm226, %v721, 0
      %v738 = vsel %vm226, %v722, 0
      %v741 = vsel %vm226, %v723, 0
      %v744 = vsel %vm226, %v724, 0
      %746 = vmatpush.bf16.msra.mxu0 0
      %747 = vmatpush.bf16.msra.mxu0 0
      %748 = vmatpush.bf16.msra.mxu0 0
      %749 = vmatpush.bf16.msra.mxu0 0
      %750 = vmatpush.bf16.msra.mxu0 0
      %751 = vmatpush.bf16.msra.mxu0 0
      %752 = vmatpush.bf16.msra.mxu0 0
      %753 = vmatpush.bf16.msra.mxu0 %v732
      %754 = vmatmul.bf16.gmra.mxu0 %v735
      %v755 = vpop.f32.mrf.mxu0
      %v756 = vadd.f32 0.0, %v755
      %v757 = vpop.f32.mrf.mxu0
      %v758 = vadd.f32 0.0, %v757
      %759 = vmatmul.bf16.gmra.mxu0 %v738
      %v760 = vpop.f32.mrf.mxu0
      %v761 = vadd.f32 0.0, %v760
      %v762 = vpop.f32.mrf.mxu0
      %v763 = vadd.f32 0.0, %v762
      %764 = vmatmul.bf16.gmra.mxu0 %v741
      %v765 = vpop.f32.mrf.mxu0
      %v766 = vadd.f32 0.0, %v765
      %v767 = vpop.f32.mrf.mxu0
      %v768 = vadd.f32 0.0, %v767
      %769 = vmatmul.bf16.gmra.mxu0 %v744
      %v770 = vpop.f32.mrf.mxu0
      %v771 = vadd.f32 0.0, %v770
      %v772 = vpop.f32.mrf.mxu0
      %v773 = vadd.f32 0.0, %v772
      %774 = vdwg.mxu0
      %v775 = vadd.f32 %v705, %v756
      %v776 = vadd.f32 %v706, %v758
      %v777 = vadd.f32 %v707, %v761
      %v778 = vadd.f32 %v708, %v763
      %v779 = vadd.f32 %v709, %v766
      %v780 = vadd.f32 %v710, %v768
      %v781 = vadd.f32 %v711, %v771
      %v782 = vadd.f32 %v712, %v773
      %v783 = vld [vmem:[#allocation2 + $0x22] sm:$0xff]
      %v784 = vld [vmem:[#allocation2 + $0x2a] sm:$0xff]
      %v785 = vld [vmem:[#allocation2 + $0x32] sm:$0xff]
      %v786 = vld [vmem:[#allocation2 + $0x3a] sm:$0xff]
      %v787 = vld [vmem:[#allocation2 + $0x42] sm:$0xff]
      %v788 = vld [vmem:[#allocation2 + $0x4a] sm:$0xff]
      %v789 = vld [vmem:[#allocation2 + $0x52] sm:$0xff]
      %v790 = vld [vmem:[#allocation2 + $0x5a] sm:$0xff]
      %v791 = vpack.c.bf16 %v784, %v783
      %v792 = vpack.c.bf16 %v786, %v785
      %v793 = vpack.c.bf16 %v788, %v787
      %v794 = vpack.c.bf16 %v790, %v789
      %s795 = scalar_lea.vmem %s1, 64
      %v796 = vld [vmem:[%s795] sm:$0xf]
      %v797 = vld [vmem:[%s795 + $0x4] sm:$0xf]
      %v800 = vunpack.c.l.b16 %v796
      %v801 = vunpack.c.l.b16 %v797
      %v802 = vpack.c.b16 %v801, %v800
      %v805 = vsel %vm226, %v791, 0
      %v808 = vsel %vm226, %v792, 0
      %v811 = vsel %vm226, %v793, 0
      %v814 = vsel %vm226, %v794, 0
      %816 = vmatpush.bf16.msra.mxu0 0
      %817 = vmatpush.bf16.msra.mxu0 0
      %818 = vmatpush.bf16.msra.mxu0 0
      %819 = vmatpush.bf16.msra.mxu0 0
      %820 = vmatpush.bf16.msra.mxu0 0
      %821 = vmatpush.bf16.msra.mxu0 0
      %822 = vmatpush.bf16.msra.mxu0 0
      %823 = vmatpush.bf16.msra.mxu0 %v802
      %824 = vmatmul.bf16.gmra.mxu0 %v805
      %v825 = vpop.f32.mrf.mxu0
      %v826 = vadd.f32 0.0, %v825
      %v827 = vpop.f32.mrf.mxu0
      %v828 = vadd.f32 0.0, %v827
      %829 = vmatmul.bf16.gmra.mxu0 %v808
      %v830 = vpop.f32.mrf.mxu0
      %v831 = vadd.f32 0.0, %v830
      %v832 = vpop.f32.mrf.mxu0
      %v833 = vadd.f32 0.0, %v832
      %834 = vmatmul.bf16.gmra.mxu0 %v811
      %v835 = vpop.f32.mrf.mxu0
      %v836 = vadd.f32 0.0, %v835
      %v837 = vpop.f32.mrf.mxu0
      %v838 = vadd.f32 0.0, %v837
      %839 = vmatmul.bf16.gmra.mxu0 %v814
      %v840 = vpop.f32.mrf.mxu0
      %v841 = vadd.f32 0.0, %v840
      %v842 = vpop.f32.mrf.mxu0
      %v843 = vadd.f32 0.0, %v842
      %844 = vdwg.mxu0
      %v845 = vadd.f32 %v775, %v826
      %v846 = vadd.f32 %v776, %v828
      %v847 = vadd.f32 %v777, %v831
      %v848 = vadd.f32 %v778, %v833
      %v849 = vadd.f32 %v779, %v836
      %v850 = vadd.f32 %v780, %v838
      %v851 = vadd.f32 %v781, %v841
      %v852 = vadd.f32 %v782, %v843
      %v853 = vld [vmem:[%s2] sm:$0x1]
      %v855 = vperm.slane %v853, 0
      %v857 = vadd.f32 %v845, %v855
      %v858 = vadd.f32 %v846, %v855
      %v859 = vadd.f32 %v847, %v855
      %v860 = vadd.f32 %v848, %v855
      %v861 = vadd.f32 %v849, %v855
      %v862 = vadd.f32 %v850, %v855
      %v863 = vadd.f32 %v851, %v855
      %v864 = vadd.f32 %v852, %v855
      %v865 = vmax.f32 %v857, 0.0
      %v866 = vmax.f32 %v858, 0.0
      %v867 = vmax.f32 %v859, 0.0
      %v868 = vmax.f32 %v860, 0.0
      %v869 = vmax.f32 %v861, 0.0
      %v870 = vmax.f32 %v862, 0.0
      %v871 = vmax.f32 %v863, 0.0
      %v872 = vmax.f32 %v864, 0.0
      %vm873 = vcmask 261120
      %874 = vst.msk [vmem:[#allocation3] sm:$0xff] %vm873, %v865
      %875 = vst.msk [vmem:[#allocation3 + $0x8] sm:$0xff] %vm873, %v866
      %876 = vst.msk [vmem:[#allocation3 + $0x10] sm:$0xff] %vm873, %v867
      %877 = vst.msk [vmem:[#allocation3 + $0x18] sm:$0xff] %vm873, %v868
      %878 = vst.msk [vmem:[#allocation3 + $0x20] sm:$0xff] %vm873, %v869
      %879 = vst.msk [vmem:[#allocation3 + $0x28] sm:$0xff] %vm873, %v870
      %880 = vst.msk [vmem:[#allocation3 + $0x30] sm:$0xff] %vm873, %v871
      %881 = vst.msk [vmem:[#allocation3 + $0x38] sm:$0xff] %vm873, %v872
      %v882 = vld [vmem:[#allocation3] sm:$0xff]
      %v883 = vpack.c.bf16 %v882, %v882
      %vm884 = vcmask 257024
      %885 = vst.msk [vmem:[%s192] sm:$0xf] %vm884, %v883
      %v886 = vld [vmem:[#allocation3 + $0x10] sm:$0xff]
      %v887 = vpack.c.bf16 %v886, %v886
      %s888 = scalar_lea.vmem %s192, 4
      %889 = vst.msk [vmem:[%s888] sm:$0xf] %vm884, %v887
      %v890 = vld [vmem:[#allocation3 + $0x20] sm:$0xff]
      %v891 = vpack.c.bf16 %v890, %v890
      %s892 = scalar_lea.vmem %s192, 8
      %893 = vst.msk [vmem:[%s892] sm:$0xf] %vm884, %v891
      %v894 = vld [vmem:[#allocation3 + $0x30] sm:$0xff]
      %v895 = vpack.c.bf16 %v894, %v894
      %s896 = scalar_lea.vmem %s192, 12
      %897 = vst.msk [vmem:[%s896] sm:$0xf] %vm884, %v895
      %s898 = smul.u32 4, %s19
      %p899 = scmp.lt.s32.totalorder %s18, 1
      %s900 = scalar_select %p899, %s18, 1
      %p901 = scmp.lt.s32.totalorder %s898, 7
      %s902 = scalar_select %p901, %s898, 7
      %s903 = smul.addr %s900, 8
      %s904 = sadd.s32 %s902, %s903
      %s905 = smul.addr %s904, 4
      %s906 = scalar_lea.vmem %s3, %s905
      // Predicated region
      $region33: #{_lambda_.7} parent=31 // pred_check
        %p907 = pneg %p114
      $region34: #{_lambda_.7} parent=31 // pred_check_branch
        %909 = sbr.rel (%p907) target = $region36
      $region35: #{_lambda_.7} parent=31 // pred_region
        %s910 = smul.u32 4, %s19
      $region36: #{_lambda_.7} parent=31 // pred_fallthru
        _
    $region32: #{_lambda_.7} parent=5 // pred_fallthru
      _
    %p911 = scmp.le.s32.totalorder 2, %s9
    // Predicated region
    $region37: #{_lambda_.7} parent=5 // pred_check
      %p912 = pneg %p911
    $region38: #{_lambda_.7} parent=5 // pred_check_branch
      %914 = sbr.rel (%p912) target = $region40
    $region39: #{_lambda_.7} parent=5 // pred_region
      %s915 = ssub.s32 %s9, 2
      // Predicated region
      $region41: #{_lambda_.7} parent=39 // pred_check
        %p916 = pneg %p120
      $region42: #{_lambda_.7} parent=39 // pred_check_branch
        %918 = sbr.rel (%p916) target = $region44
      $region43: #{_lambda_.7} parent=39 // pred_region
        %s919 = smul.u32 4, %s21
        %p920 = scmp.lt.s32.totalorder %s20, 1
        %s921 = scalar_select %p920, %s20, 1
        %p922 = scmp.lt.s32.totalorder %s919, 7
        %s923 = scalar_select %p922, %s919, 7
        %s924 = smul.addr %s921, 8
        %s925 = sadd.s32 %s923, %s924
        %s926 = smul.addr %s925, 4
        %s927 = scalar_lea.vmem %s3, %s926
      $region44: #{_lambda_.7} parent=39 // pred_fallthru
        _
    $region40: #{_lambda_.7} parent=5 // pred_fallthru
      _
  $region6: #{_lambda_.7} parent=0 // loop_footer
    %s13 = sadd.s32 1, %s9
  $region7: #{_lambda_.7} parent=0 // loop_footer_branch
    %8 = sbr.rel target = $region3
  $region8: #{_lambda_.7} parent=0 // loop_exit
    _

// kernel: _lambda_.6
$region0: #{_lambda_.6}
  #allocation0 [shape = 'u32[]', space=smem, size = 0x4, offset = 0x4, fixed_abs, tag = 'smem constant byte address 0x4 - core index']
  #allocation1 [shape = 'u32[72,128]{1,0:T(1,128)}', space=vmem, size = 0x9000, scoped, tag = 'internal scratch']
  #allocation2 [shape = 'f32[152,4]{1,0:T(8,128)}', space=vmem, size = 0x13000, scoped, tag = 'scratch operand']
  #allocation3 [shape = 'f32[96,16]{1,0:T(8,128)}', space=vmem, size = 0xc000, scoped, tag = 'scratch operand']
  #allocation4 [shape = 'f32[48,16]{1,0:T(8,128)}', space=vmem, size = 0x6000, scoped, tag = 'scratch operand']
  %s0 = inlined_call_operand.vmem [shape: bf16[2,456,4], index: 0, kind: input, shape index: {}]
  %s1 = inlined_call_operand.vmem [shape: bf16[9,4,16], index: 1, kind: input, shape index: {}]
  %s2 = inlined_call_operand.vmem [shape: f32[1,16], index: 2, kind: input, shape index: {}]
  %s3 = inlined_call_operand.vmem [shape: bf16[2,8,8,16], index: 3, kind: output, shape index: {}]
  %s4 = sld [smem:[#allocation0]]
  $region45: #{_lambda_.6} parent=0
    _
  %s6 = ssub.s32 1, %s4
  %s7 = scalar_select 0, %s6, %s4
  loop: start=0, step=1, limit=10
  $region2: #{_lambda_.6} parent=0 // loop_pre_header
    _
  $region3: #{_lambda_.6} parent=0 // loop_header
    %s9 = sphi 0, %s13
    %p10 = scmp.ge.s32.totalorder %s9, 10
    %s16 = sphi 0, %s28
    %s17 = sphi 0, %s24
    %s18 = sphi 0, %s16
    %s19 = sphi 0, %s17
    %s20 = sphi 0, %s18
    %s21 = sphi 0, %s19
    %s31 = sphi 0, %s33
    %s34 = sphi 0, %s31
    %s35 = sphi 0, %s34
    %s51 = sphi 0, %s35
    %s55 = sphi 0, %s55
    %s57 = sphi 0, %s55
    %s58 = sphi 0, %s57
    %s72 = sphi 0, %s58
    %s76 = sphi 0, %s76
    %s78 = sphi 0, %s76
    %s79 = sphi 0, %s78
    %s93 = sphi 0, %s79
    %s101 = sphi 0, %s103
    %s104 = sphi 0, %s101
    %s105 = sphi 0, %s104
    %s121 = sphi 0, %s105
  $region4: #{_lambda_.6} parent=0 // loop_header_branch
    %12 = sbr.rel (%p10) target = $region8
  $region5: #{_lambda_.6} parent=0 // loop_body
    %s14 = ssub.s32 %s9, 1
    %s15 = ssub.s32 %s9, 2
    %s22 = sadd.s32 1, %s17
    %p23 = scmp.ge.s32.totalorder %s22, 4
    %s24 = scalar_select %p23, 0, %s22
    %s25 = sadd.s32 1, %s16
    %s26 = scalar_select %p23, %s25, %s16
    %p27 = scmp.ge.s32.totalorder %s26, 2
    %s28 = scalar_select %p27, 0, %s26
    %s29 = ssub.s32 %s16, %s28
    %p30 = scmp.eq.s32.totalorder %s29, 0
    %s32 = sadd.s32 %s31, 1
    %s33 = scalar_select %p30, %s31, %s32
    %p36 = pneg %p30
    %p37 = scmp.eq.s32.totalorder %s9, 7
    %p38 = por %p36, %p37
    %p39 = scmp.ne.s32.totalorder %s31, %s34
    %p40 = scmp.eq.s32.totalorder %s9, 0
    %p41 = por %p39, %p40
    %p42 = scmp.ne.s32.totalorder %s31, %s34
    %p43 = scmp.eq.s32.totalorder %s14, 7
    %p44 = por %p42, %p43
    %p45 = scmp.ne.s32.totalorder %s34, %s35
    %p46 = scmp.eq.s32.totalorder %s14, 0
    %p47 = por %p45, %p46
    %p48 = scmp.ne.s32.totalorder %s34, %s35
    %p49 = scmp.eq.s32.totalorder %s15, 7
    %p50 = por %p48, %p49
    %p52 = scmp.ne.s32.totalorder %s35, %s51
    %p53 = scmp.eq.s32.totalorder %s15, 0
    %p54 = por %p52, %p53
    %s56 = sadd.s32 %s55, 1
    %p59 = scmp.eq.s32.totalorder %s9, 7
    %p60 = scmp.ne.s32.totalorder %s55, %s57
    %p61 = scmp.eq.s32.totalorder %s9, 0
    %p62 = por %p60, %p61
    %p63 = scmp.ne.s32.totalorder %s55, %s57
    %p64 = scmp.eq.s32.totalorder %s14, 7
    %p65 = por %p63, %p64
    %p66 = scmp.ne.s32.totalorder %s57, %s58
    %p67 = scmp.eq.s32.totalorder %s14, 0
    %p68 = por %p66, %p67
    %p69 = scmp.ne.s32.totalorder %s57, %s58
    %p70 = scmp.eq.s32.totalorder %s15, 7
    %p71 = por %p69, %p70
    %p73 = scmp.ne.s32.totalorder %s58, %s72
    %p74 = scmp.eq.s32.totalorder %s15, 0
    %p75 = por %p73, %p74
    %s77 = sadd.s32 %s76, 1
    %p80 = scmp.eq.s32.totalorder %s9, 7
    %p81 = scmp.ne.s32.totalorder %s76, %s78
    %p82 = scmp.eq.s32.totalorder %s9, 0
    %p83 = por %p81, %p82
    %p84 = scmp.ne.s32.totalorder %s76, %s78
    %p85 = scmp.eq.s32.totalorder %s14, 7
    %p86 = por %p84, %p85
    %p87 = scmp.ne.s32.totalorder %s78, %s79
    %p88 = scmp.eq.s32.totalorder %s14, 0
    %p89 = por %p87, %p88
    %p90 = scmp.ne.s32.totalorder %s78, %s79
    %p91 = scmp.eq.s32.totalorder %s15, 7
    %p92 = por %p90, %p91
    %p94 = scmp.ne.s32.totalorder %s79, %s93
    %p95 = scmp.eq.s32.totalorder %s15, 0
    %p96 = por %p94, %p95
    %s97 = ssub.s32 %s16, %s28
    %s98 = ssub.s32 %s17, %s24
    %s99 = sor.u32 %s97, %s98
    %p100 = scmp.eq.s32.totalorder %s99, 0
    %s102 = sadd.s32 %s101, 1
    %s103 = scalar_select %p100, %s101, %s102
    %p106 = pneg %p100
    %p107 = scmp.eq.s32.totalorder %s9, 7
    %p108 = por %p106, %p107
    %p109 = scmp.ne.s32.totalorder %s101, %s104
    %p110 = scmp.eq.s32.totalorder %s9, 0
    %p111 = por %p109, %p110
    %p112 = scmp.ne.s32.totalorder %s101, %s104
    %p113 = scmp.eq.s32.totalorder %s14, 7
    %p114 = por %p112, %p113
    %p115 = scmp.ne.s32.totalorder %s104, %s105
    %p116 = scmp.eq.s32.totalorder %s14, 0
    %p117 = por %p115, %p116
    %p118 = scmp.ne.s32.totalorder %s104, %s105
    %p119 = scmp.eq.s32.totalorder %s15, 7
    %p120 = por %p118, %p119
    %p122 = scmp.ne.s32.totalorder %s105, %s121
    %p123 = scmp.eq.s32.totalorder %s15, 0
    %p124 = por %p122, %p123
    %p125 = scmp.le.s32.totalorder 1, %s9
    %p126 = scmp.lt.s32.totalorder %s9, 9
    %p127 = pnand %p125, %p126
    %p128 = pneg %p127
    // Predicated region
    $region9: #{_lambda_.6} parent=5 // pred_check
      _
    $region10: #{_lambda_.6} parent=5 // pred_check_branch
      %130 = sbr.rel (%p127) target = $region12
    $region11: #{_lambda_.6} parent=5 // pred_region
      %s131 = ssub.s32 %s9, 1
      // Predicated region
      $region13: #{_lambda_.6} parent=11 // pred_check
        %p132 = pneg %p68
      $region14: #{_lambda_.6} parent=11 // pred_check_branch
        %134 = sbr.rel (%p132) target = $region16
      $region15: #{_lambda_.6} parent=11 // pred_region
        _
      $region16: #{_lambda_.6} parent=11 // pred_fallthru
        _
      // Predicated region
      $region17: #{_lambda_.6} parent=11 // pred_check
        %p135 = pneg %p89
      $region18: #{_lambda_.6} parent=11 // pred_check_branch
        %137 = sbr.rel (%p135) target = $region20
      $region19: #{_lambda_.6} parent=11 // pred_region
        _
      $region20: #{_lambda_.6} parent=11 // pred_fallthru
        _
    $region12: #{_lambda_.6} parent=5 // pred_fallthru
      _
    %p138 = scmp.lt.s32.totalorder %s9, 8
    // Predicated region
    $region21: #{_lambda_.6} parent=5 // pred_check
      %p139 = pneg %p138
    $region22: #{_lambda_.6} parent=5 // pred_check_branch
      %141 = sbr.rel (%p139) target = $region24
    $region23: #{_lambda_.6} parent=5 // pred_region
      // Predicated region
      $region25: #{_lambda_.6} parent=23 // pred_check
        %p142 = pneg %p41
      $region26: #{_lambda_.6} parent=23 // pred_check_branch
        %144 = sbr.rel (%p142) target = $region28
      $region27: #{_lambda_.6} parent=23 // pred_region
        %p145 = scmp.lt.s32.totalorder %s16, 1
        %s146 = scalar_select %p145, %s16, 1
        %s147 = smul.addr %s146, 57
        %s148 = smul.addr %s147, 4
        %s149 = scalar_lea.vmem %s0, %s148
      $region28: #{_lambda_.6} parent=23 // pred_fallthru
        _
    $region24: #{_lambda_.6} parent=5 // pred_fallthru
      _
    %p150 = scmp.le.s32.totalorder 1, %s9
    %p151 = scmp.lt.s32.totalorder %s9, 9
    %p152 = pnand %p150, %p151
    %p153 = pneg %p152
    // Predicated region
    $region29: #{_lambda_.6} parent=5 // pred_check
      _
    $region30: #{_lambda_.6} parent=5 // pred_check_branch
      %155 = sbr.rel (%p152) target = $region32
    $region31: #{_lambda_.6} parent=5 // pred_region
      %s156 = ssub.s32 %s9, 1
      %p157 = scmp.lt.s32.totalorder %s18, 1
      %s158 = scalar_select %p157, %s18, 1
      %s159 = smul.addr %s158, 57
      %s160 = smul.addr %s159, 4
      %s161 = scalar_lea.vmem %s0, %s160
      %p162 = pneg %p47
      %p163 = pneg %p44
      %p164 = pneg %p68
      %p165 = pneg %p65
      %p166 = pneg %p89
      %p167 = pneg %p86
      %p168 = pneg %p117
      %p169 = pneg %p114
      %s170 = smul.u32 2, %s19
      %p171 = scmp.lt.s32.totalorder %s18, 1
      %s172 = scalar_select %p171, %s18, 1
      %p173 = scmp.lt.s32.totalorder %s170, 7
      %s174 = scalar_select %p173, %s170, 7
      %s175 = smul.addr %s172, 8
      %s176 = sadd.s32 %s174, %s175
      %s177 = smul.addr %s176, 4
      %s178 = scalar_lea.vmem %s3, %s177
      %p179 = scmp.lt.s32.totalorder %s18, 1
      %s180 = scalar_select %p179, %s18, 1
      %s181 = smul.addr %s180, 57
      %s182 = smul.addr %s181, 4
      %s183 = scalar_lea.vmem %s0, %s182
      %s184 = smul.u32 2, %s19
      %p185 = scmp.lt.s32.totalorder %s18, 1
      %s186 = scalar_select %p185, %s18, 1
      %p187 = scmp.lt.s32.totalorder %s184, 7
      %s188 = scalar_select %p187, %s184, 7
      %s189 = smul.addr %s186, 8
      %s190 = sadd.s32 %s188, %s189
      %s191 = smul.addr %s190, 4
      %s192 = scalar_lea.vmem %s3, %s191
      %s193 = smul.u32 2, %s19
      %s195 = smul.u32 %s19, 96
      %s196 = sshra.s32 %s195, 3
      %s197 = sand.u32 %s195, 7
      %s198 = smul.addr %s196, 4
      %s199 = scalar_lea.vmem %s183, %s198
      %v200 = vld [vmem:[%s199] sm:$0xf]
      %v201 = vld [vmem:[%s199 + $0x4] sm:$0xf]
      %v202 = vld [vmem:[%s199 + $0x8] sm:$0xf]
      %v203 = vld [vmem:[%s199 + $0xc] sm:$0xf]
      %v204 = vld [vmem:[%s199 + $0x10] sm:$0xf]
      %v205 = vld [vmem:[%s199 + $0x14] sm:$0xf]
      %v206 = vld [vmem:[%s199 + $0x18] sm:$0xf]
      %v207 = vld [vmem:[%s199 + $0x1c] sm:$0xf]
      %v208 = vld [vmem:[%s199 + $0x20] sm:$0xf]
      %v209 = vld [vmem:[%s199 + $0x24] sm:$0xf]
      %v210 = vld [vmem:[%s199 + $0x28] sm:$0xf]
      %v211 = vld [vmem:[%s199 + $0x2c] sm:$0xf]
      %v212 = vld [vmem:[%s199 + $0x30] sm:$0xf]
      %v213 = vld [vmem:[%s199 + $0x34] sm:$0xf]
      %v214 = vld [vmem:[%s199 + $0x38] sm:$0xf]
      %v215 = vld [vmem:[%s199 + $0x3c] sm:$0xf]
      %v216 = vld [vmem:[%s199 + $0x40] sm:$0xf]
      %v217 = vld [vmem:[%s199 + $0x44] sm:$0xf]
      %v218 = vld [vmem:[%s199 + $0x48] sm:$0xf]
      %v219 = vunpack.c.l.bf16 %v200
      %v220 = vunpack.c.l.bf16 %v201
      %v221 = vunpack.c.l.bf16 %v202
      %v222 = vunpack.c.l.bf16 %v203
      %v223 = vunpack.c.l.bf16 %v204
      %v224 = vunpack.c.l.bf16 %v205
      %v225 = vunpack.c.l.bf16 %v206
      %v226 = vunpack.c.l.bf16 %v207
      %v227 = vunpack.c.l.bf16 %v208
      %v228 = vunpack.c.l.bf16 %v209
      %v229 = vunpack.c.l.bf16 %v210
      %v230 = vunpack.c.l.bf16 %v211
      %v231 = vunpack.c.l.bf16 %v212
      %v232 = vunpack.c.l.bf16 %v213
      %v233 = vunpack.c.l.bf16 %v214
      %v234 = vunpack.c.l.bf16 %v215
      %v235 = vunpack.c.l.bf16 %v216
      %v236 = vunpack.c.l.bf16 %v217
      %v237 = vunpack.c.l.bf16 %v218
      %vm238 = vcmask 31744
      %239 = vst.msk [vmem:[#allocation2] sm:$0xff] %vm238, %v219
      %240 = vst.msk [vmem:[#allocation2 + $0x8] sm:$0xff] %vm238, %v220
      %241 = vst.msk [vmem:[#allocation2 + $0x10] sm:$0xff] %vm238, %v221
      %242 = vst.msk [vmem:[#allocation2 + $0x18] sm:$0xff] %vm238, %v222
      %243 = vst.msk [vmem:[#allocation2 + $0x20] sm:$0xff] %vm238, %v223
      %244 = vst.msk [vmem:[#allocation2 + $0x28] sm:$0xff] %vm238, %v224
      %245 = vst.msk [vmem:[#allocation2 + $0x30] sm:$0xff] %vm238, %v225
      %246 = vst.msk [vmem:[#allocation2 + $0x38] sm:$0xff] %vm238, %v226
      %247 = vst.msk [vmem:[#allocation2 + $0x40] sm:$0xff] %vm238, %v227
      %248 = vst.msk [vmem:[#allocation2 + $0x48] sm:$0xff] %vm238, %v228
      %249 = vst.msk [vmem:[#allocation2 + $0x50] sm:$0xff] %vm238, %v229
      %250 = vst.msk [vmem:[#allocation2 + $0x58] sm:$0xff] %vm238, %v230
      %251 = vst.msk [vmem:[#allocation2 + $0x60] sm:$0xff] %vm238, %v231
      %252 = vst.msk [vmem:[#allocation2 + $0x68] sm:$0xff] %vm238, %v232
      %253 = vst.msk [vmem:[#allocation2 + $0x70] sm:$0xff] %vm238, %v233
      %254 = vst.msk [vmem:[#allocation2 + $0x78] sm:$0xff] %vm238, %v234
      %255 = vst.msk [vmem:[#allocation2 + $0x80] sm:$0xff] %vm238, %v235
      %256 = vst.msk [vmem:[#allocation2 + $0x88] sm:$0xff] %vm238, %v236
      %257 = vst.msk [vmem:[#allocation2 + $0x90] sm:$0xff] %vm238, %v237
      %v258 = vld [vmem:[#allocation2] sm:$0xff]
      %v259 = vld [vmem:[#allocation2 + $0x8] sm:$0xff]
      %v260 = vld [vmem:[#allocation2 + $0x10] sm:$0xff]
      %v261 = vld [vmem:[#allocation2 + $0x18] sm:$0xff]
      %v262 = vld [vmem:[#allocation2 + $0x20] sm:$0xff]
      %v263 = vld [vmem:[#allocation2 + $0x28] sm:$0xff]
      %v264 = vld [vmem:[#allocation2 + $0x30] sm:$0xff]
      %v265 = vld [vmem:[#allocation2 + $0x38] sm:$0xff]
      %v266 = vld [vmem:[#allocation2 + $0x40] sm:$0xff]
      %v267 = vld [vmem:[#allocation2 + $0x48] sm:$0xff]
      %v268 = vld [vmem:[#allocation2 + $0x50] sm:$0xff]
      %v269 = vld [vmem:[#allocation2 + $0x58] sm:$0xff]
      %v270 = vpack.c.bf16 %v259, %v258
      %v271 = vpack.c.bf16 %v261, %v260
      %v272 = vpack.c.bf16 %v263, %v262
      %v273 = vpack.c.bf16 %v265, %v264
      %v274 = vpack.c.bf16 %v267, %v266
      %v275 = vpack.c.bf16 %v269, %v268
      %v276 = vld [vmem:[%s1] sm:$0x3]
      %v277 = vld [vmem:[#allocation2 + $0x1] sm:$0xff]
      %v278 = vld [vmem:[#allocation2 + $0x9] sm:$0xff]
      %v279 = vld [vmem:[#allocation2 + $0x11] sm:$0xff]
      %v280 = vld [vmem:[#allocation2 + $0x19] sm:$0xff]
      %v281 = vld [vmem:[#allocation2 + $0x21] sm:$0xff]
      %v282 = vld [vmem:[#allocation2 + $0x29] sm:$0xff]
      %v283 = vld [vmem:[#allocation2 + $0x31] sm:$0xff]
      %v284 = vld [vmem:[#allocation2 + $0x39] sm:$0xff]
      %v285 = vld [vmem:[#allocation2 + $0x41] sm:$0xff]
      %v286 = vld [vmem:[#allocation2 + $0x49] sm:$0xff]
      %v287 = vld [vmem:[#allocation2 + $0x51] sm:$0xff]
      %v288 = vld [vmem:[#allocation2 + $0x59] sm:$0xff]
      %v289 = vpack.c.bf16 %v278, %v277
      %v290 = vpack.c.bf16 %v280, %v279
      %v291 = vpack.c.bf16 %v282, %v281
      %v292 = vpack.c.bf16 %v284, %v283
      %v293 = vpack.c.bf16 %v286, %v285
      %v294 = vpack.c.bf16 %v288, %v287
      %s295 = scalar_lea.vmem %s1, 2
      %v296 = vld [vmem:[%s295] sm:$0x3]
      %v298 = vsel %vm238, %v289, 0
      %v301 = vsel %vm238, %v290, 0
      %v304 = vsel %vm238, %v291, 0
      %v307 = vsel %vm238, %v292, 0
      %v310 = vsel %vm238, %v293, 0
      %v313 = vsel %vm238, %v294, 0
      %vm315 = vcmask 1041408
      %v317 = vsel %vm315, %v296, 0
      %319 = vmatpush.bf16.msra.mxu0 0
      %320 = vmatpush.bf16.msra.mxu0 0
      %321 = vmatpush.bf16.msra.mxu0 0
      %322 = vmatpush.bf16.msra.mxu0 0
      %323 = vmatpush.bf16.msra.mxu0 0
      %324 = vmatpush.bf16.msra.mxu0 0
      %325 = vmatpush.bf16.msra.mxu0 0
      %326 = vmatpush.bf16.msra.mxu0 %v317
      %327 = vmatmul.bf16.gmra.mxu0 %v298
      %v328 = vpop.f32.mrf.mxu0
      %v329 = vadd.f32 0.0, %v328
      %v330 = vpop.f32.mrf.mxu0
      %v331 = vadd.f32 0.0, %v330
      %332 = vmatmul.bf16.gmra.mxu0 %v301
      %v333 = vpop.f32.mrf.mxu0
      %v334 = vadd.f32 0.0, %v333
      %v335 = vpop.f32.mrf.mxu0
      %v336 = vadd.f32 0.0, %v335
      %337 = vmatmul.bf16.gmra.mxu0 %v304
      %v338 = vpop.f32.mrf.mxu0
      %v339 = vadd.f32 0.0, %v338
      %v340 = vpop.f32.mrf.mxu0
      %v341 = vadd.f32 0.0, %v340
      %342 = vmatmul.bf16.gmra.mxu0 %v307
      %v343 = vpop.f32.mrf.mxu0
      %v344 = vadd.f32 0.0, %v343
      %v345 = vpop.f32.mrf.mxu0
      %v346 = vadd.f32 0.0, %v345
      %347 = vmatmul.bf16.gmra.mxu0 %v310
      %v348 = vpop.f32.mrf.mxu0
      %v349 = vadd.f32 0.0, %v348
      %v350 = vpop.f32.mrf.mxu0
      %v351 = vadd.f32 0.0, %v350
      %352 = vmatmul.bf16.gmra.mxu0 %v313
      %v353 = vpop.f32.mrf.mxu0
      %v354 = vadd.f32 0.0, %v353
      %v355 = vpop.f32.mrf.mxu0
      %v356 = vadd.f32 0.0, %v355
      %357 = vdwg.mxu0
      %v359 = vsel %vm238, %v270, 0
      %v362 = vsel %vm238, %v271, 0
      %v365 = vsel %vm238, %v272, 0
      %v368 = vsel %vm238, %v273, 0
      %v371 = vsel %vm238, %v274, 0
      %v374 = vsel %vm238, %v275, 0
      %v377 = vsel %vm315, %v276, 0
      %379 = vmatpush.bf16.msra.mxu0 0
      %380 = vmatpush.bf16.msra.mxu0 0
      %381 = vmatpush.bf16.msra.mxu0 0
      %382 = vmatpush.bf16.msra.mxu0 0
      %383 = vmatpush.bf16.msra.mxu0 0
      %384 = vmatpush.bf16.msra.mxu0 0
      %385 = vmatpush.bf16.msra.mxu0 0
      %386 = vmatpush.bf16.msra.mxu0 %v377
      %387 = vmatmul.bf16.gmra.mxu0 %v359
      %v388 = vpop.f32.mrf.mxu0
      %v389 = vadd.f32 %v329, %v388
      %v390 = vpop.f32.mrf.mxu0
      %v391 = vadd.f32 %v331, %v390
      %392 = vmatmul.bf16.gmra.mxu0 %v362
      %v393 = vpop.f32.mrf.mxu0
      %v394 = vadd.f32 %v334, %v393
      %v395 = vpop.f32.mrf.mxu0
      %v396 = vadd.f32 %v336, %v395
      %397 = vmatmul.bf16.gmra.mxu0 %v365
      %v398 = vpop.f32.mrf.mxu0
      %v399 = vadd.f32 %v339, %v398
      %v400 = vpop.f32.mrf.mxu0
      %v401 = vadd.f32 %v341, %v400
      %402 = vmatmul.bf16.gmra.mxu0 %v368
      %v403 = vpop.f32.mrf.mxu0
      %v404 = vadd.f32 %v344, %v403
      %v405 = vpop.f32.mrf.mxu0
      %v406 = vadd.f32 %v346, %v405
      %407 = vmatmul.bf16.gmra.mxu0 %v371
      %v408 = vpop.f32.mrf.mxu0
      %v409 = vadd.f32 %v349, %v408
      %v410 = vpop.f32.mrf.mxu0
      %v411 = vadd.f32 %v351, %v410
      %412 = vmatmul.bf16.gmra.mxu0 %v374
      %v413 = vpop.f32.mrf.mxu0
      %v414 = vadd.f32 %v354, %v413
      %v415 = vpop.f32.mrf.mxu0
      %v416 = vadd.f32 %v356, %v415
      %417 = vdwg.mxu0
      %v418 = vld [vmem:[#allocation2 + $0x2] sm:$0xff]
      %v419 = vld [vmem:[#allocation2 + $0xa] sm:$0xff]
      %v420 = vld [vmem:[#allocation2 + $0x12] sm:$0xff]
      %v421 = vld [vmem:[#allocation2 + $0x1a] sm:$0xff]
      %v422 = vld [vmem:[#allocation2 + $0x22] sm:$0xff]
      %v423 = vld [vmem:[#allocation2 + $0x2a] sm:$0xff]
      %v424 = vld [vmem:[#allocation2 + $0x32] sm:$0xff]
      %v425 = vld [vmem:[#allocation2 + $0x3a] sm:$0xff]
      %v426 = vld [vmem:[#allocation2 + $0x42] sm:$0xff]
      %v427 = vld [vmem:[#allocation2 + $0x4a] sm:$0xff]
      %v428 = vld [vmem:[#allocation2 + $0x52] sm:$0xff]
      %v429 = vld [vmem:[#allocation2 + $0x5a] sm:$0xff]
      %v430 = vpack.c.bf16 %v419, %v418
      %v431 = vpack.c.bf16 %v421, %v420
      %v432 = vpack.c.bf16 %v423, %v422
      %v433 = vpack.c.bf16 %v425, %v424
      %v434 = vpack.c.bf16 %v427, %v426
      %v435 = vpack.c.bf16 %v429, %v428
      %s436 = scalar_lea.vmem %s1, 4
      %v437 = vld [vmem:[%s436] sm:$0x3]
      %v439 = vsel %vm238, %v430, 0
      %v442 = vsel %vm238, %v431, 0
      %v445 = vsel %vm238, %v432, 0
      %v448 = vsel %vm238, %v433, 0
      %v451 = vsel %vm238, %v434, 0
      %v454 = vsel %vm238, %v435, 0
      %v457 = vsel %vm315, %v437, 0
      %459 = vmatpush.bf16.msra.mxu0 0
      %460 = vmatpush.bf16.msra.mxu0 0
      %461 = vmatpush.bf16.msra.mxu0 0
      %462 = vmatpush.bf16.msra.mxu0 0
      %463 = vmatpush.bf16.msra.mxu0 0
      %464 = vmatpush.bf16.msra.mxu0 0
      %465 = vmatpush.bf16.msra.mxu0 0
      %466 = vmatpush.bf16.msra.mxu0 %v457
      %467 = vmatmul.bf16.gmra.mxu0 %v439
      %v468 = vpop.f32.mrf.mxu0
      %v469 = vadd.f32 0.0, %v468
      %v470 = vpop.f32.mrf.mxu0
      %v471 = vadd.f32 0.0, %v470
      %472 = vmatmul.bf16.gmra.mxu0 %v442
      %v473 = vpop.f32.mrf.mxu0
      %v474 = vadd.f32 0.0, %v473
      %v475 = vpop.f32.mrf.mxu0
      %v476 = vadd.f32 0.0, %v475
      %477 = vmatmul.bf16.gmra.mxu0 %v445
      %v478 = vpop.f32.mrf.mxu0
      %v479 = vadd.f32 0.0, %v478
      %v480 = vpop.f32.mrf.mxu0
      %v481 = vadd.f32 0.0, %v480
      %482 = vmatmul.bf16.gmra.mxu0 %v448
      %v483 = vpop.f32.mrf.mxu0
      %v484 = vadd.f32 0.0, %v483
      %v485 = vpop.f32.mrf.mxu0
      %v486 = vadd.f32 0.0, %v485
      %487 = vmatmul.bf16.gmra.mxu0 %v451
      %v488 = vpop.f32.mrf.mxu0
      %v489 = vadd.f32 0.0, %v488
      %v490 = vpop.f32.mrf.mxu0
      %v491 = vadd.f32 0.0, %v490
      %492 = vmatmul.bf16.gmra.mxu0 %v454
      %v493 = vpop.f32.mrf.mxu0
      %v494 = vadd.f32 0.0, %v493
      %v495 = vpop.f32.mrf.mxu0
      %v496 = vadd.f32 0.0, %v495
      %497 = vdwg.mxu0
      %v498 = vadd.f32 %v389, %v469
      %v499 = vadd.f32 %v391, %v471
      %v500 = vadd.f32 %v394, %v474
      %v501 = vadd.f32 %v396, %v476
      %v502 = vadd.f32 %v399, %v479
      %v503 = vadd.f32 %v401, %v481
      %v504 = vadd.f32 %v404, %v484
      %v505 = vadd.f32 %v406, %v486
      %v506 = vadd.f32 %v409, %v489
      %v507 = vadd.f32 %v411, %v491
      %v508 = vadd.f32 %v414, %v494
      %v509 = vadd.f32 %v416, %v496
      %v510 = vld [vmem:[#allocation2 + $0x18] sm:$0xff]
      %v511 = vld [vmem:[#allocation2 + $0x20] sm:$0xff]
      %v512 = vld [vmem:[#allocation2 + $0x28] sm:$0xff]
      %v513 = vld [vmem:[#allocation2 + $0x30] sm:$0xff]
      %v514 = vld [vmem:[#allocation2 + $0x38] sm:$0xff]
      %v515 = vld [vmem:[#allocation2 + $0x40] sm:$0xff]
      %v516 = vld [vmem:[#allocation2 + $0x48] sm:$0xff]
      %v517 = vld [vmem:[#allocation2 + $0x50] sm:$0xff]
      %v518 = vld [vmem:[#allocation2 + $0x58] sm:$0xff]
      %v519 = vld [vmem:[#allocation2 + $0x60] sm:$0xff]
      %v520 = vld [vmem:[#allocation2 + $0x68] sm:$0xff]
      %v521 = vld [vmem:[#allocation2 + $0x70] sm:$0xff]
      %v522 = vpack.c.bf16 %v511, %v510
      %v523 = vpack.c.bf16 %v513, %v512
      %v524 = vpack.c.bf16 %v515, %v514
      %v525 = vpack.c.bf16 %v517, %v516
      %v526 = vpack.c.bf16 %v519, %v518
      %v527 = vpack.c.bf16 %v521, %v520
      %s528 = scalar_lea.vmem %s1, 6
      %v529 = vld [vmem:[%s528] sm:$0x3]
      %v531 = vsel %vm238, %v522, 0
      %v534 = vsel %vm238, %v523, 0
      %v537 = vsel %vm238, %v524, 0
      %v540 = vsel %vm238, %v525, 0
      %v543 = vsel %vm238, %v526, 0
      %v546 = vsel %vm238, %v527, 0
      %v549 = vsel %vm315, %v529, 0
      %551 = vmatpush.bf16.msra.mxu0 0
      %552 = vmatpush.bf16.msra.mxu0 0
      %553 = vmatpush.bf16.msra.mxu0 0
      %554 = vmatpush.bf16.msra.mxu0 0
      %555 = vmatpush.bf16.msra.mxu0 0
      %556 = vmatpush.bf16.msra.mxu0 0
      %557 = vmatpush.bf16.msra.mxu0 0
      %558 = vmatpush.bf16.msra.mxu0 %v549
      %559 = vmatmul.bf16.gmra.mxu0 %v531
      %v560 = vpop.f32.mrf.mxu0
      %v561 = vadd.f32 0.0, %v560
      %v562 = vpop.f32.mrf.mxu0
      %v563 = vadd.f32 0.0, %v562
      %564 = vmatmul.bf16.gmra.mxu0 %v534
      %v565 = vpop.f32.mrf.mxu0
      %v566 = vadd.f32 0.0, %v565
      %v567 = vpop.f32.mrf.mxu0
      %v568 = vadd.f32 0.0, %v567
      %569 = vmatmul.bf16.gmra.mxu0 %v537
      %v570 = vpop.f32.mrf.mxu0
      %v571 = vadd.f32 0.0, %v570
      %v572 = vpop.f32.mrf.mxu0
      %v573 = vadd.f32 0.0, %v572
      %574 = vmatmul.bf16.gmra.mxu0 %v540
      %v575 = vpop.f32.mrf.mxu0
      %v576 = vadd.f32 0.0, %v575
      %v577 = vpop.f32.mrf.mxu0
      %v578 = vadd.f32 0.0, %v577
      %579 = vmatmul.bf16.gmra.mxu0 %v543
      %v580 = vpop.f32.mrf.mxu0
      %v581 = vadd.f32 0.0, %v580
      %v582 = vpop.f32.mrf.mxu0
      %v583 = vadd.f32 0.0, %v582
      %584 = vmatmul.bf16.gmra.mxu0 %v546
      %v585 = vpop.f32.mrf.mxu0
      %v586 = vadd.f32 0.0, %v585
      %v587 = vpop.f32.mrf.mxu0
      %v588 = vadd.f32 0.0, %v587
      %589 = vdwg.mxu0
      %v590 = vadd.f32 %v498, %v561
      %v591 = vadd.f32 %v499, %v563
      %v592 = vadd.f32 %v500, %v566
      %v593 = vadd.f32 %v501, %v568
      %v594 = vadd.f32 %v502, %v571
      %v595 = vadd.f32 %v503, %v573
      %v596 = vadd.f32 %v504, %v576
      %v597 = vadd.f32 %v505, %v578
      %v598 = vadd.f32 %v506, %v581
      %v599 = vadd.f32 %v507, %v583
      %v600 = vadd.f32 %v508, %v586
      %v601 = vadd.f32 %v509, %v588
      %v602 = vld [vmem:[#allocation2 + $0x19] sm:$0xff]
      %v603 = vld [vmem:[#allocation2 + $0x21] sm:$0xff]
      %v604 = vld [vmem:[#allocation2 + $0x29] sm:$0xff]
      %v605 = vld [vmem:[#allocation2 + $0x31] sm:$0xff]
      %v606 = vld [vmem:[#allocation2 + $0x39] sm:$0xff]
      %v607 = vld [vmem:[#allocation2 + $0x41] sm:$0xff]
      %v608 = vld [vmem:[#allocation2 + $0x49] sm:$0xff]
      %v609 = vld [vmem:[#allocation2 + $0x51] sm:$0xff]
      %v610 = vld [vmem:[#allocation2 + $0x59] sm:$0xff]
      %v611 = vld [vmem:[#allocation2 + $0x61] sm:$0xff]
      %v612 = vld [vmem:[#allocation2 + $0x69] sm:$0xff]
      %v613 = vld [vmem:[#allocation2 + $0x71] sm:$0xff]
      %v614 = vpack.c.bf16 %v603, %v602
      %v615 = vpack.c.bf16 %v605, %v604
      %v616 = vpack.c.bf16 %v607, %v606
      %v617 = vpack.c.bf16 %v609, %v608
      %v618 = vpack.c.bf16 %v611, %v610
      %v619 = vpack.c.bf16 %v613, %v612
      %s620 = scalar_lea.vmem %s1, 8
      %v621 = vld [vmem:[%s620] sm:$0x3]
      %v623 = vsel %vm238, %v614, 0
      %v626 = vsel %vm238, %v615, 0
      %v629 = vsel %vm238, %v616, 0
      %v632 = vsel %vm238, %v617, 0
      %v635 = vsel %vm238, %v618, 0
      %v638 = vsel %vm238, %v619, 0
      %v641 = vsel %vm315, %v621, 0
      %643 = vmatpush.bf16.msra.mxu0 0
      %644 = vmatpush.bf16.msra.mxu0 0
      %645 = vmatpush.bf16.msra.mxu0 0
      %646 = vmatpush.bf16.msra.mxu0 0
      %647 = vmatpush.bf16.msra.mxu0 0
      %648 = vmatpush.bf16.msra.mxu0 0
      %649 = vmatpush.bf16.msra.mxu0 0
      %650 = vmatpush.bf16.msra.mxu0 %v641
      %651 = vmatmul.bf16.gmra.mxu0 %v623
      %v652 = vpop.f32.mrf.mxu0
      %v653 = vadd.f32 0.0, %v652
      %v654 = vpop.f32.mrf.mxu0
      %v655 = vadd.f32 0.0, %v654
      %656 = vmatmul.bf16.gmra.mxu0 %v626
      %v657 = vpop.f32.mrf.mxu0
      %v658 = vadd.f32 0.0, %v657
      %v659 = vpop.f32.mrf.mxu0
      %v660 = vadd.f32 0.0, %v659
      %661 = vmatmul.bf16.gmra.mxu0 %v629
      %v662 = vpop.f32.mrf.mxu0
      %v663 = vadd.f32 0.0, %v662
      %v664 = vpop.f32.mrf.mxu0
      %v665 = vadd.f32 0.0, %v664
      %666 = vmatmul.bf16.gmra.mxu0 %v632
      %v667 = vpop.f32.mrf.mxu0
      %v668 = vadd.f32 0.0, %v667
      %v669 = vpop.f32.mrf.mxu0
      %v670 = vadd.f32 0.0, %v669
      %671 = vmatmul.bf16.gmra.mxu0 %v635
      %v672 = vpop.f32.mrf.mxu0
      %v673 = vadd.f32 0.0, %v672
      %v674 = vpop.f32.mrf.mxu0
      %v675 = vadd.f32 0.0, %v674
      %676 = vmatmul.bf16.gmra.mxu0 %v638
      %v677 = vpop.f32.mrf.mxu0
      %v678 = vadd.f32 0.0, %v677
      %v679 = vpop.f32.mrf.mxu0
      %v680 = vadd.f32 0.0, %v679
      %681 = vdwg.mxu0
      %v682 = vadd.f32 %v590, %v653
      %v683 = vadd.f32 %v591, %v655
      %v684 = vadd.f32 %v592, %v658
      %v685 = vadd.f32 %v593, %v660
      %v686 = vadd.f32 %v594, %v663
      %v687 = vadd.f32 %v595, %v665
      %v688 = vadd.f32 %v596, %v668
      %v689 = vadd.f32 %v597, %v670
      %v690 = vadd.f32 %v598, %v673
      %v691 = vadd.f32 %v599, %v675
      %v692 = vadd.f32 %v600, %v678
      %v693 = vadd.f32 %v601, %v680
      %v694 = vld [vmem:[#allocation2 + $0x1a] sm:$0xff]
      %v695 = vld [vmem:[#allocation2 + $0x22] sm:$0xff]
      %v696 = vld [vmem:[#allocation2 + $0x2a] sm:$0xff]
      %v697 = vld [vmem:[#allocation2 + $0x32] sm:$0xff]
      %v698 = vld [vmem:[#allocation2 + $0x3a] sm:$0xff]
      %v699 = vld [vmem:[#allocation2 + $0x42] sm:$0xff]
      %v700 = vld [vmem:[#allocation2 + $0x4a] sm:$0xff]
      %v701 = vld [vmem:[#allocation2 + $0x52] sm:$0xff]
      %v702 = vld [vmem:[#allocation2 + $0x5a] sm:$0xff]
      %v703 = vld [vmem:[#allocation2 + $0x62] sm:$0xff]
      %v704 = vld [vmem:[#allocation2 + $0x6a] sm:$0xff]
      %v705 = vld [vmem:[#allocation2 + $0x72] sm:$0xff]
      %v706 = vpack.c.bf16 %v695, %v694
      %v707 = vpack.c.bf16 %v697, %v696
      %v708 = vpack.c.bf16 %v699, %v698
      %v709 = vpack.c.bf16 %v701, %v700
      %v710 = vpack.c.bf16 %v703, %v702
      %v711 = vpack.c.bf16 %v705, %v704
      %s712 = scalar_lea.vmem %s1, 10
      %v713 = vld [vmem:[%s712] sm:$0x3]
      %v715 = vsel %vm238, %v706, 0
      %v718 = vsel %vm238, %v707, 0
      %v721 = vsel %vm238, %v708, 0
      %v724 = vsel %vm238, %v709, 0
      %v727 = vsel %vm238, %v710, 0
      %v730 = vsel %vm238, %v711, 0
      %v733 = vsel %vm315, %v713, 0
      %735 = vmatpush.bf16.msra.mxu0 0
      %736 = vmatpush.bf16.msra.mxu0 0
      %737 = vmatpush.bf16.msra.mxu0 0
      %738 = vmatpush.bf16.msra.mxu0 0
      %739 = vmatpush.bf16.msra.mxu0 0
      %740 = vmatpush.bf16.msra.mxu0 0
      %741 = vmatpush.bf16.msra.mxu0 0
      %742 = vmatpush.bf16.msra.mxu0 %v733
      %743 = vmatmul.bf16.gmra.mxu0 %v715
      %v744 = vpop.f32.mrf.mxu0
      %v745 = vadd.f32 0.0, %v744
      %v746 = vpop.f32.mrf.mxu0
      %v747 = vadd.f32 0.0, %v746
      %748 = vmatmul.bf16.gmra.mxu0 %v718
      %v749 = vpop.f32.mrf.mxu0
      %v750 = vadd.f32 0.0, %v749
      %v751 = vpop.f32.mrf.mxu0
      %v752 = vadd.f32 0.0, %v751
      %753 = vmatmul.bf16.gmra.mxu0 %v721
      %v754 = vpop.f32.mrf.mxu0
      %v755 = vadd.f32 0.0, %v754
      %v756 = vpop.f32.mrf.mxu0
      %v757 = vadd.f32 0.0, %v756
      %758 = vmatmul.bf16.gmra.mxu0 %v724
      %v759 = vpop.f32.mrf.mxu0
      %v760 = vadd.f32 0.0, %v759
      %v761 = vpop.f32.mrf.mxu0
      %v762 = vadd.f32 0.0, %v761
      %763 = vmatmul.bf16.gmra.mxu0 %v727
      %v764 = vpop.f32.mrf.mxu0
      %v765 = vadd.f32 0.0, %v764
      %v766 = vpop.f32.mrf.mxu0
      %v767 = vadd.f32 0.0, %v766
      %768 = vmatmul.bf16.gmra.mxu0 %v730
      %v769 = vpop.f32.mrf.mxu0
      %v770 = vadd.f32 0.0, %v769
      %v771 = vpop.f32.mrf.mxu0
      %v772 = vadd.f32 0.0, %v771
      %773 = vdwg.mxu0
      %v774 = vadd.f32 %v682, %v745
      %v775 = vadd.f32 %v683, %v747
      %v776 = vadd.f32 %v684, %v750
      %v777 = vadd.f32 %v685, %v752
      %v778 = vadd.f32 %v686, %v755
      %v779 = vadd.f32 %v687, %v757
      %v780 = vadd.f32 %v688, %v760
      %v781 = vadd.f32 %v689, %v762
      %v782 = vadd.f32 %v690, %v765
      %v783 = vadd.f32 %v691, %v767
      %v784 = vadd.f32 %v692, %v770
      %v785 = vadd.f32 %v693, %v772
      %v786 = vld [vmem:[#allocation2 + $0x30] sm:$0xff]
      %v787 = vld [vmem:[#allocation2 + $0x38] sm:$0xff]
      %v788 = vld [vmem:[#allocation2 + $0x40] sm:$0xff]
      %v789 = vld [vmem:[#allocation2 + $0x48] sm:$0xff]
      %v790 = vld [vmem:[#allocation2 + $0x50] sm:$0xff]
      %v791 = vld [vmem:[#allocation2 + $0x58] sm:$0xff]
      %v792 = vld [vmem:[#allocation2 + $0x60] sm:$0xff]
      %v793 = vld [vmem:[#allocation2 + $0x68] sm:$0xff]
      %v794 = vld [vmem:[#allocation2 + $0x70] sm:$0xff]
      %v795 = vld [vmem:[#allocation2 + $0x78] sm:$0xff]
      %v796 = vld [vmem:[#allocation2 + $0x80] sm:$0xff]
      %v797 = vld [vmem:[#allocation2 + $0x88] sm:$0xff]
      %v798 = vpack.c.bf16 %v787, %v786
      %v799 = vpack.c.bf16 %v789, %v788
      %v800 = vpack.c.bf16 %v791, %v790
      %v801 = vpack.c.bf16 %v793, %v792
      %v802 = vpack.c.bf16 %v795, %v794
      %v803 = vpack.c.bf16 %v797, %v796
      %s804 = scalar_lea.vmem %s1, 12
      %v805 = vld [vmem:[%s804] sm:$0x3]
      %v807 = vsel %vm238, %v798, 0
      %v810 = vsel %vm238, %v799, 0
      %v813 = vsel %vm238, %v800, 0
      %v816 = vsel %vm238, %v801, 0
      %v819 = vsel %vm238, %v802, 0
      %v822 = vsel %vm238, %v803, 0
      %v825 = vsel %vm315, %v805, 0
      %827 = vmatpush.bf16.msra.mxu0 0
      %828 = vmatpush.bf16.msra.mxu0 0
      %829 = vmatpush.bf16.msra.mxu0 0
      %830 = vmatpush.bf16.msra.mxu0 0
      %831 = vmatpush.bf16.msra.mxu0 0
      %832 = vmatpush.bf16.msra.mxu0 0
      %833 = vmatpush.bf16.msra.mxu0 0
      %834 = vmatpush.bf16.msra.mxu0 %v825
      %835 = vmatmul.bf16.gmra.mxu0 %v807
      %v836 = vpop.f32.mrf.mxu0
      %v837 = vadd.f32 0.0, %v836
      %v838 = vpop.f32.mrf.mxu0
      %v839 = vadd.f32 0.0, %v838
      %840 = vmatmul.bf16.gmra.mxu0 %v810
      %v841 = vpop.f32.mrf.mxu0
      %v842 = vadd.f32 0.0, %v841
      %v843 = vpop.f32.mrf.mxu0
      %v844 = vadd.f32 0.0, %v843
      %845 = vmatmul.bf16.gmra.mxu0 %v813
      %v846 = vpop.f32.mrf.mxu0
      %v847 = vadd.f32 0.0, %v846
      %v848 = vpop.f32.mrf.mxu0
      %v849 = vadd.f32 0.0, %v848
      %850 = vmatmul.bf16.gmra.mxu0 %v816
      %v851 = vpop.f32.mrf.mxu0
      %v852 = vadd.f32 0.0, %v851
      %v853 = vpop.f32.mrf.mxu0
      %v854 = vadd.f32 0.0, %v853
      %855 = vmatmul.bf16.gmra.mxu0 %v819
      %v856 = vpop.f32.mrf.mxu0
      %v857 = vadd.f32 0.0, %v856
      %v858 = vpop.f32.mrf.mxu0
      %v859 = vadd.f32 0.0, %v858
      %860 = vmatmul.bf16.gmra.mxu0 %v822
      %v861 = vpop.f32.mrf.mxu0
      %v862 = vadd.f32 0.0, %v861
      %v863 = vpop.f32.mrf.mxu0
      %v864 = vadd.f32 0.0, %v863
      %865 = vdwg.mxu0
      %v866 = vadd.f32 %v774, %v837
      %v867 = vadd.f32 %v775, %v839
      %v868 = vadd.f32 %v776, %v842
      %v869 = vadd.f32 %v777, %v844
      %v870 = vadd.f32 %v778, %v847
      %v871 = vadd.f32 %v779, %v849
      %v872 = vadd.f32 %v780, %v852
      %v873 = vadd.f32 %v781, %v854
      %v874 = vadd.f32 %v782, %v857
      %v875 = vadd.f32 %v783, %v859
      %v876 = vadd.f32 %v784, %v862
      %v877 = vadd.f32 %v785, %v864
      %v878 = vld [vmem:[#allocation2 + $0x31] sm:$0xff]
      %v879 = vld [vmem:[#allocation2 + $0x39] sm:$0xff]
      %v880 = vld [vmem:[#allocation2 + $0x41] sm:$0xff]
      %v881 = vld [vmem:[#allocation2 + $0x49] sm:$0xff]
      %v882 = vld [vmem:[#allocation2 + $0x51] sm:$0xff]
      %v883 = vld [vmem:[#allocation2 + $0x59] sm:$0xff]
      %v884 = vld [vmem:[#allocation2 + $0x61] sm:$0xff]
      %v885 = vld [vmem:[#allocation2 + $0x69] sm:$0xff]
      %v886 = vld [vmem:[#allocation2 + $0x71] sm:$0xff]
      %v887 = vld [vmem:[#allocation2 + $0x79] sm:$0xff]
      %v888 = vld [vmem:[#allocation2 + $0x81] sm:$0xff]
      %v889 = vld [vmem:[#allocation2 + $0x89] sm:$0xff]
      %v890 = vpack.c.bf16 %v879, %v878
      %v891 = vpack.c.bf16 %v881, %v880
      %v892 = vpack.c.bf16 %v883, %v882
      %v893 = vpack.c.bf16 %v885, %v884
      %v894 = vpack.c.bf16 %v887, %v886
      %v895 = vpack.c.bf16 %v889, %v888
      %s896 = scalar_lea.vmem %s1, 14
      %v897 = vld [vmem:[%s896] sm:$0x3]
      %v899 = vsel %vm238, %v890, 0
      %v902 = vsel %vm238, %v891, 0
      %v905 = vsel %vm238, %v892, 0
      %v908 = vsel %vm238, %v893, 0
      %v911 = vsel %vm238, %v894, 0
      %v914 = vsel %vm238, %v895, 0
      %v917 = vsel %vm315, %v897, 0
      %919 = vmatpush.bf16.msra.mxu0 0
      %920 = vmatpush.bf16.msra.mxu0 0
      %921 = vmatpush.bf16.msra.mxu0 0
      %922 = vmatpush.bf16.msra.mxu0 0
      %923 = vmatpush.bf16.msra.mxu0 0
      %924 = vmatpush.bf16.msra.mxu0 0
      %925 = vmatpush.bf16.msra.mxu0 0
      %926 = vmatpush.bf16.msra.mxu0 %v917
      %927 = vmatmul.bf16.gmra.mxu0 %v899
      %v928 = vpop.f32.mrf.mxu0
      %v929 = vadd.f32 0.0, %v928
      %v930 = vpop.f32.mrf.mxu0
      %v931 = vadd.f32 0.0, %v930
      %932 = vmatmul.bf16.gmra.mxu0 %v902
      %v933 = vpop.f32.mrf.mxu0
      %v934 = vadd.f32 0.0, %v933
      %v935 = vpop.f32.mrf.mxu0
      %v936 = vadd.f32 0.0, %v935
      %937 = vmatmul.bf16.gmra.mxu0 %v905
      %v938 = vpop.f32.mrf.mxu0
      %v939 = vadd.f32 0.0, %v938
      %v940 = vpop.f32.mrf.mxu0
      %v941 = vadd.f32 0.0, %v940
      %942 = vmatmul.bf16.gmra.mxu0 %v908
      %v943 = vpop.f32.mrf.mxu0
      %v944 = vadd.f32 0.0, %v943
      %v945 = vpop.f32.mrf.mxu0
      %v946 = vadd.f32 0.0, %v945
      %947 = vmatmul.bf16.gmra.mxu0 %v911
      %v948 = vpop.f32.mrf.mxu0
      %v949 = vadd.f32 0.0, %v948
      %v950 = vpop.f32.mrf.mxu0
      %v951 = vadd.f32 0.0, %v950
      %952 = vmatmul.bf16.gmra.mxu0 %v914
      %v953 = vpop.f32.mrf.mxu0
      %v954 = vadd.f32 0.0, %v953
      %v955 = vpop.f32.mrf.mxu0
      %v956 = vadd.f32 0.0, %v955
      %957 = vdwg.mxu0
      %v958 = vadd.f32 %v866, %v929
      %v959 = vadd.f32 %v867, %v931
      %v960 = vadd.f32 %v868, %v934
      %v961 = vadd.f32 %v869, %v936
      %v962 = vadd.f32 %v870, %v939
      %v963 = vadd.f32 %v871, %v941
      %v964 = vadd.f32 %v872, %v944
      %v965 = vadd.f32 %v873, %v946
      %v966 = vadd.f32 %v874, %v949
      %v967 = vadd.f32 %v875, %v951
      %v968 = vadd.f32 %v876, %v954
      %v969 = vadd.f32 %v877, %v956
      %v970 = vld [vmem:[#allocation2 + $0x32] sm:$0xff]
      %v971 = vld [vmem:[#allocation2 + $0x3a] sm:$0xff]
      %v972 = vld [vmem:[#allocation2 + $0x42] sm:$0xff]
      %v973 = vld [vmem:[#allocation2 + $0x4a] sm:$0xff]
      %v974 = vld [vmem:[#allocation2 + $0x52] sm:$0xff]
      %v975 = vld [vmem:[#allocation2 + $0x5a] sm:$0xff]
      %v976 = vld [vmem:[#allocation2 + $0x62] sm:$0xff]
      %v977 = vld [vmem:[#allocation2 + $0x6a] sm:$0xff]
      %v978 = vld [vmem:[#allocation2 + $0x72] sm:$0xff]
      %v979 = vld [vmem:[#allocation2 + $0x7a] sm:$0xff]
      %v980 = vld [vmem:[#allocation2 + $0x82] sm:$0xff]
      %v981 = vld [vmem:[#allocation2 + $0x8a] sm:$0xff]
      %v982 = vpack.c.bf16 %v971, %v970
      %v983 = vpack.c.bf16 %v973, %v972
      %v984 = vpack.c.bf16 %v975, %v974
      %v985 = vpack.c.bf16 %v977, %v976
      %v986 = vpack.c.bf16 %v979, %v978
      %v987 = vpack.c.bf16 %v981, %v980
      %s988 = scalar_lea.vmem %s1, 16
      %v989 = vld [vmem:[%s988] sm:$0x3]
      %v991 = vsel %vm238, %v982, 0
      %v994 = vsel %vm238, %v983, 0
      %v997 = vsel %vm238, %v984, 0
      %v1000 = vsel %vm238, %v985, 0
      %v1003 = vsel %vm238, %v986, 0
      %v1006 = vsel %vm238, %v987, 0
      %v1009 = vsel %vm315, %v989, 0
      %1011 = vmatpush.bf16.msra.mxu0 0
      %1012 = vmatpush.bf16.msra.mxu0 0
      %1013 = vmatpush.bf16.msra.mxu0 0
      %1014 = vmatpush.bf16.msra.mxu0 0
      %1015 = vmatpush.bf16.msra.mxu0 0
      %1016 = vmatpush.bf16.msra.mxu0 0
      %1017 = vmatpush.bf16.msra.mxu0 0
      %1018 = vmatpush.bf16.msra.mxu0 %v1009
      %1019 = vmatmul.bf16.gmra.mxu0 %v991
      %v1020 = vpop.f32.mrf.mxu0
      %v1021 = vadd.f32 0.0, %v1020
      %v1022 = vpop.f32.mrf.mxu0
      %v1023 = vadd.f32 0.0, %v1022
      %1024 = vmatmul.bf16.gmra.mxu0 %v994
      %v1025 = vpop.f32.mrf.mxu0
      %v1026 = vadd.f32 0.0, %v1025
      %v1027 = vpop.f32.mrf.mxu0
      %v1028 = vadd.f32 0.0, %v1027
      %1029 = vmatmul.bf16.gmra.mxu0 %v997
      %v1030 = vpop.f32.mrf.mxu0
      %v1031 = vadd.f32 0.0, %v1030
      %v1032 = vpop.f32.mrf.mxu0
      %v1033 = vadd.f32 0.0, %v1032
      %1034 = vmatmul.bf16.gmra.mxu0 %v1000
      %v1035 = vpop.f32.mrf.mxu0
      %v1036 = vadd.f32 0.0, %v1035
      %v1037 = vpop.f32.mrf.mxu0
      %v1038 = vadd.f32 0.0, %v1037
      %1039 = vmatmul.bf16.gmra.mxu0 %v1003
      %v1040 = vpop.f32.mrf.mxu0
      %v1041 = vadd.f32 0.0, %v1040
      %v1042 = vpop.f32.mrf.mxu0
      %v1043 = vadd.f32 0.0, %v1042
      %1044 = vmatmul.bf16.gmra.mxu0 %v1006
      %v1045 = vpop.f32.mrf.mxu0
      %v1046 = vadd.f32 0.0, %v1045
      %v1047 = vpop.f32.mrf.mxu0
      %v1048 = vadd.f32 0.0, %v1047
      %1049 = vdwg.mxu0
      %v1050 = vadd.f32 %v958, %v1021
      %v1051 = vadd.f32 %v959, %v1023
      %v1052 = vadd.f32 %v960, %v1026
      %v1053 = vadd.f32 %v961, %v1028
      %v1054 = vadd.f32 %v962, %v1031
      %v1055 = vadd.f32 %v963, %v1033
      %v1056 = vadd.f32 %v964, %v1036
      %v1057 = vadd.f32 %v965, %v1038
      %v1058 = vadd.f32 %v966, %v1041
      %v1059 = vadd.f32 %v967, %v1043
      %v1060 = vadd.f32 %v968, %v1046
      %v1061 = vadd.f32 %v969, %v1048
      %v1062 = vld [vmem:[%s2] sm:$0x1]
      %v1064 = vperm.slane %v1062, 0
      %v1066 = vadd.f32 %v1050, %v1064
      %v1067 = vadd.f32 %v1051, %v1064
      %v1068 = vadd.f32 %v1052, %v1064
      %v1069 = vadd.f32 %v1053, %v1064
      %v1070 = vadd.f32 %v1054, %v1064
      %v1071 = vadd.f32 %v1055, %v1064
      %v1072 = vadd.f32 %v1056, %v1064
      %v1073 = vadd.f32 %v1057, %v1064
      %v1074 = vadd.f32 %v1058, %v1064
      %v1075 = vadd.f32 %v1059, %v1064
      %v1076 = vadd.f32 %v1060, %v1064
      %v1077 = vadd.f32 %v1061, %v1064
      %v1078 = vmax.f32 %v1066, 0.0
      %v1079 = vmax.f32 %v1067, 0.0
      %v1080 = vmax.f32 %v1068, 0.0
      %v1081 = vmax.f32 %v1069, 0.0
      %v1082 = vmax.f32 %v1070, 0.0
      %v1083 = vmax.f32 %v1071, 0.0
      %v1084 = vmax.f32 %v1072, 0.0
      %v1085 = vmax.f32 %v1073, 0.0
      %v1086 = vmax.f32 %v1074, 0.0
      %v1087 = vmax.f32 %v1075, 0.0
      %v1088 = vmax.f32 %v1076, 0.0
      %v1089 = vmax.f32 %v1077, 0.0
      %vm1090 = vcmask 130048
      %1091 = vst.msk [vmem:[#allocation3] sm:$0xff] %vm1090, %v1078
      %1092 = vst.msk [vmem:[#allocation3 + $0x8] sm:$0xff] %vm1090, %v1079
      %1093 = vst.msk [vmem:[#allocation3 + $0x10] sm:$0xff] %vm1090, %v1080
      %1094 = vst.msk [vmem:[#allocation3 + $0x18] sm:$0xff] %vm1090, %v1081
      %1095 = vst.msk [vmem:[#allocation3 + $0x20] sm:$0xff] %vm1090, %v1082
      %1096 = vst.msk [vmem:[#allocation3 + $0x28] sm:$0xff] %vm1090, %v1083
      %1097 = vst.msk [vmem:[#allocation3 + $0x30] sm:$0xff] %vm1090, %v1084
      %1098 = vst.msk [vmem:[#allocation3 + $0x38] sm:$0xff] %vm1090, %v1085
      %1099 = vst.msk [vmem:[#allocation3 + $0x40] sm:$0xff] %vm1090, %v1086
      %1100 = vst.msk [vmem:[#allocation3 + $0x48] sm:$0xff] %vm1090, %v1087
      %1101 = vst.msk [vmem:[#allocation3 + $0x50] sm:$0xff] %vm1090, %v1088
      %1102 = vst.msk [vmem:[#allocation3 + $0x58] sm:$0xff] %vm1090, %v1089
      %v1103 = vld [vmem:[#allocation3] ss:$2 sm:$0xff]
      %s1104 = scalar_lea.vmem [#allocation3], 16
      %v1105 = vld [vmem:[%s1104] ss:$2 sm:$0xff]
      %s1106 = scalar_lea.vmem [#allocation3], 32
      %v1107 = vld [vmem:[%s1106] ss:$2 sm:$0xff]
      %s1108 = scalar_lea.vmem [#allocation3], 48
      %v1109 = vld [vmem:[%s1108] ss:$2 sm:$0xff]
      %s1110 = scalar_lea.vmem [#allocation3], 64
      %v1111 = vld [vmem:[%s1110] ss:$2 sm:$0xff]
      %s1112 = scalar_lea.vmem [#allocation3], 80
      %v1113 = vld [vmem:[%s1112] ss:$2 sm:$0xff]
      %s1114 = scalar_lea.vmem [#allocation3], 1
      %v1115 = vld [vmem:[%s1114] ss:$2 sm:$0xff]
      %s1116 = scalar_lea.vmem [#allocation3], 17
      %v1117 = vld [vmem:[%s1116] ss:$2 sm:$0xff]
      %s1118 = scalar_lea.vmem [#allocation3], 33
      %v1119 = vld [vmem:[%s1118] ss:$2 sm:$0xff]
      %s1120 = scalar_lea.vmem [#allocation3], 49
      %v1121 = vld [vmem:[%s1120] ss:$2 sm:$0xff]
      %s1122 = scalar_lea.vmem [#allocation3], 65
      %v1123 = vld [vmem:[%s1122] ss:$2 sm:$0xff]
      %s1124 = scalar_lea.vmem [#allocation3], 81
      %v1125 = vld [vmem:[%s1124] ss:$2 sm:$0xff]
      %v1126 = vmax.f32 %v1103, %v1115
      %v1127 = vmax.f32 %v1105, %v1117
      %v1128 = vmax.f32 %v1107, %v1119
      %v1129 = vmax.f32 %v1109, %v1121
      %v1130 = vmax.f32 %v1111, %v1123
      %v1131 = vmax.f32 %v1113, %v1125
      %1132 = vst.msk [vmem:[#allocation4] sm:$0xff] %vm1090, %v1126
      %1133 = vst.msk [vmem:[#allocation4 + $0x8] sm:$0xff] %vm1090, %v1127
      %1134 = vst.msk [vmem:[#allocation4 + $0x10] sm:$0xff] %vm1090, %v1128
      %1135 = vst.msk [vmem:[#allocation4 + $0x18] sm:$0xff] %vm1090, %v1129
      %1136 = vst.msk [vmem:[#allocation4 + $0x20] sm:$0xff] %vm1090, %v1130
      %1137 = vst.msk [vmem:[#allocation4 + $0x28] sm:$0xff] %vm1090, %v1131
      %v1138 = vld [vmem:[#allocation4] sm:$0xff]
      %v1139 = vld [vmem:[#allocation4 + $0xc] sm:$0xff]
      %v1140 = vmax.f32 %v1138, %v1139
      %v1141 = vpack.c.bf16 %v1140, %v1140
      %vm1142 = vcmask 125952
      %1143 = vst.msk [vmem:[%s192] sm:$0xf] %vm1142, %v1141
      %v1144 = vld [vmem:[#allocation4 + $0x18] sm:$0xff]
      %v1145 = vld [vmem:[#allocation4 + $0x24] sm:$0xff]
      %v1146 = vmax.f32 %v1144, %v1145
      %v1147 = vpack.c.bf16 %v1146, %v1146
      %s1148 = scalar_lea.vmem %s192, 4
      %1149 = vst.msk [vmem:[%s1148] sm:$0xf] %vm1142, %v1147
      %s1150 = smul.u32 2, %s19
      %p1151 = scmp.lt.s32.totalorder %s18, 1
      %s1152 = scalar_select %p1151, %s18, 1
      %p1153 = scmp.lt.s32.totalorder %s1150, 7
      %s1154 = scalar_select %p1153, %s1150, 7
      %s1155 = smul.addr %s1152, 8
      %s1156 = sadd.s32 %s1154, %s1155
      %s1157 = smul.addr %s1156, 4
      %s1158 = scalar_lea.vmem %s3, %s1157
      // Predicated region
      $region33: #{_lambda_.6} parent=31 // pred_check
        %p1159 = pneg %p114
      $region34: #{_lambda_.6} parent=31 // pred_check_branch
        %1161 = sbr.rel (%p1159) target = $region36
      $region35: #{_lambda_.6} parent=31 // pred_region
        %s1162 = smul.u32 2, %s19
      $region36: #{_lambda_.6} parent=31 // pred_fallthru
        _
    $region32: #{_lambda_.6} parent=5 // pred_fallthru
      _
    %p1163 = scmp.le.s32.totalorder 2, %s9
    // Predicated region
    $region37: #{_lambda_.6} parent=5 // pred_check
      %p1164 = pneg %p1163
    $region38: #{_lambda_.6} parent=5 // pred_check_branch
      %1166 = sbr.rel (%p1164) target = $region40
    $region39: #{_lambda_.6} parent=5 // pred_region
      %s1167 = ssub.s32 %s9, 2
      // Predicated region
      $region41: #{_lambda_.6} parent=39 // pred_check
        %p1168 = pneg %p120
      $region42: #{_lambda_.6} parent=39 // pred_check_branch
        %1170 = sbr.rel (%p1168) target = $region44
      $region43: #{_lambda_.6} parent=39 // pred_region
        %s1171 = smul.u32 2, %s21
        %p1172 = scmp.lt.s32.totalorder %s20, 1
        %s1173 = scalar_select %p1172, %s20, 1
        %p1174 = scmp.lt.s32.totalorder %s1171, 7
        %s1175 = scalar_select %p1174, %s1171, 7
        %s1176 = smul.addr %s1173, 8
        %s1177 = sadd.s32 %s1175, %s1176
        %s1178 = smul.addr %s1177, 4
        %s1179 = scalar_lea.vmem %s3, %s1178
      $region44: #{_lambda_.6} parent=39 // pred_fallthru
        _
    $region40: #{_lambda_.6} parent=5 // pred_fallthru
      _
  $region6: #{_lambda_.6} parent=0 // loop_footer
    %s13 = sadd.s32 1, %s9
  $region7: #{_lambda_.6} parent=0 // loop_footer_branch
    %8 = sbr.rel target = $region3
  $region8: #{_lambda_.6} parent=0 // loop_exit
    _

// kernel: _lambda_.9
$region0: #{_lambda_.9}
  #allocation0 [shape = 'u32[]', space=smem, size = 0x4, offset = 0x4, fixed_abs, tag = 'smem constant byte address 0x4 - core index']
  #allocation1 [shape = 'u32[72,128]{1,0:T(1,128)}', space=vmem, size = 0x9000, scoped, tag = 'internal scratch']
  %s0 = inlined_call_operand.vmem [shape: bf16[2,512], index: 0, kind: input, shape index: {}]
  %s1 = inlined_call_operand.vmem [shape: bf16[512,256], index: 1, kind: input, shape index: {}]
  %s2 = inlined_call_operand.vmem [shape: f32[1,256], index: 2, kind: input, shape index: {}]
  %s3 = inlined_call_operand.vmem [shape: bf16[2,256], index: 3, kind: output, shape index: {}]
  %s4 = sld [smem:[#allocation0]]
  $region86: #{_lambda_.9} parent=0
    _
  %s6 = ssub.s32 1, %s4
  %s7 = scalar_select 0, %s6, %s4
  $region1: #{_lambda_.9} parent=0
    #allocation2 [shape = 'u8[262144]{0}', space=vmem, size = 0x40000, scoped, tag = 'input window, operand 1']
    loop: start=0, step=1, limit=4
    $region2: #{_lambda_.9} parent=1 // loop_pre_header
      _
    $region3: #{_lambda_.9} parent=1 // loop_header
      %s9 = sphi 0, %s13
      %p10 = scmp.ge.s32.totalorder %s9, 4
      %s17 = sphi 0, %s17
      %s19 = sphi 0, %s17
      %s20 = sphi 0, %s19
      %s34 = sphi 0, %s20
      %s40 = sphi 0, %s42
      %s43 = sphi 0, %s40
      %s44 = sphi 0, %s43
      %s60 = sphi 0, %s44
      %s66 = sphi 0, %s68
      %s69 = sphi 0, %s66
      %s70 = sphi 0, %s69
      %s86 = sphi 0, %s70
      %s92 = sphi 0, %s94
      %s95 = sphi 0, %s92
      %s96 = sphi 0, %s95
      %s112 = sphi 0, %s96
    $region4: #{_lambda_.9} parent=1 // loop_header_branch
      %12 = sbr.rel (%p10) target = $region8
    $region5: #{_lambda_.9} parent=1 // loop_body
      %s14 = ssub.s32 %s9, 1
      %s15 = ssub.s32 %s9, 2
      %s16 = sadd.s32 %s9, 1
      %s18 = sadd.s32 %s17, 1
      %p21 = scmp.eq.s32.totalorder %s9, 1
      %p22 = scmp.ne.s32.totalorder %s17, %s19
      %p23 = scmp.eq.s32.totalorder %s9, 0
      %p24 = por %p22, %p23
      %p25 = scmp.ne.s32.totalorder %s17, %s19
      %p26 = scmp.eq.s32.totalorder %s14, 1
      %p27 = por %p25, %p26
      %p28 = scmp.ne.s32.totalorder %s19, %s20
      %p29 = scmp.eq.s32.totalorder %s14, 0
      %p30 = por %p28, %p29
      %p31 = scmp.ne.s32.totalorder %s19, %s20
      %p32 = scmp.eq.s32.totalorder %s15, 1
      %p33 = por %p31, %p32
      %p35 = scmp.ne.s32.totalorder %s20, %s34
      %p36 = scmp.eq.s32.totalorder %s15, 0
      %p37 = por %p35, %p36
      %s38 = ssub.s32 %s9, %s16
      %p39 = scmp.eq.s32.totalorder %s38, 0
      %s41 = sadd.s32 %s40, 1
      %s42 = scalar_select %p39, %s40, %s41
      %p45 = pneg %p39
      %p46 = scmp.eq.s32.totalorder %s9, 1
      %p47 = por %p45, %p46
      %p48 = scmp.ne.s32.totalorder %s40, %s43
      %p49 = scmp.eq.s32.totalorder %s9, 0
      %p50 = por %p48, %p49
      %p51 = scmp.ne.s32.totalorder %s40, %s43
      %p52 = scmp.eq.s32.totalorder %s14, 1
      %p53 = por %p51, %p52
      %p54 = scmp.ne.s32.totalorder %s43, %s44
      %p55 = scmp.eq.s32.totalorder %s14, 0
      %p56 = por %p54, %p55
      %p57 = scmp.ne.s32.totalorder %s43, %s44
      %p58 = scmp.eq.s32.totalorder %s15, 1
      %p59 = por %p57, %p58
      %p61 = scmp.ne.s32.totalorder %s44, %s60
      %p62 = scmp.eq.s32.totalorder %s15, 0
      %p63 = por %p61, %p62
      %s64 = ssub.s32 %s9, %s16
      %p65 = scmp.eq.s32.totalorder %s64, 0
      %s67 = sadd.s32 %s66, 1
      %s68 = scalar_select %p65, %s66, %s67
      %p71 = pneg %p65
      %p72 = scmp.eq.s32.totalorder %s9, 1
      %p73 = por %p71, %p72
      %p74 = scmp.ne.s32.totalorder %s66, %s69
      %p75 = scmp.eq.s32.totalorder %s9, 0
      %p76 = por %p74, %p75
      %p77 = scmp.ne.s32.totalorder %s66, %s69
      %p78 = scmp.eq.s32.totalorder %s14, 1
      %p79 = por %p77, %p78
      %p80 = scmp.ne.s32.totalorder %s69, %s70
      %p81 = scmp.eq.s32.totalorder %s14, 0
      %p82 = por %p80, %p81
      %p83 = scmp.ne.s32.totalorder %s69, %s70
      %p84 = scmp.eq.s32.totalorder %s15, 1
      %p85 = por %p83, %p84
      %p87 = scmp.ne.s32.totalorder %s70, %s86
      %p88 = scmp.eq.s32.totalorder %s15, 0
      %p89 = por %p87, %p88
      %s90 = ssub.s32 %s9, %s16
      %p91 = scmp.eq.s32.totalorder %s90, 0
      %s93 = sadd.s32 %s92, 1
      %s94 = scalar_select %p91, %s92, %s93
      %p97 = pneg %p91
      %p98 = scmp.eq.s32.totalorder %s9, 1
      %p99 = por %p97, %p98
      %p100 = scmp.ne.s32.totalorder %s92, %s95
      %p101 = scmp.eq.s32.totalorder %s9, 0
      %p102 = por %p100, %p101
      %p103 = scmp.ne.s32.totalorder %s92, %s95
      %p104 = scmp.eq.s32.totalorder %s14, 1
      %p105 = por %p103, %p104
      %p106 = scmp.ne.s32.totalorder %s95, %s96
      %p107 = scmp.eq.s32.totalorder %s14, 0
      %p108 = por %p106, %p107
      %p109 = scmp.ne.s32.totalorder %s95, %s96
      %p110 = scmp.eq.s32.totalorder %s15, 1
      %p111 = por %p109, %p110
      %p113 = scmp.ne.s32.totalorder %s96, %s112
      %p114 = scmp.eq.s32.totalorder %s15, 0
      %p115 = por %p113, %p114
      %p116 = scmp.le.s32.totalorder 1, %s9
      %p117 = scmp.lt.s32.totalorder %s9, 3
      %p118 = pnand %p116, %p117
      %p119 = pneg %p118
      // Predicated region
      $region9: #{_lambda_.9} parent=5 // pred_check
        _
      $region10: #{_lambda_.9} parent=5 // pred_check_branch
        %121 = sbr.rel (%p118) target = $region12
      $region11: #{_lambda_.9} parent=5 // pred_region
        %s122 = ssub.s32 %s9, 1
        // Predicated region
        $region13: #{_lambda_.9} parent=11 // pred_check
          %p123 = pneg %p30
        $region14: #{_lambda_.9} parent=11 // pred_check_branch
          %125 = sbr.rel (%p123) target = $region16
        $region15: #{_lambda_.9} parent=11 // pred_region
          _
        $region16: #{_lambda_.9} parent=11 // pred_fallthru
          _
      $region12: #{_lambda_.9} parent=5 // pred_fallthru
        _
      %p126 = scmp.lt.s32.totalorder %s9, 2
      // Predicated region
      $region17: #{_lambda_.9} parent=5 // pred_check
        %p127 = pneg %p126
      $region18: #{_lambda_.9} parent=5 // pred_check_branch
        %129 = sbr.rel (%p127) target = $region20
      $region19: #{_lambda_.9} parent=5 // pred_region
        // Predicated region
        $region21: #{_lambda_.9} parent=19 // pred_check
          %p130 = pneg %p50
        $region22: #{_lambda_.9} parent=19 // pred_check_branch
          %132 = sbr.rel (%p130) target = $region24
        $region23: #{_lambda_.9} parent=19 // pred_region
          %s133 = sand.u32 %s40, 1
          %s134 = sand.u32 %s40, 1
          %s135 = smul.addr %s134, 256
          %s136 = scalar_lea.vmem [#allocation2], %s135
          %s137 = smul.addr %s9, 4
          %s138 = scalar_lea.vmem %s1, %s137
          // Predicated region
          $region25: #{_lambda_.9} parent=23 // pred_check
            _
          $region26: #{_lambda_.9} parent=23 // pred_check_branch
            %140 = sbr.rel (0) target = $region28
          $region27: #{_lambda_.9} parent=23 // pred_region
            // Predicated region
            $region29: #{_lambda_.9} parent=27 // pred_check
              _
            $region30: #{_lambda_.9} parent=27 // pred_check_branch
              %142 = sbr.rel target = $region32
            $region31: #{_lambda_.9} parent=27 // pred_region
              // Predicated region
              $region44: #{_lambda_.9} parent=31 // pred_check
                _
              $region45: #{_lambda_.9} parent=31 // pred_check_branch
                %284 = sbr.rel (0) target = $region47
              $region46: #{_lambda_.9} parent=31 // pred_region
                loop: start=0, step=1, limit=1
                $region48: #{_lambda_.9} parent=46 // loop_pre_header
                  _
                $region49: #{_lambda_.9} parent=46 // loop_header
                  %s286 = sphi 0, %s290
                  %p287 = scmp.ge.s32.totalorder %s286, 1
                  %s291 = sphi %s138, %s138
                  %s292 = sphi %s136, %s136
                $region50: #{_lambda_.9} parent=46 // loop_header_branch
                  %289 = sbr.rel (%p287) target = $region54
                $region51: #{_lambda_.9} parent=46 // loop_body
                  _
                $region52: #{_lambda_.9} parent=46 // loop_footer
                  %s290 = sadd.s32 1, %s286
                $region53: #{_lambda_.9} parent=46 // loop_footer_branch
                  %285 = sbr.rel target = $region49
                $region54: #{_lambda_.9} parent=46 // loop_exit
                  _
                %s294 = ssub.s32 16, 1
                loop: start=0, step=1, limit=1
                $region55: #{_lambda_.9} parent=46 // loop_pre_header
                  _
                $region56: #{_lambda_.9} parent=46 // loop_header
                  %s296 = sphi 0, %s300
                  %p297 = scmp.ge.s32.totalorder %s296, 1
                  %s301 = sphi %s138, %s138
                  %s302 = sphi %s136, %s136
                $region57: #{_lambda_.9} parent=46 // loop_header_branch
                  %299 = sbr.rel (%p297) target = $region61
                $region58: #{_lambda_.9} parent=46 // loop_body
                  %v303 = vld [vmem:[%s301] sm:%s294]
                  %304 = vst [vmem:[%s302] sm:%s294] %v303
                  %v305 = vld [vmem:[%s301 + $0x8] sm:%s294]
                  %306 = vst [vmem:[%s302 + $0x4] sm:%s294] %v305
                  %v307 = vld [vmem:[%s301 + $0x10] sm:%s294]
                  %308 = vst [vmem:[%s302 + $0x8] sm:%s294] %v307
                  %v309 = vld [vmem:[%s301 + $0x18] sm:%s294]
                  %310 = vst [vmem:[%s302 + $0xc] sm:%s294] %v309
                  %v311 = vld [vmem:[%s301 + $0x20] sm:%s294]
                  %312 = vst [vmem:[%s302 + $0x10] sm:%s294] %v311
                  %v313 = vld [vmem:[%s301 + $0x28] sm:%s294]
                  %314 = vst [vmem:[%s302 + $0x14] sm:%s294] %v313
                  %v315 = vld [vmem:[%s301 + $0x30] sm:%s294]
                  %316 = vst [vmem:[%s302 + $0x18] sm:%s294] %v315
                  %v317 = vld [vmem:[%s301 + $0x38] sm:%s294]
                  %318 = vst [vmem:[%s302 + $0x1c] sm:%s294] %v317
                  %v319 = vld [vmem:[%s301 + $0x40] sm:%s294]
                  %320 = vst [vmem:[%s302 + $0x20] sm:%s294] %v319
                  %v321 = vld [vmem:[%s301 + $0x48] sm:%s294]
                  %322 = vst [vmem:[%s302 + $0x24] sm:%s294] %v321
                  %v323 = vld [vmem:[%s301 + $0x50] sm:%s294]
                  %324 = vst [vmem:[%s302 + $0x28] sm:%s294] %v323
                  %v325 = vld [vmem:[%s301 + $0x58] sm:%s294]
                  %326 = vst [vmem:[%s302 + $0x2c] sm:%s294] %v325
                  %v327 = vld [vmem:[%s301 + $0x60] sm:%s294]
                  %328 = vst [vmem:[%s302 + $0x30] sm:%s294] %v327
                  %v329 = vld [vmem:[%s301 + $0x68] sm:%s294]
                  %330 = vst [vmem:[%s302 + $0x34] sm:%s294] %v329
                  %v331 = vld [vmem:[%s301 + $0x70] sm:%s294]
                  %332 = vst [vmem:[%s302 + $0x38] sm:%s294] %v331
                  %v333 = vld [vmem:[%s301 + $0x78] sm:%s294]
                  %334 = vst [vmem:[%s302 + $0x3c] sm:%s294] %v333
                  %v335 = vld [vmem:[%s301 + $0x80] sm:%s294]
                  %336 = vst [vmem:[%s302 + $0x40] sm:%s294] %v335
                  %v337 = vld [vmem:[%s301 + $0x88] sm:%s294]
                  %338 = vst [vmem:[%s302 + $0x44] sm:%s294] %v337
                  %v339 = vld [vmem:[%s301 + $0x90] sm:%s294]
                  %340 = vst [vmem:[%s302 + $0x48] sm:%s294] %v339
                  %v341 = vld [vmem:[%s301 + $0x98] sm:%s294]
                  %342 = vst [vmem:[%s302 + $0x4c] sm:%s294] %v341
                  %v343 = vld [vmem:[%s301 + $0xa0] sm:%s294]
                  %344 = vst [vmem:[%s302 + $0x50] sm:%s294] %v343
                  %v345 = vld [vmem:[%s301 + $0xa8] sm:%s294]
                  %346 = vst [vmem:[%s302 + $0x54] sm:%s294] %v345
                  %v347 = vld [vmem:[%s301 + $0xb0] sm:%s294]
                  %348 = vst [vmem:[%s302 + $0x58] sm:%s294] %v347
                  %v349 = vld [vmem:[%s301 + $0xb8] sm:%s294]
                  %350 = vst [vmem:[%s302 + $0x5c] sm:%s294] %v349
                  %v351 = vld [vmem:[%s301 + $0xc0] sm:%s294]
                  %352 = vst [vmem:[%s302 + $0x60] sm:%s294] %v351
                  %v353 = vld [vmem:[%s301 + $0xc8] sm:%s294]
                  %354 = vst [vmem:[%s302 + $0x64] sm:%s294] %v353
                  %v355 = vld [vmem:[%s301 + $0xd0] sm:%s294]
                  %356 = vst [vmem:[%s302 + $0x68] sm:%s294] %v355
                  %v357 = vld [vmem:[%s301 + $0xd8] sm:%s294]
                  %358 = vst [vmem:[%s302 + $0x6c] sm:%s294] %v357
                  %v359 = vld [vmem:[%s301 + $0xe0] sm:%s294]
                  %360 = vst [vmem:[%s302 + $0x70] sm:%s294] %v359
                  %v361 = vld [vmem:[%s301 + $0xe8] sm:%s294]
                  %362 = vst [vmem:[%s302 + $0x74] sm:%s294] %v361
                  %v363 = vld [vmem:[%s301 + $0xf0] sm:%s294]
                  %364 = vst [vmem:[%s302 + $0x78] sm:%s294] %v363
                  %v365 = vld [vmem:[%s301 + $0xf8] sm:%s294]
                  %366 = vst [vmem:[%s302 + $0x7c] sm:%s294] %v365
                  %v367 = vld [vmem:[%s301 + $0x100] sm:%s294]
                  %368 = vst [vmem:[%s302 + $0x80] sm:%s294] %v367
                  %v369 = vld [vmem:[%s301 + $0x108] sm:%s294]
                  %370 = vst [vmem:[%s302 + $0x84] sm:%s294] %v369
                  %v371 = vld [vmem:[%s301 + $0x110] sm:%s294]
                  %372 = vst [vmem:[%s302 + $0x88] sm:%s294] %v371
                  %v373 = vld [vmem:[%s301 + $0x118] sm:%s294]
                  %374 = vst [vmem:[%s302 + $0x8c] sm:%s294] %v373
                  %v375 = vld [vmem:[%s301 + $0x120] sm:%s294]
                  %376 = vst [vmem:[%s302 + $0x90] sm:%s294] %v375
                  %v377 = vld [vmem:[%s301 + $0x128] sm:%s294]
                  %378 = vst [vmem:[%s302 + $0x94] sm:%s294] %v377
                  %v379 = vld [vmem:[%s301 + $0x130] sm:%s294]
                  %380 = vst [vmem:[%s302 + $0x98] sm:%s294] %v379
                  %v381 = vld [vmem:[%s301 + $0x138] sm:%s294]
                  %382 = vst [vmem:[%s302 + $0x9c] sm:%s294] %v381
                  %v383 = vld [vmem:[%s301 + $0x140] sm:%s294]
                  %384 = vst [vmem:[%s302 + $0xa0] sm:%s294] %v383
                  %v385 = vld [vmem:[%s301 + $0x148] sm:%s294]
                  %386 = vst [vmem:[%s302 + $0xa4] sm:%s294] %v385
                  %v387 = vld [vmem:[%s301 + $0x150] sm:%s294]
                  %388 = vst [vmem:[%s302 + $0xa8] sm:%s294] %v387
                  %v389 = vld [vmem:[%s301 + $0x158] sm:%s294]
                  %390 = vst [vmem:[%s302 + $0xac] sm:%s294] %v389
                  %v391 = vld [vmem:[%s301 + $0x160] sm:%s294]
                  %392 = vst [vmem:[%s302 + $0xb0] sm:%s294] %v391
                  %v393 = vld [vmem:[%s301 + $0x168] sm:%s294]
                  %394 = vst [vmem:[%s302 + $0xb4] sm:%s294] %v393
                  %v395 = vld [vmem:[%s301 + $0x170] sm:%s294]
                  %396 = vst [vmem:[%s302 + $0xb8] sm:%s294] %v395
                  %v397 = vld [vmem:[%s301 + $0x178] sm:%s294]
                  %398 = vst [vmem:[%s302 + $0xbc] sm:%s294] %v397
                  %v399 = vld [vmem:[%s301 + $0x180] sm:%s294]
                  %400 = vst [vmem:[%s302 + $0xc0] sm:%s294] %v399
                  %v401 = vld [vmem:[%s301 + $0x188] sm:%s294]
                  %402 = vst [vmem:[%s302 + $0xc4] sm:%s294] %v401
                  %v403 = vld [vmem:[%s301 + $0x190] sm:%s294]
                  %404 = vst [vmem:[%s302 + $0xc8] sm:%s294] %v403
                  %v405 = vld [vmem:[%s301 + $0x198] sm:%s294]
                  %406 = vst [vmem:[%s302 + $0xcc] sm:%s294] %v405
                  %v407 = vld [vmem:[%s301 + $0x1a0] sm:%s294]
                  %408 = vst [vmem:[%s302 + $0xd0] sm:%s294] %v407
                  %v409 = vld [vmem:[%s301 + $0x1a8] sm:%s294]
                  %410 = vst [vmem:[%s302 + $0xd4] sm:%s294] %v409
                  %v411 = vld [vmem:[%s301 + $0x1b0] sm:%s294]
                  %412 = vst [vmem:[%s302 + $0xd8] sm:%s294] %v411
                  %v413 = vld [vmem:[%s301 + $0x1b8] sm:%s294]
                  %414 = vst [vmem:[%s302 + $0xdc] sm:%s294] %v413
                  %v415 = vld [vmem:[%s301 + $0x1c0] sm:%s294]
                  %416 = vst [vmem:[%s302 + $0xe0] sm:%s294] %v415
                  %v417 = vld [vmem:[%s301 + $0x1c8] sm:%s294]
                  %418 = vst [vmem:[%s302 + $0xe4] sm:%s294] %v417
                  %v419 = vld [vmem:[%s301 + $0x1d0] sm:%s294]
                  %420 = vst [vmem:[%s302 + $0xe8] sm:%s294] %v419
                  %v421 = vld [vmem:[%s301 + $0x1d8] sm:%s294]
                  %422 = vst [vmem:[%s302 + $0xec] sm:%s294] %v421
                  %v423 = vld [vmem:[%s301 + $0x1e0] sm:%s294]
                  %424 = vst [vmem:[%s302 + $0xf0] sm:%s294] %v423
                  %v425 = vld [vmem:[%s301 + $0x1e8] sm:%s294]
                  %426 = vst [vmem:[%s302 + $0xf4] sm:%s294] %v425
                  %v427 = vld [vmem:[%s301 + $0x1f0] sm:%s294]
                  %428 = vst [vmem:[%s302 + $0xf8] sm:%s294] %v427
                  %v429 = vld [vmem:[%s301 + $0x1f8] sm:%s294]
                  %430 = vst [vmem:[%s302 + $0xfc] sm:%s294] %v429
                $region59: #{_lambda_.9} parent=46 // loop_footer
                  %s300 = sadd.s32 1, %s296
                $region60: #{_lambda_.9} parent=46 // loop_footer_branch
                  %295 = sbr.rel target = $region56
                $region61: #{_lambda_.9} parent=46 // loop_exit
                  _
              $region47: #{_lambda_.9} parent=31 // pred_fallthru
                _
            $region32: #{_lambda_.9} parent=27 // pred_fallthru
              _
            // Predicated region
            $region33: #{_lambda_.9} parent=27 // pred_check
              _
            $region34: #{_lambda_.9} parent=27 // pred_check_branch
              %144 = sbr.rel (0) target = $region36
            $region35: #{_lambda_.9} parent=27 // pred_region
              %s146 = ssub.s32 16, 1
              loop: start=0, step=1, limit=1
              $region37: #{_lambda_.9} parent=35 // loop_pre_header
                _
              $region38: #{_lambda_.9} parent=35 // loop_header
                %s148 = sphi 0, %s152
                %p149 = scmp.ge.s32.totalorder %s148, 1
                %s153 = sphi %s138, %s138
                %s154 = sphi %s136, %s136
              $region39: #{_lambda_.9} parent=35 // loop_header_branch
                %151 = sbr.rel (%p149) target = $region43
              $region40: #{_lambda_.9} parent=35 // loop_body
                %v155 = vld [vmem:[%s153] sm:%s146]
                %156 = vst [vmem:[%s154] sm:%s146] %v155
                %v157 = vld [vmem:[%s153 + $0x8] sm:%s146]
                %158 = vst [vmem:[%s154 + $0x4] sm:%s146] %v157
                %v159 = vld [vmem:[%s153 + $0x10] sm:%s146]
                %160 = vst [vmem:[%s154 + $0x8] sm:%s146] %v159
                %v161 = vld [vmem:[%s153 + $0x18] sm:%s146]
                %162 = vst [vmem:[%s154 + $0xc] sm:%s146] %v161
                %v163 = vld [vmem:[%s153 + $0x20] sm:%s146]
                %164 = vst [vmem:[%s154 + $0x10] sm:%s146] %v163
                %v165 = vld [vmem:[%s153 + $0x28] sm:%s146]
                %166 = vst [vmem:[%s154 + $0x14] sm:%s146] %v165
                %v167 = vld [vmem:[%s153 + $0x30] sm:%s146]
                %168 = vst [vmem:[%s154 + $0x18] sm:%s146] %v167
                %v169 = vld [vmem:[%s153 + $0x38] sm:%s146]
                %170 = vst [vmem:[%s154 + $0x1c] sm:%s146] %v169
                %v171 = vld [vmem:[%s153 + $0x40] sm:%s146]
                %172 = vst [vmem:[%s154 + $0x20] sm:%s146] %v171
                %v173 = vld [vmem:[%s153 + $0x48] sm:%s146]
                %174 = vst [vmem:[%s154 + $0x24] sm:%s146] %v173
                %v175 = vld [vmem:[%s153 + $0x50] sm:%s146]
                %176 = vst [vmem:[%s154 + $0x28] sm:%s146] %v175
                %v177 = vld [vmem:[%s153 + $0x58] sm:%s146]
                %178 = vst [vmem:[%s154 + $0x2c] sm:%s146] %v177
                %v179 = vld [vmem:[%s153 + $0x60] sm:%s146]
                %180 = vst [vmem:[%s154 + $0x30] sm:%s146] %v179
                %v181 = vld [vmem:[%s153 + $0x68] sm:%s146]
                %182 = vst [vmem:[%s154 + $0x34] sm:%s146] %v181
                %v183 = vld [vmem:[%s153 + $0x70] sm:%s146]
                %184 = vst [vmem:[%s154 + $0x38] sm:%s146] %v183
                %v185 = vld [vmem:[%s153 + $0x78] sm:%s146]
                %186 = vst [vmem:[%s154 + $0x3c] sm:%s146] %v185
                %v187 = vld [vmem:[%s153 + $0x80] sm:%s146]
                %188 = vst [vmem:[%s154 + $0x40] sm:%s146] %v187
                %v189 = vld [vmem:[%s153 + $0x88] sm:%s146]
                %190 = vst [vmem:[%s154 + $0x44] sm:%s146] %v189
                %v191 = vld [vmem:[%s153 + $0x90] sm:%s146]
                %192 = vst [vmem:[%s154 + $0x48] sm:%s146] %v191
                %v193 = vld [vmem:[%s153 + $0x98] sm:%s146]
                %194 = vst [vmem:[%s154 + $0x4c] sm:%s146] %v193
                %v195 = vld [vmem:[%s153 + $0xa0] sm:%s146]
                %196 = vst [vmem:[%s154 + $0x50] sm:%s146] %v195
                %v197 = vld [vmem:[%s153 + $0xa8] sm:%s146]
                %198 = vst [vmem:[%s154 + $0x54] sm:%s146] %v197
                %v199 = vld [vmem:[%s153 + $0xb0] sm:%s146]
                %200 = vst [vmem:[%s154 + $0x58] sm:%s146] %v199
                %v201 = vld [vmem:[%s153 + $0xb8] sm:%s146]
                %202 = vst [vmem:[%s154 + $0x5c] sm:%s146] %v201
                %v203 = vld [vmem:[%s153 + $0xc0] sm:%s146]
                %204 = vst [vmem:[%s154 + $0x60] sm:%s146] %v203
                %v205 = vld [vmem:[%s153 + $0xc8] sm:%s146]
                %206 = vst [vmem:[%s154 + $0x64] sm:%s146] %v205
                %v207 = vld [vmem:[%s153 + $0xd0] sm:%s146]
                %208 = vst [vmem:[%s154 + $0x68] sm:%s146] %v207
                %v209 = vld [vmem:[%s153 + $0xd8] sm:%s146]
                %210 = vst [vmem:[%s154 + $0x6c] sm:%s146] %v209
                %v211 = vld [vmem:[%s153 + $0xe0] sm:%s146]
                %212 = vst [vmem:[%s154 + $0x70] sm:%s146] %v211
                %v213 = vld [vmem:[%s153 + $0xe8] sm:%s146]
                %214 = vst [vmem:[%s154 + $0x74] sm:%s146] %v213
                %v215 = vld [vmem:[%s153 + $0xf0] sm:%s146]
                %216 = vst [vmem:[%s154 + $0x78] sm:%s146] %v215
                %v217 = vld [vmem:[%s153 + $0xf8] sm:%s146]
                %218 = vst [vmem:[%s154 + $0x7c] sm:%s146] %v217
                %v219 = vld [vmem:[%s153 + $0x100] sm:%s146]
                %220 = vst [vmem:[%s154 + $0x80] sm:%s146] %v219
                %v221 = vld [vmem:[%s153 + $0x108] sm:%s146]
                %222 = vst [vmem:[%s154 + $0x84] sm:%s146] %v221
                %v223 = vld [vmem:[%s153 + $0x110] sm:%s146]
                %224 = vst [vmem:[%s154 + $0x88] sm:%s146] %v223
                %v225 = vld [vmem:[%s153 + $0x118] sm:%s146]
                %226 = vst [vmem:[%s154 + $0x8c] sm:%s146] %v225
                %v227 = vld [vmem:[%s153 + $0x120] sm:%s146]
                %228 = vst [vmem:[%s154 + $0x90] sm:%s146] %v227
                %v229 = vld [vmem:[%s153 + $0x128] sm:%s146]
                %230 = vst [vmem:[%s154 + $0x94] sm:%s146] %v229
                %v231 = vld [vmem:[%s153 + $0x130] sm:%s146]
                %232 = vst [vmem:[%s154 + $0x98] sm:%s146] %v231
                %v233 = vld [vmem:[%s153 + $0x138] sm:%s146]
                %234 = vst [vmem:[%s154 + $0x9c] sm:%s146] %v233
                %v235 = vld [vmem:[%s153 + $0x140] sm:%s146]
                %236 = vst [vmem:[%s154 + $0xa0] sm:%s146] %v235
                %v237 = vld [vmem:[%s153 + $0x148] sm:%s146]
                %238 = vst [vmem:[%s154 + $0xa4] sm:%s146] %v237
                %v239 = vld [vmem:[%s153 + $0x150] sm:%s146]
                %240 = vst [vmem:[%s154 + $0xa8] sm:%s146] %v239
                %v241 = vld [vmem:[%s153 + $0x158] sm:%s146]
                %242 = vst [vmem:[%s154 + $0xac] sm:%s146] %v241
                %v243 = vld [vmem:[%s153 + $0x160] sm:%s146]
                %244 = vst [vmem:[%s154 + $0xb0] sm:%s146] %v243
                %v245 = vld [vmem:[%s153 + $0x168] sm:%s146]
                %246 = vst [vmem:[%s154 + $0xb4] sm:%s146] %v245
                %v247 = vld [vmem:[%s153 + $0x170] sm:%s146]
                %248 = vst [vmem:[%s154 + $0xb8] sm:%s146] %v247
                %v249 = vld [vmem:[%s153 + $0x178] sm:%s146]
                %250 = vst [vmem:[%s154 + $0xbc] sm:%s146] %v249
                %v251 = vld [vmem:[%s153 + $0x180] sm:%s146]
                %252 = vst [vmem:[%s154 + $0xc0] sm:%s146] %v251
                %v253 = vld [vmem:[%s153 + $0x188] sm:%s146]
                %254 = vst [vmem:[%s154 + $0xc4] sm:%s146] %v253
                %v255 = vld [vmem:[%s153 + $0x190] sm:%s146]
                %256 = vst [vmem:[%s154 + $0xc8] sm:%s146] %v255
                %v257 = vld [vmem:[%s153 + $0x198] sm:%s146]
                %258 = vst [vmem:[%s154 + $0xcc] sm:%s146] %v257
                %v259 = vld [vmem:[%s153 + $0x1a0] sm:%s146]
                %260 = vst [vmem:[%s154 + $0xd0] sm:%s146] %v259
                %v261 = vld [vmem:[%s153 + $0x1a8] sm:%s146]
                %262 = vst [vmem:[%s154 + $0xd4] sm:%s146] %v261
                %v263 = vld [vmem:[%s153 + $0x1b0] sm:%s146]
                %264 = vst [vmem:[%s154 + $0xd8] sm:%s146] %v263
                %v265 = vld [vmem:[%s153 + $0x1b8] sm:%s146]
                %266 = vst [vmem:[%s154 + $0xdc] sm:%s146] %v265
                %v267 = vld [vmem:[%s153 + $0x1c0] sm:%s146]
                %268 = vst [vmem:[%s154 + $0xe0] sm:%s146] %v267
                %v269 = vld [vmem:[%s153 + $0x1c8] sm:%s146]
                %270 = vst [vmem:[%s154 + $0xe4] sm:%s146] %v269
                %v271 = vld [vmem:[%s153 + $0x1d0] sm:%s146]
                %272 = vst [vmem:[%s154 + $0xe8] sm:%s146] %v271
                %v273 = vld [vmem:[%s153 + $0x1d8] sm:%s146]
                %274 = vst [vmem:[%s154 + $0xec] sm:%s146] %v273
                %v275 = vld [vmem:[%s153 + $0x1e0] sm:%s146]
                %276 = vst [vmem:[%s154 + $0xf0] sm:%s146] %v275
                %v277 = vld [vmem:[%s153 + $0x1e8] sm:%s146]
                %278 = vst [vmem:[%s154 + $0xf4] sm:%s146] %v277
                %v279 = vld [vmem:[%s153 + $0x1f0] sm:%s146]
                %280 = vst [vmem:[%s154 + $0xf8] sm:%s146] %v279
                %v281 = vld [vmem:[%s153 + $0x1f8] sm:%s146]
                %282 = vst [vmem:[%s154 + $0xfc] sm:%s146] %v281
              $region41: #{_lambda_.9} parent=35 // loop_footer
                %s152 = sadd.s32 1, %s148
              $region42: #{_lambda_.9} parent=35 // loop_footer_branch
                %147 = sbr.rel target = $region38
              $region43: #{_lambda_.9} parent=35 // loop_exit
                _
            $region36: #{_lambda_.9} parent=27 // pred_fallthru
              _
          $region28: #{_lambda_.9} parent=23 // pred_fallthru
            _
          %431 = vnop
        $region24: #{_lambda_.9} parent=19 // pred_fallthru
          _
        // Predicated region
        $region62: #{_lambda_.9} parent=19 // pred_check
          %p432 = pneg %p76
        $region63: #{_lambda_.9} parent=19 // pred_check_branch
          %434 = sbr.rel (%p432) target = $region65
        $region64: #{_lambda_.9} parent=19 // pred_region
          %p435 = scmp.lt.s32.totalorder %s9, 1
          %s436 = scalar_select %p435, %s9, 1
          %s437 = scalar_lea.vmem %s2, %s436
        $region65: #{_lambda_.9} parent=19 // pred_fallthru
          _
      $region20: #{_lambda_.9} parent=5 // pred_fallthru
        _
      %p438 = scmp.le.s32.totalorder 1, %s9
      %p439 = scmp.lt.s32.totalorder %s9, 3
      %p440 = pnand %p438, %p439
      %p441 = pneg %p440
      // Predicated region
      $region66: #{_lambda_.9} parent=5 // pred_check
        _
      $region67: #{_lambda_.9} parent=5 // pred_check_branch
        %443 = sbr.rel (%p440) target = $region69
      $region68: #{_lambda_.9} parent=5 // pred_region
        %s444 = ssub.s32 %s9, 1
        %s445 = sand.u32 %s43, 1
        %s446 = sand.u32 %s43, 1
        %s447 = smul.addr %s446, 256
        %s448 = scalar_lea.vmem [#allocation2], %s447
        // Predicated region
        $region70: #{_lambda_.9} parent=68 // pred_check
          %p449 = pneg %p56
        $region71: #{_lambda_.9} parent=68 // pred_check_branch
          %451 = sbr.rel (%p449) target = $region73
        $region72: #{_lambda_.9} parent=68 // pred_region
          _
        $region73: #{_lambda_.9} parent=68 // pred_fallthru
          _
        %p452 = pneg %p30
        %p453 = pneg %p27
        %s454 = sand.u32 %s43, 1
        %s455 = sand.u32 %s43, 1
        %s456 = smul.addr %s455, 256
        %s457 = scalar_lea.vmem [#allocation2], %s456
        %p458 = pneg %p56
        %p459 = pneg %p53
        %p460 = scmp.lt.s32.totalorder %s14, 1
        %s461 = scalar_select %p460, %s14, 1
        %s462 = scalar_lea.vmem %s2, %s461
        %p463 = pneg %p82
        %p464 = pneg %p79
        %p465 = pneg %p108
        %p466 = pneg %p105
        %p467 = scmp.lt.s32.totalorder %s14, 1
        %s468 = scalar_select %p467, %s14, 1
        %s469 = scalar_lea.vmem %s3, %s468
        %p470 = scmp.lt.s32.totalorder %s14, 1
        %s471 = scalar_select %p470, %s14, 1
        %s472 = scalar_lea.vmem %s2, %s471
        %p473 = scmp.lt.s32.totalorder %s14, 1
        %s474 = scalar_select %p473, %s14, 1
        %s475 = scalar_lea.vmem %s3, %s474
        %v476 = vld [vmem:[%s0] sm:$0xf]
        %v477 = vld [vmem:[%s448] sm:$0xf]
        %v478 = vld [vmem:[%s448 + $0x4] sm:$0xf]
        %v479 = vld [vmem:[%s448 + $0x8] sm:$0xf]
        %v480 = vld [vmem:[%s448 + $0xc] sm:$0xf]
        %v481 = vld [vmem:[%s448 + $0x10] sm:$0xf]
        %v482 = vld [vmem:[%s448 + $0x14] sm:$0xf]
        %v483 = vld [vmem:[%s448 + $0x18] sm:$0xf]
        %v484 = vld [vmem:[%s448 + $0x1c] sm:$0xf]
        %v485 = vld [vmem:[%s448 + $0x20] sm:$0xf]
        %v486 = vld [vmem:[%s448 + $0x24] sm:$0xf]
        %v487 = vld [vmem:[%s448 + $0x28] sm:$0xf]
        %v488 = vld [vmem:[%s448 + $0x2c] sm:$0xf]
        %v489 = vld [vmem:[%s448 + $0x30] sm:$0xf]
        %v490 = vld [vmem:[%s448 + $0x34] sm:$0xf]
        %v491 = vld [vmem:[%s448 + $0x38] sm:$0xf]
        %v492 = vld [vmem:[%s448 + $0x3c] sm:$0xf]
        %v493 = vld [vmem:[%s448 + $0x40] sm:$0xf]
        %v494 = vld [vmem:[%s448 + $0x44] sm:$0xf]
        %v495 = vld [vmem:[%s448 + $0x48] sm:$0xf]
        %v496 = vld [vmem:[%s448 + $0x4c] sm:$0xf]
        %v497 = vld [vmem:[%s448 + $0x50] sm:$0xf]
        %v498 = vld [vmem:[%s448 + $0x54] sm:$0xf]
        %v499 = vld [vmem:[%s448 + $0x58] sm:$0xf]
        %v500 = vld [vmem:[%s448 + $0x5c] sm:$0xf]
        %v501 = vld [vmem:[%s448 + $0x60] sm:$0xf]
        %v502 = vld [vmem:[%s448 + $0x64] sm:$0xf]
        %v503 = vld [vmem:[%s448 + $0x68] sm:$0xf]
        %v504 = vld [vmem:[%s448 + $0x6c] sm:$0xf]
        %v505 = vld [vmem:[%s448 + $0x70] sm:$0xf]
        %v506 = vld [vmem:[%s448 + $0x74] sm:$0xf]
        %v507 = vld [vmem:[%s448 + $0x78] sm:$0xf]
        %v508 = vld [vmem:[%s448 + $0x7c] sm:$0xf]
        %v509 = vld [vmem:[%s448 + $0x80] sm:$0xf]
        %v510 = vld [vmem:[%s448 + $0x84] sm:$0xf]
        %v511 = vld [vmem:[%s448 + $0x88] sm:$0xf]
        %v512 = vld [vmem:[%s448 + $0x8c] sm:$0xf]
        %v513 = vld [vmem:[%s448 + $0x90] sm:$0xf]
        %v514 = vld [vmem:[%s448 + $0x94] sm:$0xf]
        %v515 = vld [vmem:[%s448 + $0x98] sm:$0xf]
        %v516 = vld [vmem:[%s448 + $0x9c] sm:$0xf]
        %v517 = vld [vmem:[%s448 + $0xa0] sm:$0xf]
        %v518 = vld [vmem:[%s448 + $0xa4] sm:$0xf]
        %v519 = vld [vmem:[%s448 + $0xa8] sm:$0xf]
        %v520 = vld [vmem:[%s448 + $0xac] sm:$0xf]
        %v521 = vld [vmem:[%s448 + $0xb0] sm:$0xf]
        %v522 = vld [vmem:[%s448 + $0xb4] sm:$0xf]
        %v523 = vld [vmem:[%s448 + $0xb8] sm:$0xf]
        %v524 = vld [vmem:[%s448 + $0xbc] sm:$0xf]
        %v525 = vld [vmem:[%s448 + $0xc0] sm:$0xf]
        %v526 = vld [vmem:[%s448 + $0xc4] sm:$0xf]
        %v527 = vld [vmem:[%s448 + $0xc8] sm:$0xf]
        %v528 = vld [vmem:[%s448 + $0xcc] sm:$0xf]
        %v529 = vld [vmem:[%s448 + $0xd0] sm:$0xf]
        %v530 = vld [vmem:[%s448 + $0xd4] sm:$0xf]
        %v531 = vld [vmem:[%s448 + $0xd8] sm:$0xf]
        %v532 = vld [vmem:[%s448 + $0xdc] sm:$0xf]
        %v533 = vld [vmem:[%s448 + $0xe0] sm:$0xf]
        %v534 = vld [vmem:[%s448 + $0xe4] sm:$0xf]
        %v535 = vld [vmem:[%s448 + $0xe8] sm:$0xf]
        %v536 = vld [vmem:[%s448 + $0xec] sm:$0xf]
        %v537 = vld [vmem:[%s448 + $0xf0] sm:$0xf]
        %v538 = vld [vmem:[%s448 + $0xf4] sm:$0xf]
        %v539 = vld [vmem:[%s448 + $0xf8] sm:$0xf]
        %v540 = vld [vmem:[%s448 + $0xfc] sm:$0xf]
        %v541 = vld [vmem:[%s472] sm:$0x1]
        %v543 = vperm.slane %v541, 0
        %546 = vst [vmem:[#allocation1] ss:$9 sm:$0xff] %v476
        %v547 = vld [vmem:[#allocation1] sm:$0xff]
        %v548 = vld [vmem:[#allocation1 + $0x9] sm:$0xff]
        %v549 = vld [vmem:[#allocation1 + $0x12] sm:$0xff]
        %v550 = vld [vmem:[#allocation1 + $0x1b] sm:$0xff]
        %v619 = vunpack.c.l.b16 %v477
        %v620 = vunpack.c.l.b16 %v478
        %v621 = vunpack.c.l.b16 %v479
        %v622 = vunpack.c.l.b16 %v480
        %v623 = vunpack.c.l.b16 %v481
        %v624 = vunpack.c.l.b16 %v482
        %v625 = vunpack.c.l.b16 %v483
        %v626 = vunpack.c.l.b16 %v484
        %v627 = vunpack.c.l.b16 %v485
        %v628 = vunpack.c.l.b16 %v486
        %v629 = vunpack.c.l.b16 %v487
        %v630 = vunpack.c.l.b16 %v488
        %v631 = vunpack.c.l.b16 %v489
        %v632 = vunpack.c.l.b16 %v490
        %v633 = vunpack.c.l.b16 %v491
        %v634 = vunpack.c.l.b16 %v492
        %v635 = vunpack.c.l.b16 %v493
        %v636 = vunpack.c.l.b16 %v494
        %v637 = vunpack.c.l.b16 %v495
        %v638 = vunpack.c.l.b16 %v496
        %v639 = vunpack.c.l.b16 %v497
        %v640 = vunpack.c.l.b16 %v498
        %v641 = vunpack.c.l.b16 %v499
        %v642 = vunpack.c.l.b16 %v500
        %v643 = vunpack.c.l.b16 %v501
        %v644 = vunpack.c.l.b16 %v502
        %v645 = vunpack.c.l.b16 %v503
        %v646 = vunpack.c.l.b16 %v504
        %v647 = vunpack.c.l.b16 %v505
        %v648 = vunpack.c.l.b16 %v506
        %v649 = vunpack.c.l.b16 %v507
        %v650 = vunpack.c.l.b16 %v508
        %v651 = vunpack.c.l.b16 %v509
        %v652 = vunpack.c.l.b16 %v510
        %v653 = vunpack.c.l.b16 %v511
        %v654 = vunpack.c.l.b16 %v512
        %v655 = vunpack.c.l.b16 %v513
        %v656 = vunpack.c.l.b16 %v514
        %v657 = vunpack.c.l.b16 %v515
        %v658 = vunpack.c.l.b16 %v516
        %v659 = vunpack.c.l.b16 %v517
        %v660 = vunpack.c.l.b16 %v518
        %v661 = vunpack.c.l.b16 %v519
        %v662 = vunpack.c.l.b16 %v520
        %v663 = vunpack.c.l.b16 %v521
        %v664 = vunpack.c.l.b16 %v522
        %v665 = vunpack.c.l.b16 %v523
        %v666 = vunpack.c.l.b16 %v524
        %v667 = vunpack.c.l.b16 %v525
        %v668 = vunpack.c.l.b16 %v526
        %v669 = vunpack.c.l.b16 %v527
        %v670 = vunpack.c.l.b16 %v528
        %v671 = vunpack.c.l.b16 %v529
        %v672 = vunpack.c.l.b16 %v530
        %v673 = vunpack.c.l.b16 %v531
        %v674 = vunpack.c.l.b16 %v532
        %v675 = vunpack.c.l.b16 %v533
        %v676 = vunpack.c.l.b16 %v534
        %v677 = vunpack.c.l.b16 %v535
        %v678 = vunpack.c.l.b16 %v536
        %v679 = vunpack.c.l.b16 %v537
        %v680 = vunpack.c.l.b16 %v538
        %v681 = vunpack.c.l.b16 %v539
        %v682 = vunpack.c.l.b16 %v540
        %v683 = vpack.c.b16 %v620, %v619
        %v684 = vpack.c.b16 %v622, %v621
        %v685 = vpack.c.b16 %v624, %v623
        %v686 = vpack.c.b16 %v626, %v625
        %v687 = vpack.c.b16 %v628, %v627
        %v688 = vpack.c.b16 %v630, %v629
        %v689 = vpack.c.b16 %v632, %v631
        %v690 = vpack.c.b16 %v634, %v633
        %v691 = vpack.c.b16 %v636, %v635
        %v692 = vpack.c.b16 %v638, %v637
        %v693 = vpack.c.b16 %v640, %v639
        %v694 = vpack.c.b16 %v642, %v641
        %v695 = vpack.c.b16 %v644, %v643
        %v696 = vpack.c.b16 %v646, %v645
        %v697 = vpack.c.b16 %v648, %v647
        %v698 = vpack.c.b16 %v650, %v649
        %v699 = vpack.c.b16 %v652, %v651
        %v700 = vpack.c.b16 %v654, %v653
        %v701 = vpack.c.b16 %v656, %v655
        %v702 = vpack.c.b16 %v658, %v657
        %v703 = vpack.c.b16 %v660, %v659
        %v704 = vpack.c.b16 %v662, %v661
        %v705 = vpack.c.b16 %v664, %v663
        %v706 = vpack.c.b16 %v666, %v665
        %v707 = vpack.c.b16 %v668, %v667
        %v708 = vpack.c.b16 %v670, %v669
        %v709 = vpack.c.b16 %v672, %v671
        %v710 = vpack.c.b16 %v674, %v673
        %v711 = vpack.c.b16 %v676, %v675
        %v712 = vpack.c.b16 %v678, %v677
        %v713 = vpack.c.b16 %v680, %v679
        %v714 = vpack.c.b16 %v682, %v681
        %747 = vmatpush.bf16.msra.mxu0 %v690
        %748 = vmatpush.bf16.msra.mxu0 %v689
        %749 = vmatpush.bf16.msra.mxu0 %v688
        %750 = vmatpush.bf16.msra.mxu0 %v687
        %751 = vmatpush.bf16.msra.mxu0 %v686
        %752 = vmatpush.bf16.msra.mxu0 %v685
        %753 = vmatpush.bf16.msra.mxu0 %v684
        %754 = vmatpush.bf16.msra.mxu0 %v683
        %755 = vmatmul.bf16.gmra.mxu0 %v547
        %v756 = vpop.f32.mrf.mxu0
        %v757 = vadd.f32 %v543, %v756
        %v758 = vpop.f32.mrf.mxu0
        %759 = vdwg.mxu0
        %760 = vmatpush.bf16.msra.mxu0 %v698
        %761 = vmatpush.bf16.msra.mxu0 %v697
        %762 = vmatpush.bf16.msra.mxu0 %v696
        %763 = vmatpush.bf16.msra.mxu0 %v695
        %764 = vmatpush.bf16.msra.mxu0 %v694
        %765 = vmatpush.bf16.msra.mxu0 %v693
        %766 = vmatpush.bf16.msra.mxu0 %v692
        %767 = vmatpush.bf16.msra.mxu0 %v691
        %768 = vmatmul.bf16.gmra.mxu0 %v548
        %v769 = vpop.f32.mrf.mxu0
        %v770 = vadd.f32 %v757, %v769
        %v771 = vpop.f32.mrf.mxu0
        %772 = vdwg.mxu0
        %773 = vmatpush.bf16.msra.mxu0 %v706
        %774 = vmatpush.bf16.msra.mxu0 %v705
        %775 = vmatpush.bf16.msra.mxu0 %v704
        %776 = vmatpush.bf16.msra.mxu0 %v703
        %777 = vmatpush.bf16.msra.mxu0 %v702
        %778 = vmatpush.bf16.msra.mxu0 %v701
        %779 = vmatpush.bf16.msra.mxu0 %v700
        %780 = vmatpush.bf16.msra.mxu0 %v699
        %781 = vmatmul.bf16.gmra.mxu0 %v549
        %v782 = vpop.f32.mrf.mxu0
        %v783 = vadd.f32 %v770, %v782
        %v784 = vpop.f32.mrf.mxu0
        %785 = vdwg.mxu0
        %786 = vmatpush.bf16.msra.mxu0 %v714
        %787 = vmatpush.bf16.msra.mxu0 %v713
        %788 = vmatpush.bf16.msra.mxu0 %v712
        %789 = vmatpush.bf16.msra.mxu0 %v711
        %790 = vmatpush.bf16.msra.mxu0 %v710
        %791 = vmatpush.bf16.msra.mxu0 %v709
        %792 = vmatpush.bf16.msra.mxu0 %v708
        %793 = vmatpush.bf16.msra.mxu0 %v707
        %794 = vmatmul.bf16.gmra.mxu0 %v550
        %v795 = vpop.f32.mrf.mxu0
        %v796 = vadd.f32 %v783, %v795
        %v797 = vpop.f32.mrf.mxu0
        %798 = vdwg.mxu0
        %v799 = vmax.f32 %v796, 0.0
        %v800 = vpack.c.bf16 %v799, %v799
        %801 = vst [vmem:[%s475] sm:$0x1] %v800
        %p802 = scmp.lt.s32.totalorder %s14, 1
        %s803 = scalar_select %p802, %s14, 1
        %s804 = scalar_lea.vmem %s3, %s803
        // Predicated region
        $region74: #{_lambda_.9} parent=68 // pred_check
          %p805 = pneg %p105
        $region75: #{_lambda_.9} parent=68 // pred_check_branch
          %807 = sbr.rel (%p805) target = $region77
        $region76: #{_lambda_.9} parent=68 // pred_region
          _
        $region77: #{_lambda_.9} parent=68 // pred_fallthru
          _
      $region69: #{_lambda_.9} parent=5 // pred_fallthru
        _
      %p808 = scmp.le.s32.totalorder 2, %s9
      // Predicated region
      $region78: #{_lambda_.9} parent=5 // pred_check
        %p809 = pneg %p808
      $region79: #{_lambda_.9} parent=5 // pred_check_branch
        %811 = sbr.rel (%p809) target = $region81
      $region80: #{_lambda_.9} parent=5 // pred_region
        %s812 = ssub.s32 %s9, 2
        // Predicated region
        $region82: #{_lambda_.9} parent=80 // pred_check
          %p813 = pneg %p111
        $region83: #{_lambda_.9} parent=80 // pred_check_branch
          %815 = sbr.rel (%p813) target = $region85
        $region84: #{_lambda_.9} parent=80 // pred_region
          %p816 = scmp.lt.s32.totalorder %s15, 1
          %s817 = scalar_select %p816, %s15, 1
          %s818 = scalar_lea.vmem %s3, %s817
        $region85: #{_lambda_.9} parent=80 // pred_fallthru
          _
      $region81: #{_lambda_.9} parent=5 // pred_fallthru
        _
    $region6: #{_lambda_.9} parent=1 // loop_footer
      %s13 = sadd.s32 1, %s9
    $region7: #{_lambda_.9} parent=1 // loop_footer_branch
      %8 = sbr.rel target = $region3
    $region8: #{_lambda_.9} parent=1 // loop_exit
      _

// kernel: _lambda_.10
$region0: #{_lambda_.10}
  #allocation0 [shape = 'u32[]', space=smem, size = 0x4, offset = 0x4, fixed_abs, tag = 'smem constant byte address 0x4 - core index']
  #allocation1 [shape = 'u32[72,128]{1,0:T(1,128)}', space=vmem, size = 0x9000, scoped, tag = 'internal scratch']
  %s0 = inlined_call_operand.vmem [shape: bf16[2,256], index: 0, kind: input, shape index: {}]
  %s1 = inlined_call_operand.vmem [shape: bf16[256,256], index: 1, kind: input, shape index: {}]
  %s2 = inlined_call_operand.vmem [shape: f32[1,256], index: 2, kind: input, shape index: {}]
  %s3 = inlined_call_operand.vmem [shape: bf16[2,256], index: 3, kind: output, shape index: {}]
  %s4 = sld [smem:[#allocation0]]
  $region86: #{_lambda_.10} parent=0
    _
  %s6 = ssub.s32 1, %s4
  %s7 = scalar_select 0, %s6, %s4
  $region1: #{_lambda_.10} parent=0
    #allocation2 [shape = 'u8[131072]{0}', space=vmem, size = 0x20000, scoped, tag = 'input window, operand 1']
    loop: start=0, step=1, limit=4
    $region2: #{_lambda_.10} parent=1 // loop_pre_header
      _
    $region3: #{_lambda_.10} parent=1 // loop_header
      %s9 = sphi 0, %s13
      %p10 = scmp.ge.s32.totalorder %s9, 4
      %s17 = sphi 0, %s17
      %s19 = sphi 0, %s17
      %s20 = sphi 0, %s19
      %s34 = sphi 0, %s20
      %s40 = sphi 0, %s42
      %s43 = sphi 0, %s40
      %s44 = sphi 0, %s43
      %s60 = sphi 0, %s44
      %s66 = sphi 0, %s68
      %s69 = sphi 0, %s66
      %s70 = sphi 0, %s69
      %s86 = sphi 0, %s70
      %s92 = sphi 0, %s94
      %s95 = sphi 0, %s92
      %s96 = sphi 0, %s95
      %s112 = sphi 0, %s96
    $region4: #{_lambda_.10} parent=1 // loop_header_branch
      %12 = sbr.rel (%p10) target = $region8
    $region5: #{_lambda_.10} parent=1 // loop_body
      %s14 = ssub.s32 %s9, 1
      %s15 = ssub.s32 %s9, 2
      %s16 = sadd.s32 %s9, 1
      %s18 = sadd.s32 %s17, 1
      %p21 = scmp.eq.s32.totalorder %s9, 1
      %p22 = scmp.ne.s32.totalorder %s17, %s19
      %p23 = scmp.eq.s32.totalorder %s9, 0
      %p24 = por %p22, %p23
      %p25 = scmp.ne.s32.totalorder %s17, %s19
      %p26 = scmp.eq.s32.totalorder %s14, 1
      %p27 = por %p25, %p26
      %p28 = scmp.ne.s32.totalorder %s19, %s20
      %p29 = scmp.eq.s32.totalorder %s14, 0
      %p30 = por %p28, %p29
      %p31 = scmp.ne.s32.totalorder %s19, %s20
      %p32 = scmp.eq.s32.totalorder %s15, 1
      %p33 = por %p31, %p32
      %p35 = scmp.ne.s32.totalorder %s20, %s34
      %p36 = scmp.eq.s32.totalorder %s15, 0
      %p37 = por %p35, %p36
      %s38 = ssub.s32 %s9, %s16
      %p39 = scmp.eq.s32.totalorder %s38, 0
      %s41 = sadd.s32 %s40, 1
      %s42 = scalar_select %p39, %s40, %s41
      %p45 = pneg %p39
      %p46 = scmp.eq.s32.totalorder %s9, 1
      %p47 = por %p45, %p46
      %p48 = scmp.ne.s32.totalorder %s40, %s43
      %p49 = scmp.eq.s32.totalorder %s9, 0
      %p50 = por %p48, %p49
      %p51 = scmp.ne.s32.totalorder %s40, %s43
      %p52 = scmp.eq.s32.totalorder %s14, 1
      %p53 = por %p51, %p52
      %p54 = scmp.ne.s32.totalorder %s43, %s44
      %p55 = scmp.eq.s32.totalorder %s14, 0
      %p56 = por %p54, %p55
      %p57 = scmp.ne.s32.totalorder %s43, %s44
      %p58 = scmp.eq.s32.totalorder %s15, 1
      %p59 = por %p57, %p58
      %p61 = scmp.ne.s32.totalorder %s44, %s60
      %p62 = scmp.eq.s32.totalorder %s15, 0
      %p63 = por %p61, %p62
      %s64 = ssub.s32 %s9, %s16
      %p65 = scmp.eq.s32.totalorder %s64, 0
      %s67 = sadd.s32 %s66, 1
      %s68 = scalar_select %p65, %s66, %s67
      %p71 = pneg %p65
      %p72 = scmp.eq.s32.totalorder %s9, 1
      %p73 = por %p71, %p72
      %p74 = scmp.ne.s32.totalorder %s66, %s69
      %p75 = scmp.eq.s32.totalorder %s9, 0
      %p76 = por %p74, %p75
      %p77 = scmp.ne.s32.totalorder %s66, %s69
      %p78 = scmp.eq.s32.totalorder %s14, 1
      %p79 = por %p77, %p78
      %p80 = scmp.ne.s32.totalorder %s69, %s70
      %p81 = scmp.eq.s32.totalorder %s14, 0
      %p82 = por %p80, %p81
      %p83 = scmp.ne.s32.totalorder %s69, %s70
      %p84 = scmp.eq.s32.totalorder %s15, 1
      %p85 = por %p83, %p84
      %p87 = scmp.ne.s32.totalorder %s70, %s86
      %p88 = scmp.eq.s32.totalorder %s15, 0
      %p89 = por %p87, %p88
      %s90 = ssub.s32 %s9, %s16
      %p91 = scmp.eq.s32.totalorder %s90, 0
      %s93 = sadd.s32 %s92, 1
      %s94 = scalar_select %p91, %s92, %s93
      %p97 = pneg %p91
      %p98 = scmp.eq.s32.totalorder %s9, 1
      %p99 = por %p97, %p98
      %p100 = scmp.ne.s32.totalorder %s92, %s95
      %p101 = scmp.eq.s32.totalorder %s9, 0
      %p102 = por %p100, %p101
      %p103 = scmp.ne.s32.totalorder %s92, %s95
      %p104 = scmp.eq.s32.totalorder %s14, 1
      %p105 = por %p103, %p104
      %p106 = scmp.ne.s32.totalorder %s95, %s96
      %p107 = scmp.eq.s32.totalorder %s14, 0
      %p108 = por %p106, %p107
      %p109 = scmp.ne.s32.totalorder %s95, %s96
      %p110 = scmp.eq.s32.totalorder %s15, 1
      %p111 = por %p109, %p110
      %p113 = scmp.ne.s32.totalorder %s96, %s112
      %p114 = scmp.eq.s32.totalorder %s15, 0
      %p115 = por %p113, %p114
      %p116 = scmp.le.s32.totalorder 1, %s9
      %p117 = scmp.lt.s32.totalorder %s9, 3
      %p118 = pnand %p116, %p117
      %p119 = pneg %p118
      // Predicated region
      $region9: #{_lambda_.10} parent=5 // pred_check
        _
      $region10: #{_lambda_.10} parent=5 // pred_check_branch
        %121 = sbr.rel (%p118) target = $region12
      $region11: #{_lambda_.10} parent=5 // pred_region
        %s122 = ssub.s32 %s9, 1
        // Predicated region
        $region13: #{_lambda_.10} parent=11 // pred_check
          %p123 = pneg %p30
        $region14: #{_lambda_.10} parent=11 // pred_check_branch
          %125 = sbr.rel (%p123) target = $region16
        $region15: #{_lambda_.10} parent=11 // pred_region
          _
        $region16: #{_lambda_.10} parent=11 // pred_fallthru
          _
      $region12: #{_lambda_.10} parent=5 // pred_fallthru
        _
      %p126 = scmp.lt.s32.totalorder %s9, 2
      // Predicated region
      $region17: #{_lambda_.10} parent=5 // pred_check
        %p127 = pneg %p126
      $region18: #{_lambda_.10} parent=5 // pred_check_branch
        %129 = sbr.rel (%p127) target = $region20
      $region19: #{_lambda_.10} parent=5 // pred_region
        // Predicated region
        $region21: #{_lambda_.10} parent=19 // pred_check
          %p130 = pneg %p50
        $region22: #{_lambda_.10} parent=19 // pred_check_branch
          %132 = sbr.rel (%p130) target = $region24
        $region23: #{_lambda_.10} parent=19 // pred_region
          %s133 = sand.u32 %s40, 1
          %s134 = sand.u32 %s40, 1
          %s135 = smul.addr %s134, 128
          %s136 = scalar_lea.vmem [#allocation2], %s135
          %s137 = smul.addr %s9, 4
          %s138 = scalar_lea.vmem %s1, %s137
          // Predicated region
          $region25: #{_lambda_.10} parent=23 // pred_check
            _
          $region26: #{_lambda_.10} parent=23 // pred_check_branch
            %140 = sbr.rel (0) target = $region28
          $region27: #{_lambda_.10} parent=23 // pred_region
            // Predicated region
            $region29: #{_lambda_.10} parent=27 // pred_check
              _
            $region30: #{_lambda_.10} parent=27 // pred_check_branch
              %142 = sbr.rel target = $region32
            $region31: #{_lambda_.10} parent=27 // pred_region
              // Predicated region
              $region44: #{_lambda_.10} parent=31 // pred_check
                _
              $region45: #{_lambda_.10} parent=31 // pred_check_branch
                %220 = sbr.rel (0) target = $region47
              $region46: #{_lambda_.10} parent=31 // pred_region
                loop: start=0, step=1, limit=1
                $region48: #{_lambda_.10} parent=46 // loop_pre_header
                  _
                $region49: #{_lambda_.10} parent=46 // loop_header
                  %s222 = sphi 0, %s226
                  %p223 = scmp.ge.s32.totalorder %s222, 1
                  %s227 = sphi %s138, %s138
                  %s228 = sphi %s136, %s136
                $region50: #{_lambda_.10} parent=46 // loop_header_branch
                  %225 = sbr.rel (%p223) target = $region54
                $region51: #{_lambda_.10} parent=46 // loop_body
                  _
                $region52: #{_lambda_.10} parent=46 // loop_footer
                  %s226 = sadd.s32 1, %s222
                $region53: #{_lambda_.10} parent=46 // loop_footer_branch
                  %221 = sbr.rel target = $region49
                $region54: #{_lambda_.10} parent=46 // loop_exit
                  _
                %s230 = ssub.s32 16, 1
                loop: start=0, step=1, limit=1
                $region55: #{_lambda_.10} parent=46 // loop_pre_header
                  _
                $region56: #{_lambda_.10} parent=46 // loop_header
                  %s232 = sphi 0, %s236
                  %p233 = scmp.ge.s32.totalorder %s232, 1
                  %s237 = sphi %s138, %s138
                  %s238 = sphi %s136, %s136
                $region57: #{_lambda_.10} parent=46 // loop_header_branch
                  %235 = sbr.rel (%p233) target = $region61
                $region58: #{_lambda_.10} parent=46 // loop_body
                  %v239 = vld [vmem:[%s237] sm:%s230]
                  %240 = vst [vmem:[%s238] sm:%s230] %v239
                  %v241 = vld [vmem:[%s237 + $0x8] sm:%s230]
                  %242 = vst [vmem:[%s238 + $0x4] sm:%s230] %v241
                  %v243 = vld [vmem:[%s237 + $0x10] sm:%s230]
                  %244 = vst [vmem:[%s238 + $0x8] sm:%s230] %v243
                  %v245 = vld [vmem:[%s237 + $0x18] sm:%s230]
                  %246 = vst [vmem:[%s238 + $0xc] sm:%s230] %v245
                  %v247 = vld [vmem:[%s237 + $0x20] sm:%s230]
                  %248 = vst [vmem:[%s238 + $0x10] sm:%s230] %v247
                  %v249 = vld [vmem:[%s237 + $0x28] sm:%s230]
                  %250 = vst [vmem:[%s238 + $0x14] sm:%s230] %v249
                  %v251 = vld [vmem:[%s237 + $0x30] sm:%s230]
                  %252 = vst [vmem:[%s238 + $0x18] sm:%s230] %v251
                  %v253 = vld [vmem:[%s237 + $0x38] sm:%s230]
                  %254 = vst [vmem:[%s238 + $0x1c] sm:%s230] %v253
                  %v255 = vld [vmem:[%s237 + $0x40] sm:%s230]
                  %256 = vst [vmem:[%s238 + $0x20] sm:%s230] %v255
                  %v257 = vld [vmem:[%s237 + $0x48] sm:%s230]
                  %258 = vst [vmem:[%s238 + $0x24] sm:%s230] %v257
                  %v259 = vld [vmem:[%s237 + $0x50] sm:%s230]
                  %260 = vst [vmem:[%s238 + $0x28] sm:%s230] %v259
                  %v261 = vld [vmem:[%s237 + $0x58] sm:%s230]
                  %262 = vst [vmem:[%s238 + $0x2c] sm:%s230] %v261
                  %v263 = vld [vmem:[%s237 + $0x60] sm:%s230]
                  %264 = vst [vmem:[%s238 + $0x30] sm:%s230] %v263
                  %v265 = vld [vmem:[%s237 + $0x68] sm:%s230]
                  %266 = vst [vmem:[%s238 + $0x34] sm:%s230] %v265
                  %v267 = vld [vmem:[%s237 + $0x70] sm:%s230]
                  %268 = vst [vmem:[%s238 + $0x38] sm:%s230] %v267
                  %v269 = vld [vmem:[%s237 + $0x78] sm:%s230]
                  %270 = vst [vmem:[%s238 + $0x3c] sm:%s230] %v269
                  %v271 = vld [vmem:[%s237 + $0x80] sm:%s230]
                  %272 = vst [vmem:[%s238 + $0x40] sm:%s230] %v271
                  %v273 = vld [vmem:[%s237 + $0x88] sm:%s230]
                  %274 = vst [vmem:[%s238 + $0x44] sm:%s230] %v273
                  %v275 = vld [vmem:[%s237 + $0x90] sm:%s230]
                  %276 = vst [vmem:[%s238 + $0x48] sm:%s230] %v275
                  %v277 = vld [vmem:[%s237 + $0x98] sm:%s230]
                  %278 = vst [vmem:[%s238 + $0x4c] sm:%s230] %v277
                  %v279 = vld [vmem:[%s237 + $0xa0] sm:%s230]
                  %280 = vst [vmem:[%s238 + $0x50] sm:%s230] %v279
                  %v281 = vld [vmem:[%s237 + $0xa8] sm:%s230]
                  %282 = vst [vmem:[%s238 + $0x54] sm:%s230] %v281
                  %v283 = vld [vmem:[%s237 + $0xb0] sm:%s230]
                  %284 = vst [vmem:[%s238 + $0x58] sm:%s230] %v283
                  %v285 = vld [vmem:[%s237 + $0xb8] sm:%s230]
                  %286 = vst [vmem:[%s238 + $0x5c] sm:%s230] %v285
                  %v287 = vld [vmem:[%s237 + $0xc0] sm:%s230]
                  %288 = vst [vmem:[%s238 + $0x60] sm:%s230] %v287
                  %v289 = vld [vmem:[%s237 + $0xc8] sm:%s230]
                  %290 = vst [vmem:[%s238 + $0x64] sm:%s230] %v289
                  %v291 = vld [vmem:[%s237 + $0xd0] sm:%s230]
                  %292 = vst [vmem:[%s238 + $0x68] sm:%s230] %v291
                  %v293 = vld [vmem:[%s237 + $0xd8] sm:%s230]
                  %294 = vst [vmem:[%s238 + $0x6c] sm:%s230] %v293
                  %v295 = vld [vmem:[%s237 + $0xe0] sm:%s230]
                  %296 = vst [vmem:[%s238 + $0x70] sm:%s230] %v295
                  %v297 = vld [vmem:[%s237 + $0xe8] sm:%s230]
                  %298 = vst [vmem:[%s238 + $0x74] sm:%s230] %v297
                  %v299 = vld [vmem:[%s237 + $0xf0] sm:%s230]
                  %300 = vst [vmem:[%s238 + $0x78] sm:%s230] %v299
                  %v301 = vld [vmem:[%s237 + $0xf8] sm:%s230]
                  %302 = vst [vmem:[%s238 + $0x7c] sm:%s230] %v301
                $region59: #{_lambda_.10} parent=46 // loop_footer
                  %s236 = sadd.s32 1, %s232
                $region60: #{_lambda_.10} parent=46 // loop_footer_branch
                  %231 = sbr.rel target = $region56
                $region61: #{_lambda_.10} parent=46 // loop_exit
                  _
              $region47: #{_lambda_.10} parent=31 // pred_fallthru
                _
            $region32: #{_lambda_.10} parent=27 // pred_fallthru
              _
            // Predicated region
            $region33: #{_lambda_.10} parent=27 // pred_check
              _
            $region34: #{_lambda_.10} parent=27 // pred_check_branch
              %144 = sbr.rel (0) target = $region36
            $region35: #{_lambda_.10} parent=27 // pred_region
              %s146 = ssub.s32 16, 1
              loop: start=0, step=1, limit=1
              $region37: #{_lambda_.10} parent=35 // loop_pre_header
                _
              $region38: #{_lambda_.10} parent=35 // loop_header
                %s148 = sphi 0, %s152
                %p149 = scmp.ge.s32.totalorder %s148, 1
                %s153 = sphi %s138, %s138
                %s154 = sphi %s136, %s136
              $region39: #{_lambda_.10} parent=35 // loop_header_branch
                %151 = sbr.rel (%p149) target = $region43
              $region40: #{_lambda_.10} parent=35 // loop_body
                %v155 = vld [vmem:[%s153] sm:%s146]
                %156 = vst [vmem:[%s154] sm:%s146] %v155
                %v157 = vld [vmem:[%s153 + $0x8] sm:%s146]
                %158 = vst [vmem:[%s154 + $0x4] sm:%s146] %v157
                %v159 = vld [vmem:[%s153 + $0x10] sm:%s146]
                %160 = vst [vmem:[%s154 + $0x8] sm:%s146] %v159
                %v161 = vld [vmem:[%s153 + $0x18] sm:%s146]
                %162 = vst [vmem:[%s154 + $0xc] sm:%s146] %v161
                %v163 = vld [vmem:[%s153 + $0x20] sm:%s146]
                %164 = vst [vmem:[%s154 + $0x10] sm:%s146] %v163
                %v165 = vld [vmem:[%s153 + $0x28] sm:%s146]
                %166 = vst [vmem:[%s154 + $0x14] sm:%s146] %v165
                %v167 = vld [vmem:[%s153 + $0x30] sm:%s146]
                %168 = vst [vmem:[%s154 + $0x18] sm:%s146] %v167
                %v169 = vld [vmem:[%s153 + $0x38] sm:%s146]
                %170 = vst [vmem:[%s154 + $0x1c] sm:%s146] %v169
                %v171 = vld [vmem:[%s153 + $0x40] sm:%s146]
                %172 = vst [vmem:[%s154 + $0x20] sm:%s146] %v171
                %v173 = vld [vmem:[%s153 + $0x48] sm:%s146]
                %174 = vst [vmem:[%s154 + $0x24] sm:%s146] %v173
                %v175 = vld [vmem:[%s153 + $0x50] sm:%s146]
                %176 = vst [vmem:[%s154 + $0x28] sm:%s146] %v175
                %v177 = vld [vmem:[%s153 + $0x58] sm:%s146]
                %178 = vst [vmem:[%s154 + $0x2c] sm:%s146] %v177
                %v179 = vld [vmem:[%s153 + $0x60] sm:%s146]
                %180 = vst [vmem:[%s154 + $0x30] sm:%s146] %v179
                %v181 = vld [vmem:[%s153 + $0x68] sm:%s146]
                %182 = vst [vmem:[%s154 + $0x34] sm:%s146] %v181
                %v183 = vld [vmem:[%s153 + $0x70] sm:%s146]
                %184 = vst [vmem:[%s154 + $0x38] sm:%s146] %v183
                %v185 = vld [vmem:[%s153 + $0x78] sm:%s146]
                %186 = vst [vmem:[%s154 + $0x3c] sm:%s146] %v185
                %v187 = vld [vmem:[%s153 + $0x80] sm:%s146]
                %188 = vst [vmem:[%s154 + $0x40] sm:%s146] %v187
                %v189 = vld [vmem:[%s153 + $0x88] sm:%s146]
                %190 = vst [vmem:[%s154 + $0x44] sm:%s146] %v189
                %v191 = vld [vmem:[%s153 + $0x90] sm:%s146]
                %192 = vst [vmem:[%s154 + $0x48] sm:%s146] %v191
                %v193 = vld [vmem:[%s153 + $0x98] sm:%s146]
                %194 = vst [vmem:[%s154 + $0x4c] sm:%s146] %v193
                %v195 = vld [vmem:[%s153 + $0xa0] sm:%s146]
                %196 = vst [vmem:[%s154 + $0x50] sm:%s146] %v195
                %v197 = vld [vmem:[%s153 + $0xa8] sm:%s146]
                %198 = vst [vmem:[%s154 + $0x54] sm:%s146] %v197
                %v199 = vld [vmem:[%s153 + $0xb0] sm:%s146]
                %200 = vst [vmem:[%s154 + $0x58] sm:%s146] %v199
                %v201 = vld [vmem:[%s153 + $0xb8] sm:%s146]
                %202 = vst [vmem:[%s154 + $0x5c] sm:%s146] %v201
                %v203 = vld [vmem:[%s153 + $0xc0] sm:%s146]
                %204 = vst [vmem:[%s154 + $0x60] sm:%s146] %v203
                %v205 = vld [vmem:[%s153 + $0xc8] sm:%s146]
                %206 = vst [vmem:[%s154 + $0x64] sm:%s146] %v205
                %v207 = vld [vmem:[%s153 + $0xd0] sm:%s146]
                %208 = vst [vmem:[%s154 + $0x68] sm:%s146] %v207
                %v209 = vld [vmem:[%s153 + $0xd8] sm:%s146]
                %210 = vst [vmem:[%s154 + $0x6c] sm:%s146] %v209
                %v211 = vld [vmem:[%s153 + $0xe0] sm:%s146]
                %212 = vst [vmem:[%s154 + $0x70] sm:%s146] %v211
                %v213 = vld [vmem:[%s153 + $0xe8] sm:%s146]
                %214 = vst [vmem:[%s154 + $0x74] sm:%s146] %v213
                %v215 = vld [vmem:[%s153 + $0xf0] sm:%s146]
                %216 = vst [vmem:[%s154 + $0x78] sm:%s146] %v215
                %v217 = vld [vmem:[%s153 + $0xf8] sm:%s146]
                %218 = vst [vmem:[%s154 + $0x7c] sm:%s146] %v217
              $region41: #{_lambda_.10} parent=35 // loop_footer
                %s152 = sadd.s32 1, %s148
              $region42: #{_lambda_.10} parent=35 // loop_footer_branch
                %147 = sbr.rel target = $region38
              $region43: #{_lambda_.10} parent=35 // loop_exit
                _
            $region36: #{_lambda_.10} parent=27 // pred_fallthru
              _
          $region28: #{_lambda_.10} parent=23 // pred_fallthru
            _
          %303 = vnop
        $region24: #{_lambda_.10} parent=19 // pred_fallthru
          _
        // Predicated region
        $region62: #{_lambda_.10} parent=19 // pred_check
          %p304 = pneg %p76
        $region63: #{_lambda_.10} parent=19 // pred_check_branch
          %306 = sbr.rel (%p304) target = $region65
        $region64: #{_lambda_.10} parent=19 // pred_region
          %p307 = scmp.lt.s32.totalorder %s9, 1
          %s308 = scalar_select %p307, %s9, 1
          %s309 = scalar_lea.vmem %s2, %s308
        $region65: #{_lambda_.10} parent=19 // pred_fallthru
          _
      $region20: #{_lambda_.10} parent=5 // pred_fallthru
        _
      %p310 = scmp.le.s32.totalorder 1, %s9
      %p311 = scmp.lt.s32.totalorder %s9, 3
      %p312 = pnand %p310, %p311
      %p313 = pneg %p312
      // Predicated region
      $region66: #{_lambda_.10} parent=5 // pred_check
        _
      $region67: #{_lambda_.10} parent=5 // pred_check_branch
        %315 = sbr.rel (%p312) target = $region69
      $region68: #{_lambda_.10} parent=5 // pred_region
        %s316 = ssub.s32 %s9, 1
        %s317 = sand.u32 %s43, 1
        %s318 = sand.u32 %s43, 1
        %s319 = smul.addr %s318, 128
        %s320 = scalar_lea.vmem [#allocation2], %s319
        // Predicated region
        $region70: #{_lambda_.10} parent=68 // pred_check
          %p321 = pneg %p56
        $region71: #{_lambda_.10} parent=68 // pred_check_branch
          %323 = sbr.rel (%p321) target = $region73
        $region72: #{_lambda_.10} parent=68 // pred_region
          _
        $region73: #{_lambda_.10} parent=68 // pred_fallthru
          _
        %p324 = pneg %p30
        %p325 = pneg %p27
        %s326 = sand.u32 %s43, 1
        %s327 = sand.u32 %s43, 1
        %s328 = smul.addr %s327, 128
        %s329 = scalar_lea.vmem [#allocation2], %s328
        %p330 = pneg %p56
        %p331 = pneg %p53
        %p332 = scmp.lt.s32.totalorder %s14, 1
        %s333 = scalar_select %p332, %s14, 1
        %s334 = scalar_lea.vmem %s2, %s333
        %p335 = pneg %p82
        %p336 = pneg %p79
        %p337 = pneg %p108
        %p338 = pneg %p105
        %p339 = scmp.lt.s32.totalorder %s14, 1
        %s340 = scalar_select %p339, %s14, 1
        %s341 = scalar_lea.vmem %s3, %s340
        %p342 = scmp.lt.s32.totalorder %s14, 1
        %s343 = scalar_select %p342, %s14, 1
        %s344 = scalar_lea.vmem %s2, %s343
        %p345 = scmp.lt.s32.totalorder %s14, 1
        %s346 = scalar_select %p345, %s14, 1
        %s347 = scalar_lea.vmem %s3, %s346
        %v348 = vld [vmem:[%s0] sm:$0x3]
        %v349 = vld [vmem:[%s320] sm:$0xf]
        %v350 = vld [vmem:[%s320 + $0x4] sm:$0xf]
        %v351 = vld [vmem:[%s320 + $0x8] sm:$0xf]
        %v352 = vld [vmem:[%s320 + $0xc] sm:$0xf]
        %v353 = vld [vmem:[%s320 + $0x10] sm:$0xf]
        %v354 = vld [vmem:[%s320 + $0x14] sm:$0xf]
        %v355 = vld [vmem:[%s320 + $0x18] sm:$0xf]
        %v356 = vld [vmem:[%s320 + $0x1c] sm:$0xf]
        %v357 = vld [vmem:[%s320 + $0x20] sm:$0xf]
        %v358 = vld [vmem:[%s320 + $0x24] sm:$0xf]
        %v359 = vld [vmem:[%s320 + $0x28] sm:$0xf]
        %v360 = vld [vmem:[%s320 + $0x2c] sm:$0xf]
        %v361 = vld [vmem:[%s320 + $0x30] sm:$0xf]
        %v362 = vld [vmem:[%s320 + $0x34] sm:$0xf]
        %v363 = vld [vmem:[%s320 + $0x38] sm:$0xf]
        %v364 = vld [vmem:[%s320 + $0x3c] sm:$0xf]
        %v365 = vld [vmem:[%s320 + $0x40] sm:$0xf]
        %v366 = vld [vmem:[%s320 + $0x44] sm:$0xf]
        %v367 = vld [vmem:[%s320 + $0x48] sm:$0xf]
        %v368 = vld [vmem:[%s320 + $0x4c] sm:$0xf]
        %v369 = vld [vmem:[%s320 + $0x50] sm:$0xf]
        %v370 = vld [vmem:[%s320 + $0x54] sm:$0xf]
        %v371 = vld [vmem:[%s320 + $0x58] sm:$0xf]
        %v372 = vld [vmem:[%s320 + $0x5c] sm:$0xf]
        %v373 = vld [vmem:[%s320 + $0x60] sm:$0xf]
        %v374 = vld [vmem:[%s320 + $0x64] sm:$0xf]
        %v375 = vld [vmem:[%s320 + $0x68] sm:$0xf]
        %v376 = vld [vmem:[%s320 + $0x6c] sm:$0xf]
        %v377 = vld [vmem:[%s320 + $0x70] sm:$0xf]
        %v378 = vld [vmem:[%s320 + $0x74] sm:$0xf]
        %v379 = vld [vmem:[%s320 + $0x78] sm:$0xf]
        %v380 = vld [vmem:[%s320 + $0x7c] sm:$0xf]
        %v381 = vld [vmem:[%s344] sm:$0x1]
        %v383 = vperm.slane %v381, 0
        %386 = vst [vmem:[#allocation1] ss:$9 sm:$0xff] %v348
        %v387 = vld [vmem:[#allocation1] sm:$0xff]
        %v388 = vld [vmem:[#allocation1 + $0x9] sm:$0xff]
        %v423 = vunpack.c.l.b16 %v349
        %v424 = vunpack.c.l.b16 %v350
        %v425 = vunpack.c.l.b16 %v351
        %v426 = vunpack.c.l.b16 %v352
        %v427 = vunpack.c.l.b16 %v353
        %v428 = vunpack.c.l.b16 %v354
        %v429 = vunpack.c.l.b16 %v355
        %v430 = vunpack.c.l.b16 %v356
        %v431 = vunpack.c.l.b16 %v357
        %v432 = vunpack.c.l.b16 %v358
        %v433 = vunpack.c.l.b16 %v359
        %v434 = vunpack.c.l.b16 %v360
        %v435 = vunpack.c.l.b16 %v361
        %v436 = vunpack.c.l.b16 %v362
        %v437 = vunpack.c.l.b16 %v363
        %v438 = vunpack.c.l.b16 %v364
        %v439 = vunpack.c.l.b16 %v365
        %v440 = vunpack.c.l.b16 %v366
        %v441 = vunpack.c.l.b16 %v367
        %v442 = vunpack.c.l.b16 %v368
        %v443 = vunpack.c.l.b16 %v369
        %v444 = vunpack.c.l.b16 %v370
        %v445 = vunpack.c.l.b16 %v371
        %v446 = vunpack.c.l.b16 %v372
        %v447 = vunpack.c.l.b16 %v373
        %v448 = vunpack.c.l.b16 %v374
        %v449 = vunpack.c.l.b16 %v375
        %v450 = vunpack.c.l.b16 %v376
        %v451 = vunpack.c.l.b16 %v377
        %v452 = vunpack.c.l.b16 %v378
        %v453 = vunpack.c.l.b16 %v379
        %v454 = vunpack.c.l.b16 %v380
        %v455 = vpack.c.b16 %v424, %v423
        %v456 = vpack.c.b16 %v426, %v425
        %v457 = vpack.c.b16 %v428, %v427
        %v458 = vpack.c.b16 %v430, %v429
        %v459 = vpack.c.b16 %v432, %v431
        %v460 = vpack.c.b16 %v434, %v433
        %v461 = vpack.c.b16 %v436, %v435
        %v462 = vpack.c.b16 %v438, %v437
        %v463 = vpack.c.b16 %v440, %v439
        %v464 = vpack.c.b16 %v442, %v441
        %v465 = vpack.c.b16 %v444, %v443
        %v466 = vpack.c.b16 %v446, %v445
        %v467 = vpack.c.b16 %v448, %v447
        %v468 = vpack.c.b16 %v450, %v449
        %v469 = vpack.c.b16 %v452, %v451
        %v470 = vpack.c.b16 %v454, %v453
        %487 = vmatpush.bf16.msra.mxu0 %v462
        %488 = vmatpush.bf16.msra.mxu0 %v461
        %489 = vmatpush.bf16.msra.mxu0 %v460
        %490 = vmatpush.bf16.msra.mxu0 %v459
        %491 = vmatpush.bf16.msra.mxu0 %v458
        %492 = vmatpush.bf16.msra.mxu0 %v457
        %493 = vmatpush.bf16.msra.mxu0 %v456
        %494 = vmatpush.bf16.msra.mxu0 %v455
        %495 = vmatmul.bf16.gmra.mxu0 %v387
        %v496 = vpop.f32.mrf.mxu0
        %v497 = vadd.f32 %v383, %v496
        %v498 = vpop.f32.mrf.mxu0
        %499 = vdwg.mxu0
        %500 = vmatpush.bf16.msra.mxu0 %v470
        %501 = vmatpush.bf16.msra.mxu0 %v469
        %502 = vmatpush.bf16.msra.mxu0 %v468
        %503 = vmatpush.bf16.msra.mxu0 %v467
        %504 = vmatpush.bf16.msra.mxu0 %v466
        %505 = vmatpush.bf16.msra.mxu0 %v465
        %506 = vmatpush.bf16.msra.mxu0 %v464
        %507 = vmatpush.bf16.msra.mxu0 %v463
        %508 = vmatmul.bf16.gmra.mxu0 %v388
        %v509 = vpop.f32.mrf.mxu0
        %v510 = vadd.f32 %v497, %v509
        %v511 = vpop.f32.mrf.mxu0
        %512 = vdwg.mxu0
        %v513 = vmax.f32 %v510, 0.0
        %v514 = vpack.c.bf16 %v513, %v513
        %515 = vst [vmem:[%s347] sm:$0x1] %v514
        %p516 = scmp.lt.s32.totalorder %s14, 1
        %s517 = scalar_select %p516, %s14, 1
        %s518 = scalar_lea.vmem %s3, %s517
        // Predicated region
        $region74: #{_lambda_.10} parent=68 // pred_check
          %p519 = pneg %p105
        $region75: #{_lambda_.10} parent=68 // pred_check_branch
          %521 = sbr.rel (%p519) target = $region77
        $region76: #{_lambda_.10} parent=68 // pred_region
          _
        $region77: #{_lambda_.10} parent=68 // pred_fallthru
          _
      $region69: #{_lambda_.10} parent=5 // pred_fallthru
        _
      %p522 = scmp.le.s32.totalorder 2, %s9
      // Predicated region
      $region78: #{_lambda_.10} parent=5 // pred_check
        %p523 = pneg %p522
      $region79: #{_lambda_.10} parent=5 // pred_check_branch
        %525 = sbr.rel (%p523) target = $region81
      $region80: #{_lambda_.10} parent=5 // pred_region
        %s526 = ssub.s32 %s9, 2
        // Predicated region
        $region82: #{_lambda_.10} parent=80 // pred_check
          %p527 = pneg %p111
        $region83: #{_lambda_.10} parent=80 // pred_check_branch
          %529 = sbr.rel (%p527) target = $region85
        $region84: #{_lambda_.10} parent=80 // pred_region
          %p530 = scmp.lt.s32.totalorder %s15, 1
          %s531 = scalar_select %p530, %s15, 1
          %s532 = scalar_lea.vmem %s3, %s531
        $region85: #{_lambda_.10} parent=80 // pred_fallthru
          _
      $region81: #{_lambda_.10} parent=5 // pred_fallthru
        _
    $region6: #{_lambda_.10} parent=1 // loop_footer
      %s13 = sadd.s32 1, %s9
    $region7: #{_lambda_.10} parent=1 // loop_footer_branch
      %8 = sbr.rel target = $region3
    $region8: #{_lambda_.10} parent=1 // loop_exit
      _

// kernel: _lambda_.8
$region0: #{_lambda_.8}
  #allocation0 [shape = 'u32[]', space=smem, size = 0x4, offset = 0x4, fixed_abs, tag = 'smem constant byte address 0x4 - core index']
  #allocation1 [shape = 'u32[72,128]{1,0:T(1,128)}', space=vmem, size = 0x9000, scoped, tag = 'internal scratch']
  #allocation2 [shape = 'f32[104,32]{1,0:T(8,128)}', space=vmem, size = 0xd000, scoped, tag = 'scratch operand']
  #allocation3 [shape = 'f32[64,32]{1,0:T(8,128)}', space=vmem, size = 0x8000, scoped, tag = 'scratch operand']
  #allocation4 [shape = 'f32[32,32]{1,0:T(8,128)}', space=vmem, size = 0x4000, scoped, tag = 'scratch operand']
  %s0 = inlined_call_operand.vmem [shape: bf16[2,176,32], index: 0, kind: input, shape index: {}]
  %s1 = inlined_call_operand.vmem [shape: bf16[9,32,32], index: 1, kind: input, shape index: {}]
  %s2 = inlined_call_operand.vmem [shape: f32[1,32], index: 2, kind: input, shape index: {}]
  %s3 = inlined_call_operand.vmem [shape: bf16[2,4,4,32], index: 3, kind: output, shape index: {}]
  %s4 = sld [smem:[#allocation0]]
  $region45: #{_lambda_.8} parent=0
    _
  %s6 = ssub.s32 1, %s4
  %s7 = scalar_select 0, %s6, %s4
  loop: start=0, step=1, limit=6
  $region2: #{_lambda_.8} parent=0 // loop_pre_header
    _
  $region3: #{_lambda_.8} parent=0 // loop_header
    %s9 = sphi 0, %s13
    %p10 = scmp.ge.s32.totalorder %s9, 6
    %s16 = sphi 0, %s28
    %s17 = sphi 0, %s24
    %s18 = sphi 0, %s16
    %s19 = sphi 0, %s17
    %s20 = sphi 0, %s18
    %s21 = sphi 0, %s19
    %s31 = sphi 0, %s33
    %s34 = sphi 0, %s31
    %s35 = sphi 0, %s34
    %s51 = sphi 0, %s35
    %s55 = sphi 0, %s55
    %s57 = sphi 0, %s55
    %s58 = sphi 0, %s57
    %s72 = sphi 0, %s58
    %s76 = sphi 0, %s76
    %s78 = sphi 0, %s76
    %s79 = sphi 0, %s78
    %s93 = sphi 0, %s79
    %s101 = sphi 0, %s103
    %s104 = sphi 0, %s101
    %s105 = sphi 0, %s104
    %s121 = sphi 0, %s105
  $region4: #{_lambda_.8} parent=0 // loop_header_branch
    %12 = sbr.rel (%p10) target = $region8
  $region5: #{_lambda_.8} parent=0 // loop_body
    %s14 = ssub.s32 %s9, 1
    %s15 = ssub.s32 %s9, 2
    %s22 = sadd.s32 1, %s17
    %p23 = scmp.ge.s32.totalorder %s22, 2
    %s24 = scalar_select %p23, 0, %s22
    %s25 = sadd.s32 1, %s16
    %s26 = scalar_select %p23, %s25, %s16
    %p27 = scmp.ge.s32.totalorder %s26, 2
    %s28 = scalar_select %p27, 0, %s26
    %s29 = ssub.s32 %s16, %s28
    %p30 = scmp.eq.s32.totalorder %s29, 0
    %s32 = sadd.s32 %s31, 1
    %s33 = scalar_select %p30, %s31, %s32
    %p36 = pneg %p30
    %p37 = scmp.eq.s32.totalorder %s9, 3
    %p38 = por %p36, %p37
    %p39 = scmp.ne.s32.totalorder %s31, %s34
    %p40 = scmp.eq.s32.totalorder %s9, 0
    %p41 = por %p39, %p40
    %p42 = scmp.ne.s32.totalorder %s31, %s34
    %p43 = scmp.eq.s32.totalorder %s14, 3
    %p44 = por %p42, %p43
    %p45 = scmp.ne.s32.totalorder %s34, %s35
    %p46 = scmp.eq.s32.totalorder %s14, 0
    %p47 = por %p45, %p46
    %p48 = scmp.ne.s32.totalorder %s34, %s35
    %p49 = scmp.eq.s32.totalorder %s15, 3
    %p50 = por %p48, %p49
    %p52 = scmp.ne.s32.totalorder %s35, %s51
    %p53 = scmp.eq.s32.totalorder %s15, 0
    %p54 = por %p52, %p53
    %s56 = sadd.s32 %s55, 1
    %p59 = scmp.eq.s32.totalorder %s9, 3
    %p60 = scmp.ne.s32.totalorder %s55, %s57
    %p61 = scmp.eq.s32.totalorder %s9, 0
    %p62 = por %p60, %p61
    %p63 = scmp.ne.s32.totalorder %s55, %s57
    %p64 = scmp.eq.s32.totalorder %s14, 3
    %p65 = por %p63, %p64
    %p66 = scmp.ne.s32.totalorder %s57, %s58
    %p67 = scmp.eq.s32.totalorder %s14, 0
    %p68 = por %p66, %p67
    %p69 = scmp.ne.s32.totalorder %s57, %s58
    %p70 = scmp.eq.s32.totalorder %s15, 3
    %p71 = por %p69, %p70
    %p73 = scmp.ne.s32.totalorder %s58, %s72
    %p74 = scmp.eq.s32.totalorder %s15, 0
    %p75 = por %p73, %p74
    %s77 = sadd.s32 %s76, 1
    %p80 = scmp.eq.s32.totalorder %s9, 3
    %p81 = scmp.ne.s32.totalorder %s76, %s78
    %p82 = scmp.eq.s32.totalorder %s9, 0
    %p83 = por %p81, %p82
    %p84 = scmp.ne.s32.totalorder %s76, %s78
    %p85 = scmp.eq.s32.totalorder %s14, 3
    %p86 = por %p84, %p85
    %p87 = scmp.ne.s32.totalorder %s78, %s79
    %p88 = scmp.eq.s32.totalorder %s14, 0
    %p89 = por %p87, %p88
    %p90 = scmp.ne.s32.totalorder %s78, %s79
    %p91 = scmp.eq.s32.totalorder %s15, 3
    %p92 = por %p90, %p91
    %p94 = scmp.ne.s32.totalorder %s79, %s93
    %p95 = scmp.eq.s32.totalorder %s15, 0
    %p96 = por %p94, %p95
    %s97 = ssub.s32 %s16, %s28
    %s98 = ssub.s32 %s17, %s24
    %s99 = sor.u32 %s97, %s98
    %p100 = scmp.eq.s32.totalorder %s99, 0
    %s102 = sadd.s32 %s101, 1
    %s103 = scalar_select %p100, %s101, %s102
    %p106 = pneg %p100
    %p107 = scmp.eq.s32.totalorder %s9, 3
    %p108 = por %p106, %p107
    %p109 = scmp.ne.s32.totalorder %s101, %s104
    %p110 = scmp.eq.s32.totalorder %s9, 0
    %p111 = por %p109, %p110
    %p112 = scmp.ne.s32.totalorder %s101, %s104
    %p113 = scmp.eq.s32.totalorder %s14, 3
    %p114 = por %p112, %p113
    %p115 = scmp.ne.s32.totalorder %s104, %s105
    %p116 = scmp.eq.s32.totalorder %s14, 0
    %p117 = por %p115, %p116
    %p118 = scmp.ne.s32.totalorder %s104, %s105
    %p119 = scmp.eq.s32.totalorder %s15, 3
    %p120 = por %p118, %p119
    %p122 = scmp.ne.s32.totalorder %s105, %s121
    %p123 = scmp.eq.s32.totalorder %s15, 0
    %p124 = por %p122, %p123
    %p125 = scmp.le.s32.totalorder 1, %s9
    %p126 = scmp.lt.s32.totalorder %s9, 5
    %p127 = pnand %p125, %p126
    %p128 = pneg %p127
    // Predicated region
    $region9: #{_lambda_.8} parent=5 // pred_check
      _
    $region10: #{_lambda_.8} parent=5 // pred_check_branch
      %130 = sbr.rel (%p127) target = $region12
    $region11: #{_lambda_.8} parent=5 // pred_region
      %s131 = ssub.s32 %s9, 1
      // Predicated region
      $region13: #{_lambda_.8} parent=11 // pred_check
        %p132 = pneg %p68
      $region14: #{_lambda_.8} parent=11 // pred_check_branch
        %134 = sbr.rel (%p132) target = $region16
      $region15: #{_lambda_.8} parent=11 // pred_region
        _
      $region16: #{_lambda_.8} parent=11 // pred_fallthru
        _
      // Predicated region
      $region17: #{_lambda_.8} parent=11 // pred_check
        %p135 = pneg %p89
      $region18: #{_lambda_.8} parent=11 // pred_check_branch
        %137 = sbr.rel (%p135) target = $region20
      $region19: #{_lambda_.8} parent=11 // pred_region
        _
      $region20: #{_lambda_.8} parent=11 // pred_fallthru
        _
    $region12: #{_lambda_.8} parent=5 // pred_fallthru
      _
    %p138 = scmp.lt.s32.totalorder %s9, 4
    // Predicated region
    $region21: #{_lambda_.8} parent=5 // pred_check
      %p139 = pneg %p138
    $region22: #{_lambda_.8} parent=5 // pred_check_branch
      %141 = sbr.rel (%p139) target = $region24
    $region23: #{_lambda_.8} parent=5 // pred_region
      // Predicated region
      $region25: #{_lambda_.8} parent=23 // pred_check
        %p142 = pneg %p41
      $region26: #{_lambda_.8} parent=23 // pred_check_branch
        %144 = sbr.rel (%p142) target = $region28
      $region27: #{_lambda_.8} parent=23 // pred_region
        %p145 = scmp.lt.s32.totalorder %s16, 1
        %s146 = scalar_select %p145, %s16, 1
        %s147 = smul.addr %s146, 22
        %s148 = smul.addr %s147, 4
        %s149 = scalar_lea.vmem %s0, %s148
      $region28: #{_lambda_.8} parent=23 // pred_fallthru
        _
    $region24: #{_lambda_.8} parent=5 // pred_fallthru
      _
    %p150 = scmp.le.s32.totalorder 1, %s9
    %p151 = scmp.lt.s32.totalorder %s9, 5
    %p152 = pnand %p150, %p151
    %p153 = pneg %p152
    // Predicated region
    $region29: #{_lambda_.8} parent=5 // pred_check
      _
    $region30: #{_lambda_.8} parent=5 // pred_check_branch
      %155 = sbr.rel (%p152) target = $region32
    $region31: #{_lambda_.8} parent=5 // pred_region
      %s156 = ssub.s32 %s9, 1
      %p157 = scmp.lt.s32.totalorder %s18, 1
      %s158 = scalar_select %p157, %s18, 1
      %s159 = smul.addr %s158, 22
      %s160 = smul.addr %s159, 4
      %s161 = scalar_lea.vmem %s0, %s160
      %p162 = pneg %p47
      %p163 = pneg %p44
      %p164 = pneg %p68
      %p165 = pneg %p65
      %p166 = pneg %p89
      %p167 = pneg %p86
      %p168 = pneg %p117
      %p169 = pneg %p114
      %s170 = smul.u32 2, %s19
      %p171 = scmp.lt.s32.totalorder %s18, 1
      %s172 = scalar_select %p171, %s18, 1
      %p173 = scmp.lt.s32.totalorder %s170, 3
      %s174 = scalar_select %p173, %s170, 3
      %s175 = smul.addr %s172, 4
      %s176 = sadd.s32 %s174, %s175
      %s177 = smul.addr %s176, 2
      %s178 = scalar_lea.vmem %s3, %s177
      %p179 = scmp.lt.s32.totalorder %s18, 1
      %s180 = scalar_select %p179, %s18, 1
      %s181 = smul.addr %s180, 22
      %s182 = smul.addr %s181, 4
      %s183 = scalar_lea.vmem %s0, %s182
      %s184 = smul.u32 2, %s19
      %p185 = scmp.lt.s32.totalorder %s18, 1
      %s186 = scalar_select %p185, %s18, 1
      %p187 = scmp.lt.s32.totalorder %s184, 3
      %s188 = scalar_select %p187, %s184, 3
      %s189 = smul.addr %s186, 4
      %s190 = sadd.s32 %s188, %s189
      %s191 = smul.addr %s190, 2
      %s192 = scalar_lea.vmem %s3, %s191
      %s193 = smul.u32 2, %s19
      %s195 = smul.u32 %s19, 64
      %s196 = sshra.s32 %s195, 3
      %s197 = sand.u32 %s195, 7
      %s198 = smul.addr %s196, 4
      %s199 = scalar_lea.vmem %s183, %s198
      %v200 = vld [vmem:[%s199] sm:$0xf]
      %v201 = vld [vmem:[%s199 + $0x4] sm:$0xf]
      %v202 = vld [vmem:[%s199 + $0x8] sm:$0xf]
      %v203 = vld [vmem:[%s199 + $0xc] sm:$0xf]
      %v204 = vld [vmem:[%s199 + $0x10] sm:$0xf]
      %v205 = vld [vmem:[%s199 + $0x14] sm:$0xf]
      %v206 = vld [vmem:[%s199 + $0x18] sm:$0xf]
      %v207 = vld [vmem:[%s199 + $0x1c] sm:$0xf]
      %v208 = vld [vmem:[%s199 + $0x20] sm:$0xf]
      %v209 = vld [vmem:[%s199 + $0x24] sm:$0xf]
      %v210 = vld [vmem:[%s199 + $0x28] sm:$0xf]
      %v211 = vld [vmem:[%s199 + $0x2c] sm:$0xf]
      %v212 = vld [vmem:[%s199 + $0x30] sm:$0xf]
      %v213 = vunpack.c.l.bf16 %v200
      %v214 = vunpack.c.l.bf16 %v201
      %v215 = vunpack.c.l.bf16 %v202
      %v216 = vunpack.c.l.bf16 %v203
      %v217 = vunpack.c.l.bf16 %v204
      %v218 = vunpack.c.l.bf16 %v205
      %v219 = vunpack.c.l.bf16 %v206
      %v220 = vunpack.c.l.bf16 %v207
      %v221 = vunpack.c.l.bf16 %v208
      %v222 = vunpack.c.l.bf16 %v209
      %v223 = vunpack.c.l.bf16 %v210
      %v224 = vunpack.c.l.bf16 %v211
      %v225 = vunpack.c.l.bf16 %v212
      %vm226 = vcmask 261120
      %227 = vst.msk [vmem:[#allocation2] sm:$0xff] %vm226, %v213
      %228 = vst.msk [vmem:[#allocation2 + $0x8] sm:$0xff] %vm226, %v214
      %229 = vst.msk [vmem:[#allocation2 + $0x10] sm:$0xff] %vm226, %v215
      %230 = vst.msk [vmem:[#allocation2 + $0x18] sm:$0xff] %vm226, %v216
      %231 = vst.msk [vmem:[#allocation2 + $0x20] sm:$0xff] %vm226, %v217
      %232 = vst.msk [vmem:[#allocation2 + $0x28] sm:$0xff] %vm226, %v218
      %233 = vst.msk [vmem:[#allocation2 + $0x30] sm:$0xff] %vm226, %v219
      %234 = vst.msk [vmem:[#allocation2 + $0x38] sm:$0xff] %vm226, %v220
      %235 = vst.msk [vmem:[#allocation2 + $0x40] sm:$0xff] %vm226, %v221
      %236 = vst.msk [vmem:[#allocation2 + $0x48] sm:$0xff] %vm226, %v222
      %237 = vst.msk [vmem:[#allocation2 + $0x50] sm:$0xff] %vm226, %v223
      %238 = vst.msk [vmem:[#allocation2 + $0x58] sm:$0xff] %vm226, %v224
      %239 = vst.msk [vmem:[#allocation2 + $0x60] sm:$0xff] %vm226, %v225
      %v240 = vld [vmem:[#allocation2] sm:$0xff]
      %v241 = vld [vmem:[#allocation2 + $0x8] sm:$0xff]
      %v242 = vld [vmem:[#allocation2 + $0x10] sm:$0xff]
      %v243 = vld [vmem:[#allocation2 + $0x18] sm:$0xff]
      %v244 = vld [vmem:[#allocation2 + $0x20] sm:$0xff]
      %v245 = vld [vmem:[#allocation2 + $0x28] sm:$0xff]
      %v246 = vld [vmem:[#allocation2 + $0x30] sm:$0xff]
      %v247 = vld [vmem:[#allocation2 + $0x38] sm:$0xff]
      %v248 = vpack.c.bf16 %v241, %v240
      %v249 = vpack.c.bf16 %v243, %v242
      %v250 = vpack.c.bf16 %v245, %v244
      %v251 = vpack.c.bf16 %v247, %v246
      %v252 = vld [vmem:[%s1] sm:$0xf]
      %v253 = vld [vmem:[%s1 + $0x4] sm:$0xf]
      %v254 = vld [vmem:[%s1 + $0x8] sm:$0xf]
      %v255 = vld [vmem:[%s1 + $0xc] sm:$0xf]
      %v256 = vld [vmem:[#allocation2 + $0x1] sm:$0xff]
      %v257 = vld [vmem:[#allocation2 + $0x9] sm:$0xff]
      %v258 = vld [vmem:[#allocation2 + $0x11] sm:$0xff]
      %v259 = vld [vmem:[#allocation2 + $0x19] sm:$0xff]
      %v260 = vld [vmem:[#allocation2 + $0x21] sm:$0xff]
      %v261 = vld [vmem:[#allocation2 + $0x29] sm:$0xff]
      %v262 = vld [vmem:[#allocation2 + $0x31] sm:$0xff]
      %v263 = vld [vmem:[#allocation2 + $0x39] sm:$0xff]
      %v264 = vpack.c.bf16 %v257, %v256
      %v265 = vpack.c.bf16 %v259, %v258
      %v266 = vpack.c.bf16 %v261, %v260
      %v267 = vpack.c.bf16 %v263, %v262
      %s268 = scalar_lea.vmem %s1, 16
      %v269 = vld [vmem:[%s268] sm:$0xf]
      %v270 = vld [vmem:[%s268 + $0x4] sm:$0xf]
      %v271 = vld [vmem:[%s268 + $0x8] sm:$0xf]
      %v272 = vld [vmem:[%s268 + $0xc] sm:$0xf]
      %v277 = vunpack.c.l.b16 %v269
      %v278 = vunpack.c.l.b16 %v270
      %v279 = vunpack.c.l.b16 %v271
      %v280 = vunpack.c.l.b16 %v272
      %v281 = vpack.c.b16 %v278, %v277
      %v282 = vpack.c.b16 %v280, %v279
      %v286 = vsel %vm226, %v264, 0
      %v289 = vsel %vm226, %v265, 0
      %v292 = vsel %vm226, %v266, 0
      %v295 = vsel %vm226, %v267, 0
      %297 = vmatpush.bf16.msra.mxu0 0
      %298 = vmatpush.bf16.msra.mxu0 0
      %299 = vmatpush.bf16.msra.mxu0 0
      %300 = vmatpush.bf16.msra.mxu0 0
      %301 = vmatpush.bf16.msra.mxu0 0
      %302 = vmatpush.bf16.msra.mxu0 0
      %303 = vmatpush.bf16.msra.mxu0 %v282
      %304 = vmatpush.bf16.msra.mxu0 %v281
      %305 = vmatmul.bf16.gmra.mxu0 %v286
      %v306 = vpop.f32.mrf.mxu0
      %v307 = vadd.f32 0.0, %v306
      %v308 = vpop.f32.mrf.mxu0
      %v309 = vadd.f32 0.0, %v308
      %310 = vmatmul.bf16.gmra.mxu0 %v289
      %v311 = vpop.f32.mrf.mxu0
      %v312 = vadd.f32 0.0, %v311
      %v313 = vpop.f32.mrf.mxu0
      %v314 = vadd.f32 0.0, %v313
      %315 = vmatmul.bf16.gmra.mxu0 %v292
      %v316 = vpop.f32.mrf.mxu0
      %v317 = vadd.f32 0.0, %v316
      %v318 = vpop.f32.mrf.mxu0
      %v319 = vadd.f32 0.0, %v318
      %320 = vmatmul.bf16.gmra.mxu0 %v295
      %v321 = vpop.f32.mrf.mxu0
      %v322 = vadd.f32 0.0, %v321
      %v323 = vpop.f32.mrf.mxu0
      %v324 = vadd.f32 0.0, %v323
      %325 = vdwg.mxu0
      %v330 = vunpack.c.l.b16 %v252
      %v331 = vunpack.c.l.b16 %v253
      %v332 = vunpack.c.l.b16 %v254
      %v333 = vunpack.c.l.b16 %v255
      %v334 = vpack.c.b16 %v331, %v330
      %v335 = vpack.c.b16 %v333, %v332
      %v339 = vsel %vm226, %v248, 0
      %v342 = vsel %vm226, %v249, 0
      %v345 = vsel %vm226, %v250, 0
      %v348 = vsel %vm226, %v251, 0
      %350 = vmatpush.bf16.msra.mxu0 0
      %351 = vmatpush.bf16.msra.mxu0 0
      %352 = vmatpush.bf16.msra.mxu0 0
      %353 = vmatpush.bf16.msra.mxu0 0
      %354 = vmatpush.bf16.msra.mxu0 0
      %355 = vmatpush.bf16.msra.mxu0 0
      %356 = vmatpush.bf16.msra.mxu0 %v335
      %357 = vmatpush.bf16.msra.mxu0 %v334
      %358 = vmatmul.bf16.gmra.mxu0 %v339
      %v359 = vpop.f32.mrf.mxu0
      %v360 = vadd.f32 %v307, %v359
      %v361 = vpop.f32.mrf.mxu0
      %v362 = vadd.f32 %v309, %v361
      %363 = vmatmul.bf16.gmra.mxu0 %v342
      %v364 = vpop.f32.mrf.mxu0
      %v365 = vadd.f32 %v312, %v364
      %v366 = vpop.f32.mrf.mxu0
      %v367 = vadd.f32 %v314, %v366
      %368 = vmatmul.bf16.gmra.mxu0 %v345
      %v369 = vpop.f32.mrf.mxu0
      %v370 = vadd.f32 %v317, %v369
      %v371 = vpop.f32.mrf.mxu0
      %v372 = vadd.f32 %v319, %v371
      %373 = vmatmul.bf16.gmra.mxu0 %v348
      %v374 = vpop.f32.mrf.mxu0
      %v375 = vadd.f32 %v322, %v374
      %v376 = vpop.f32.mrf.mxu0
      %v377 = vadd.f32 %v324, %v376
      %378 = vdwg.mxu0
      %v379 = vld [vmem:[#allocation2 + $0x2] sm:$0xff]
      %v380 = vld [vmem:[#allocation2 + $0xa] sm:$0xff]
      %v381 = vld [vmem:[#allocation2 + $0x12] sm:$0xff]
      %v382 = vld [vmem:[#allocation2 + $0x1a] sm:$0xff]
      %v383 = vld [vmem:[#allocation2 + $0x22] sm:$0xff]
      %v384 = vld [vmem:[#allocation2 + $0x2a] sm:$0xff]
      %v385 = vld [vmem:[#allocation2 + $0x32] sm:$0xff]
      %v386 = vld [vmem:[#allocation2 + $0x3a] sm:$0xff]
      %v387 = vpack.c.bf16 %v380, %v379
      %v388 = vpack.c.bf16 %v382, %v381
      %v389 = vpack.c.bf16 %v384, %v383
      %v390 = vpack.c.bf16 %v386, %v385
      %s391 = scalar_lea.vmem %s1, 32
      %v392 = vld [vmem:[%s391] sm:$0xf]
      %v393 = vld [vmem:[%s391 + $0x4] sm:$0xf]
      %v394 = vld [vmem:[%s391 + $0x8] sm:$0xf]
      %v395 = vld [vmem:[%s391 + $0xc] sm:$0xf]
      %v400 = vunpack.c.l.b16 %v392
      %v401 = vunpack.c.l.b16 %v393
      %v402 = vunpack.c.l.b16 %v394
      %v403 = vunpack.c.l.b16 %v395
      %v404 = vpack.c.b16 %v401, %v400
      %v405 = vpack.c.b16 %v403, %v402
      %v409 = vsel %vm226, %v387, 0
      %v412 = vsel %vm226, %v388, 0
      %v415 = vsel %vm226, %v389, 0
      %v418 = vsel %vm226, %v390, 0
      %420 = vmatpush.bf16.msra.mxu0 0
      %421 = vmatpush.bf16.msra.mxu0 0
      %422 = vmatpush.bf16.msra.mxu0 0
      %423 = vmatpush.bf16.msra.mxu0 0
      %424 = vmatpush.bf16.msra.mxu0 0
      %425 = vmatpush.bf16.msra.mxu0 0
      %426 = vmatpush.bf16.msra.mxu0 %v405
      %427 = vmatpush.bf16.msra.mxu0 %v404
      %428 = vmatmul.bf16.gmra.mxu0 %v409
      %v429 = vpop.f32.mrf.mxu0
      %v430 = vadd.f32 0.0, %v429
      %v431 = vpop.f32.mrf.mxu0
      %v432 = vadd.f32 0.0, %v431
      %433 = vmatmul.bf16.gmra.mxu0 %v412
      %v434 = vpop.f32.mrf.mxu0
      %v435 = vadd.f32 0.0, %v434
      %v436 = vpop.f32.mrf.mxu0
      %v437 = vadd.f32 0.0, %v436
      %438 = vmatmul.bf16.gmra.mxu0 %v415
      %v439 = vpop.f32.mrf.mxu0
      %v440 = vadd.f32 0.0, %v439
      %v441 = vpop.f32.mrf.mxu0
      %v442 = vadd.f32 0.0, %v441
      %443 = vmatmul.bf16.gmra.mxu0 %v418
      %v444 = vpop.f32.mrf.mxu0
      %v445 = vadd.f32 0.0, %v444
      %v446 = vpop.f32.mrf.mxu0
      %v447 = vadd.f32 0.0, %v446
      %448 = vdwg.mxu0
      %v449 = vadd.f32 %v360, %v430
      %v450 = vadd.f32 %v362, %v432
      %v451 = vadd.f32 %v365, %v435
      %v452 = vadd.f32 %v367, %v437
      %v453 = vadd.f32 %v370, %v440
      %v454 = vadd.f32 %v372, %v442
      %v455 = vadd.f32 %v375, %v445
      %v456 = vadd.f32 %v377, %v447
      %v457 = vld [vmem:[#allocation2 + $0x10] sm:$0xff]
      %v458 = vld [vmem:[#allocation2 + $0x18] sm:$0xff]
      %v459 = vld [vmem:[#allocation2 + $0x20] sm:$0xff]
      %v460 = vld [vmem:[#allocation2 + $0x28] sm:$0xff]
      %v461 = vld [vmem:[#allocation2 + $0x30] sm:$0xff]
      %v462 = vld [vmem:[#allocation2 + $0x38] sm:$0xff]
      %v463 = vld [vmem:[#allocation2 + $0x40] sm:$0xff]
      %v464 = vld [vmem:[#allocation2 + $0x48] sm:$0xff]
      %v465 = vpack.c.bf16 %v458, %v457
      %v466 = vpack.c.bf16 %v460, %v459
      %v467 = vpack.c.bf16 %v462, %v461
      %v468 = vpack.c.bf16 %v464, %v463
      %s469 = scalar_lea.vmem %s1, 48
      %v470 = vld [vmem:[%s469] sm:$0xf]
      %v471 = vld [vmem:[%s469 + $0x4] sm:$0xf]
      %v472 = vld [vmem:[%s469 + $0x8] sm:$0xf]
      %v473 = vld [vmem:[%s469 + $0xc] sm:$0xf]
      %v478 = vunpack.c.l.b16 %v470
      %v479 = vunpack.c.l.b16 %v471
      %v480 = vunpack.c.l.b16 %v472
      %v481 = vunpack.c.l.b16 %v473
      %v482 = vpack.c.b16 %v479, %v478
      %v483 = vpack.c.b16 %v481, %v480
      %v487 = vsel %vm226, %v465, 0
      %v490 = vsel %vm226, %v466, 0
      %v493 = vsel %vm226, %v467, 0
      %v496 = vsel %vm226, %v468, 0
      %498 = vmatpush.bf16.msra.mxu0 0
      %499 = vmatpush.bf16.msra.mxu0 0
      %500 = vmatpush.bf16.msra.mxu0 0
      %501 = vmatpush.bf16.msra.mxu0 0
      %502 = vmatpush.bf16.msra.mxu0 0
      %503 = vmatpush.bf16.msra.mxu0 0
      %504 = vmatpush.bf16.msra.mxu0 %v483
      %505 = vmatpush.bf16.msra.mxu0 %v482
      %506 = vmatmul.bf16.gmra.mxu0 %v487
      %v507 = vpop.f32.mrf.mxu0
      %v508 = vadd.f32 0.0, %v507
      %v509 = vpop.f32.mrf.mxu0
      %v510 = vadd.f32 0.0, %v509
      %511 = vmatmul.bf16.gmra.mxu0 %v490
      %v512 = vpop.f32.mrf.mxu0
      %v513 = vadd.f32 0.0, %v512
      %v514 = vpop.f32.mrf.mxu0
      %v515 = vadd.f32 0.0, %v514
      %516 = vmatmul.bf16.gmra.mxu0 %v493
      %v517 = vpop.f32.mrf.mxu0
      %v518 = vadd.f32 0.0, %v517
      %v519 = vpop.f32.mrf.mxu0
      %v520 = vadd.f32 0.0, %v519
      %521 = vmatmul.bf16.gmra.mxu0 %v496
      %v522 = vpop.f32.mrf.mxu0
      %v523 = vadd.f32 0.0, %v522
      %v524 = vpop.f32.mrf.mxu0
      %v525 = vadd.f32 0.0, %v524
      %526 = vdwg.mxu0
      %v527 = vadd.f32 %v449, %v508
      %v528 = vadd.f32 %v450, %v510
      %v529 = vadd.f32 %v451, %v513
      %v530 = vadd.f32 %v452, %v515
      %v531 = vadd.f32 %v453, %v518
      %v532 = vadd.f32 %v454, %v520
      %v533 = vadd.f32 %v455, %v523
      %v534 = vadd.f32 %v456, %v525
      %v535 = vld [vmem:[#allocation2 + $0x11] sm:$0xff]
      %v536 = vld [vmem:[#allocation2 + $0x19] sm:$0xff]
      %v537 = vld [vmem:[#allocation2 + $0x21] sm:$0xff]
      %v538 = vld [vmem:[#allocation2 + $0x29] sm:$0xff]
      %v539 = vld [vmem:[#allocation2 + $0x31] sm:$0xff]
      %v540 = vld [vmem:[#allocation2 + $0x39] sm:$0xff]
      %v541 = vld [vmem:[#allocation2 + $0x41] sm:$0xff]
      %v542 = vld [vmem:[#allocation2 + $0x49] sm:$0xff]
      %v543 = vpack.c.bf16 %v536, %v535
      %v544 = vpack.c.bf16 %v538, %v537
      %v545 = vpack.c.bf16 %v540, %v539
      %v546 = vpack.c.bf16 %v542, %v541
      %s547 = scalar_lea.vmem %s1, 64
      %v548 = vld [vmem:[%s547] sm:$0xf]
      %v549 = vld [vmem:[%s547 + $0x4] sm:$0xf]
      %v550 = vld [vmem:[%s547 + $0x8] sm:$0xf]
      %v551 = vld [vmem:[%s547 + $0xc] sm:$0xf]
      %v556 = vunpack.c.l.b16 %v548
      %v557 = vunpack.c.l.b16 %v549
      %v558 = vunpack.c.l.b16 %v550
      %v559 = vunpack.c.l.b16 %v551
      %v560 = vpack.c.b16 %v557, %v556
      %v561 = vpack.c.b16 %v559, %v558
      %v565 = vsel %vm226, %v543, 0
      %v568 = vsel %vm226, %v544, 0
      %v571 = vsel %vm226, %v545, 0
      %v574 = vsel %vm226, %v546, 0
      %576 = vmatpush.bf16.msra.mxu0 0
      %577 = vmatpush.bf16.msra.mxu0 0
      %578 = vmatpush.bf16.msra.mxu0 0
      %579 = vmatpush.bf16.msra.mxu0 0
      %580 = vmatpush.bf16.msra.mxu0 0
      %581 = vmatpush.bf16.msra.mxu0 0
      %582 = vmatpush.bf16.msra.mxu0 %v561
      %583 = vmatpush.bf16.msra.mxu0 %v560
      %584 = vmatmul.bf16.gmra.mxu0 %v565
      %v585 = vpop.f32.mrf.mxu0
      %v586 = vadd.f32 0.0, %v585
      %v587 = vpop.f32.mrf.mxu0
      %v588 = vadd.f32 0.0, %v587
      %589 = vmatmul.bf16.gmra.mxu0 %v568
      %v590 = vpop.f32.mrf.mxu0
      %v591 = vadd.f32 0.0, %v590
      %v592 = vpop.f32.mrf.mxu0
      %v593 = vadd.f32 0.0, %v592
      %594 = vmatmul.bf16.gmra.mxu0 %v571
      %v595 = vpop.f32.mrf.mxu0
      %v596 = vadd.f32 0.0, %v595
      %v597 = vpop.f32.mrf.mxu0
      %v598 = vadd.f32 0.0, %v597
      %599 = vmatmul.bf16.gmra.mxu0 %v574
      %v600 = vpop.f32.mrf.mxu0
      %v601 = vadd.f32 0.0, %v600
      %v602 = vpop.f32.mrf.mxu0
      %v603 = vadd.f32 0.0, %v602
      %604 = vdwg.mxu0
      %v605 = vadd.f32 %v527, %v586
      %v606 = vadd.f32 %v528, %v588
      %v607 = vadd.f32 %v529, %v591
      %v608 = vadd.f32 %v530, %v593
      %v609 = vadd.f32 %v531, %v596
      %v610 = vadd.f32 %v532, %v598
      %v611 = vadd.f32 %v533, %v601
      %v612 = vadd.f32 %v534, %v603
      %v613 = vld [vmem:[#allocation2 + $0x12] sm:$0xff]
      %v614 = vld [vmem:[#allocation2 + $0x1a] sm:$0xff]
      %v615 = vld [vmem:[#allocation2 + $0x22] sm:$0xff]
      %v616 = vld [vmem:[#allocation2 + $0x2a] sm:$0xff]
      %v617 = vld [vmem:[#allocation2 + $0x32] sm:$0xff]
      %v618 = vld [vmem:[#allocation2 + $0x3a] sm:$0xff]
      %v619 = vld [vmem:[#allocation2 + $0x42] sm:$0xff]
      %v620 = vld [vmem:[#allocation2 + $0x4a] sm:$0xff]
      %v621 = vpack.c.bf16 %v614, %v613
      %v622 = vpack.c.bf16 %v616, %v615
      %v623 = vpack.c.bf16 %v618, %v617
      %v624 = vpack.c.bf16 %v620, %v619
      %s625 = scalar_lea.vmem %s1, 80
      %v626 = vld [vmem:[%s625] sm:$0xf]
      %v627 = vld [vmem:[%s625 + $0x4] sm:$0xf]
      %v628 = vld [vmem:[%s625 + $0x8] sm:$0xf]
      %v629 = vld [vmem:[%s625 + $0xc] sm:$0xf]
      %v634 = vunpack.c.l.b16 %v626
      %v635 = vunpack.c.l.b16 %v627
      %v636 = vunpack.c.l.b16 %v628
      %v637 = vunpack.c.l.b16 %v629
      %v638 = vpack.c.b16 %v635, %v634
      %v639 = vpack.c.b16 %v637, %v636
      %v643 = vsel %vm226, %v621, 0
      %v646 = vsel %vm226, %v622, 0
      %v649 = vsel %vm226, %v623, 0
      %v652 = vsel %vm226, %v624, 0
      %654 = vmatpush.bf16.msra.mxu0 0
      %655 = vmatpush.bf16.msra.mxu0 0
      %656 = vmatpush.bf16.msra.mxu0 0
      %657 = vmatpush.bf16.msra.mxu0 0
      %658 = vmatpush.bf16.msra.mxu0 0
      %659 = vmatpush.bf16.msra.mxu0 0
      %660 = vmatpush.bf16.msra.mxu0 %v639
      %661 = vmatpush.bf16.msra.mxu0 %v638
      %662 = vmatmul.bf16.gmra.mxu0 %v643
      %v663 = vpop.f32.mrf.mxu0
      %v664 = vadd.f32 0.0, %v663
      %v665 = vpop.f32.mrf.mxu0
      %v666 = vadd.f32 0.0, %v665
      %667 = vmatmul.bf16.gmra.mxu0 %v646
      %v668 = vpop.f32.mrf.mxu0
      %v669 = vadd.f32 0.0, %v668
      %v670 = vpop.f32.mrf.mxu0
      %v671 = vadd.f32 0.0, %v670
      %672 = vmatmul.bf16.gmra.mxu0 %v649
      %v673 = vpop.f32.mrf.mxu0
      %v674 = vadd.f32 0.0, %v673
      %v675 = vpop.f32.mrf.mxu0
      %v676 = vadd.f32 0.0, %v675
      %677 = vmatmul.bf16.gmra.mxu0 %v652
      %v678 = vpop.f32.mrf.mxu0
      %v679 = vadd.f32 0.0, %v678
      %v680 = vpop.f32.mrf.mxu0
      %v681 = vadd.f32 0.0, %v680
      %682 = vdwg.mxu0
      %v683 = vadd.f32 %v605, %v664
      %v684 = vadd.f32 %v606, %v666
      %v685 = vadd.f32 %v607, %v669
      %v686 = vadd.f32 %v608, %v671
      %v687 = vadd.f32 %v609, %v674
      %v688 = vadd.f32 %v610, %v676
      %v689 = vadd.f32 %v611, %v679
      %v690 = vadd.f32 %v612, %v681
      %v691 = vld [vmem:[#allocation2 + $0x20] sm:$0xff]
      %v692 = vld [vmem:[#allocation2 + $0x28] sm:$0xff]
      %v693 = vld [vmem:[#allocation2 + $0x30] sm:$0xff]
      %v694 = vld [vmem:[#allocation2 + $0x38] sm:$0xff]
      %v695 = vld [vmem:[#allocation2 + $0x40] sm:$0xff]
      %v696 = vld [vmem:[#allocation2 + $0x48] sm:$0xff]
      %v697 = vld [vmem:[#allocation2 + $0x50] sm:$0xff]
      %v698 = vld [vmem:[#allocation2 + $0x58] sm:$0xff]
      %v699 = vpack.c.bf16 %v692, %v691
      %v700 = vpack.c.bf16 %v694, %v693
      %v701 = vpack.c.bf16 %v696, %v695
      %v702 = vpack.c.bf16 %v698, %v697
      %s703 = scalar_lea.vmem %s1, 96
      %v704 = vld [vmem:[%s703] sm:$0xf]
      %v705 = vld [vmem:[%s703 + $0x4] sm:$0xf]
      %v706 = vld [vmem:[%s703 + $0x8] sm:$0xf]
      %v707 = vld [vmem:[%s703 + $0xc] sm:$0xf]
      %v712 = vunpack.c.l.b16 %v704
      %v713 = vunpack.c.l.b16 %v705
      %v714 = vunpack.c.l.b16 %v706
      %v715 = vunpack.c.l.b16 %v707
      %v716 = vpack.c.b16 %v713, %v712
      %v717 = vpack.c.b16 %v715, %v714
      %v721 = vsel %vm226, %v699, 0
      %v724 = vsel %vm226, %v700, 0
      %v727 = vsel %vm226, %v701, 0
      %v730 = vsel %vm226, %v702, 0
      %732 = vmatpush.bf16.msra.mxu0 0
      %733 = vmatpush.bf16.msra.mxu0 0
      %734 = vmatpush.bf16.msra.mxu0 0
      %735 = vmatpush.bf16.msra.mxu0 0
      %736 = vmatpush.bf16.msra.mxu0 0
      %737 = vmatpush.bf16.msra.mxu0 0
      %738 = vmatpush.bf16.msra.mxu0 %v717
      %739 = vmatpush.bf16.msra.mxu0 %v716
      %740 = vmatmul.bf16.gmra.mxu0 %v721
      %v741 = vpop.f32.mrf.mxu0
      %v742 = vadd.f32 0.0, %v741
      %v743 = vpop.f32.mrf.mxu0
      %v744 = vadd.f32 0.0, %v743
      %745 = vmatmul.bf16.gmra.mxu0 %v724
      %v746 = vpop.f32.mrf.mxu0
      %v747 = vadd.f32 0.0, %v746
      %v748 = vpop.f32.mrf.mxu0
      %v749 = vadd.f32 0.0, %v748
      %750 = vmatmul.bf16.gmra.mxu0 %v727
      %v751 = vpop.f32.mrf.mxu0
      %v752 = vadd.f32 0.0, %v751
      %v753 = vpop.f32.mrf.mxu0
      %v754 = vadd.f32 0.0, %v753
      %755 = vmatmul.bf16.gmra.mxu0 %v730
      %v756 = vpop.f32.mrf.mxu0
      %v757 = vadd.f32 0.0, %v756
      %v758 = vpop.f32.mrf.mxu0
      %v759 = vadd.f32 0.0, %v758
      %760 = vdwg.mxu0
      %v761 = vadd.f32 %v683, %v742
      %v762 = vadd.f32 %v684, %v744
      %v763 = vadd.f32 %v685, %v747
      %v764 = vadd.f32 %v686, %v749
      %v765 = vadd.f32 %v687, %v752
      %v766 = vadd.f32 %v688, %v754
      %v767 = vadd.f32 %v689, %v757
      %v768 = vadd.f32 %v690, %v759
      %v769 = vld [vmem:[#allocation2 + $0x21] sm:$0xff]
      %v770 = vld [vmem:[#allocation2 + $0x29] sm:$0xff]
      %v771 = vld [vmem:[#allocation2 + $0x31] sm:$0xff]
      %v772 = vld [vmem:[#allocation2 + $0x39] sm:$0xff]
      %v773 = vld [vmem:[#allocation2 + $0x41] sm:$0xff]
      %v774 = vld [vmem:[#allocation2 + $0x49] sm:$0xff]
      %v775 = vld [vmem:[#allocation2 + $0x51] sm:$0xff]
      %v776 = vld [vmem:[#allocation2 + $0x59] sm:$0xff]
      %v777 = vpack.c.bf16 %v770, %v769
      %v778 = vpack.c.bf16 %v772, %v771
      %v779 = vpack.c.bf16 %v774, %v773
      %v780 = vpack.c.bf16 %v776, %v775
      %s781 = scalar_lea.vmem %s1, 112
      %v782 = vld [vmem:[%s781] sm:$0xf]
      %v783 = vld [vmem:[%s781 + $0x4] sm:$0xf]
      %v784 = vld [vmem:[%s781 + $0x8] sm:$0xf]
      %v785 = vld [vmem:[%s781 + $0xc] sm:$0xf]
      %v790 = vunpack.c.l.b16 %v782
      %v791 = vunpack.c.l.b16 %v783
      %v792 = vunpack.c.l.b16 %v784
      %v793 = vunpack.c.l.b16 %v785
      %v794 = vpack.c.b16 %v791, %v790
      %v795 = vpack.c.b16 %v793, %v792
      %v799 = vsel %vm226, %v777, 0
      %v802 = vsel %vm226, %v778, 0
      %v805 = vsel %vm226, %v779, 0
      %v808 = vsel %vm226, %v780, 0
      %810 = vmatpush.bf16.msra.mxu0 0
      %811 = vmatpush.bf16.msra.mxu0 0
      %812 = vmatpush.bf16.msra.mxu0 0
      %813 = vmatpush.bf16.msra.mxu0 0
      %814 = vmatpush.bf16.msra.mxu0 0
      %815 = vmatpush.bf16.msra.mxu0 0
      %816 = vmatpush.bf16.msra.mxu0 %v795
      %817 = vmatpush.bf16.msra.mxu0 %v794
      %818 = vmatmul.bf16.gmra.mxu0 %v799
      %v819 = vpop.f32.mrf.mxu0
      %v820 = vadd.f32 0.0, %v819
      %v821 = vpop.f32.mrf.mxu0
      %v822 = vadd.f32 0.0, %v821
      %823 = vmatmul.bf16.gmra.mxu0 %v802
      %v824 = vpop.f32.mrf.mxu0
      %v825 = vadd.f32 0.0, %v824
      %v826 = vpop.f32.mrf.mxu0
      %v827 = vadd.f32 0.0, %v826
      %828 = vmatmul.bf16.gmra.mxu0 %v805
      %v829 = vpop.f32.mrf.mxu0
      %v830 = vadd.f32 0.0, %v829
      %v831 = vpop.f32.mrf.mxu0
      %v832 = vadd.f32 0.0, %v831
      %833 = vmatmul.bf16.gmra.mxu0 %v808
      %v834 = vpop.f32.mrf.mxu0
      %v835 = vadd.f32 0.0, %v834
      %v836 = vpop.f32.mrf.mxu0
      %v837 = vadd.f32 0.0, %v836
      %838 = vdwg.mxu0
      %v839 = vadd.f32 %v761, %v820
      %v840 = vadd.f32 %v762, %v822
      %v841 = vadd.f32 %v763, %v825
      %v842 = vadd.f32 %v764, %v827
      %v843 = vadd.f32 %v765, %v830
      %v844 = vadd.f32 %v766, %v832
      %v845 = vadd.f32 %v767, %v835
      %v846 = vadd.f32 %v768, %v837
      %v847 = vld [vmem:[#allocation2 + $0x22] sm:$0xff]
      %v848 = vld [vmem:[#allocation2 + $0x2a] sm:$0xff]
      %v849 = vld [vmem:[#allocation2 + $0x32] sm:$0xff]
      %v850 = vld [vmem:[#allocation2 + $0x3a] sm:$0xff]
      %v851 = vld [vmem:[#allocation2 + $0x42] sm:$0xff]
      %v852 = vld [vmem:[#allocation2 + $0x4a] sm:$0xff]
      %v853 = vld [vmem:[#allocation2 + $0x52] sm:$0xff]
      %v854 = vld [vmem:[#allocation2 + $0x5a] sm:$0xff]
      %v855 = vpack.c.bf16 %v848, %v847
      %v856 = vpack.c.bf16 %v850, %v849
      %v857 = vpack.c.bf16 %v852, %v851
      %v858 = vpack.c.bf16 %v854, %v853
      %s859 = scalar_lea.vmem %s1, 128
      %v860 = vld [vmem:[%s859] sm:$0xf]
      %v861 = vld [vmem:[%s859 + $0x4] sm:$0xf]
      %v862 = vld [vmem:[%s859 + $0x8] sm:$0xf]
      %v863 = vld [vmem:[%s859 + $0xc] sm:$0xf]
      %v868 = vunpack.c.l.b16 %v860
      %v869 = vunpack.c.l.b16 %v861
      %v870 = vunpack.c.l.b16 %v862
      %v871 = vunpack.c.l.b16 %v863
      %v872 = vpack.c.b16 %v869, %v868
      %v873 = vpack.c.b16 %v871, %v870
      %v877 = vsel %vm226, %v855, 0
      %v880 = vsel %vm226, %v856, 0
      %v883 = vsel %vm226, %v857, 0
      %v886 = vsel %vm226, %v858, 0
      %888 = vmatpush.bf16.msra.mxu0 0
      %889 = vmatpush.bf16.msra.mxu0 0
      %890 = vmatpush.bf16.msra.mxu0 0
      %891 = vmatpush.bf16.msra.mxu0 0
      %892 = vmatpush.bf16.msra.mxu0 0
      %893 = vmatpush.bf16.msra.mxu0 0
      %894 = vmatpush.bf16.msra.mxu0 %v873
      %895 = vmatpush.bf16.msra.mxu0 %v872
      %896 = vmatmul.bf16.gmra.mxu0 %v877
      %v897 = vpop.f32.mrf.mxu0
      %v898 = vadd.f32 0.0, %v897
      %v899 = vpop.f32.mrf.mxu0
      %v900 = vadd.f32 0.0, %v899
      %901 = vmatmul.bf16.gmra.mxu0 %v880
      %v902 = vpop.f32.mrf.mxu0
      %v903 = vadd.f32 0.0, %v902
      %v904 = vpop.f32.mrf.mxu0
      %v905 = vadd.f32 0.0, %v904
      %906 = vmatmul.bf16.gmra.mxu0 %v883
      %v907 = vpop.f32.mrf.mxu0
      %v908 = vadd.f32 0.0, %v907
      %v909 = vpop.f32.mrf.mxu0
      %v910 = vadd.f32 0.0, %v909
      %911 = vmatmul.bf16.gmra.mxu0 %v886
      %v912 = vpop.f32.mrf.mxu0
      %v913 = vadd.f32 0.0, %v912
      %v914 = vpop.f32.mrf.mxu0
      %v915 = vadd.f32 0.0, %v914
      %916 = vdwg.mxu0
      %v917 = vadd.f32 %v839, %v898
      %v918 = vadd.f32 %v840, %v900
      %v919 = vadd.f32 %v841, %v903
      %v920 = vadd.f32 %v842, %v905
      %v921 = vadd.f32 %v843, %v908
      %v922 = vadd.f32 %v844, %v910
      %v923 = vadd.f32 %v845, %v913
      %v924 = vadd.f32 %v846, %v915
      %v925 = vld [vmem:[%s2] sm:$0x1]
      %v927 = vperm.slane %v925, 0
      %v929 = vadd.f32 %v917, %v927
      %v930 = vadd.f32 %v918, %v927
      %v931 = vadd.f32 %v919, %v927
      %v932 = vadd.f32 %v920, %v927
      %v933 = vadd.f32 %v921, %v927
      %v934 = vadd.f32 %v922, %v927
      %v935 = vadd.f32 %v923, %v927
      %v936 = vadd.f32 %v924, %v927
      %v937 = vmax.f32 %v929, 0.0
      %v938 = vmax.f32 %v930, 0.0
      %v939 = vmax.f32 %v931, 0.0
      %v940 = vmax.f32 %v932, 0.0
      %v941 = vmax.f32 %v933, 0.0
      %v942 = vmax.f32 %v934, 0.0
      %v943 = vmax.f32 %v935, 0.0
      %v944 = vmax.f32 %v936, 0.0
      %945 = vst.msk [vmem:[#allocation3] sm:$0xff] %vm226, %v937
      %946 = vst.msk [vmem:[#allocation3 + $0x8] sm:$0xff] %vm226, %v938
      %947 = vst.msk [vmem:[#allocation3 + $0x10] sm:$0xff] %vm226, %v939
      %948 = vst.msk [vmem:[#allocation3 + $0x18] sm:$0xff] %vm226, %v940
      %949 = vst.msk [vmem:[#allocation3 + $0x20] sm:$0xff] %vm226, %v941
      %950 = vst.msk [vmem:[#allocation3 + $0x28] sm:$0xff] %vm226, %v942
      %951 = vst.msk [vmem:[#allocation3 + $0x30] sm:$0xff] %vm226, %v943
      %952 = vst.msk [vmem:[#allocation3 + $0x38] sm:$0xff] %vm226, %v944
      %v953 = vld [vmem:[#allocation3] ss:$2 sm:$0xff]
      %s954 = scalar_lea.vmem [#allocation3], 16
      %v955 = vld [vmem:[%s954] ss:$2 sm:$0xff]
      %s956 = scalar_lea.vmem [#allocation3], 32
      %v957 = vld [vmem:[%s956] ss:$2 sm:$0xff]
      %s958 = scalar_lea.vmem [#allocation3], 48
      %v959 = vld [vmem:[%s958] ss:$2 sm:$0xff]
      %s960 = scalar_lea.vmem [#allocation3], 1
      %v961 = vld [vmem:[%s960] ss:$2 sm:$0xff]
      %s962 = scalar_lea.vmem [#allocation3], 17
      %v963 = vld [vmem:[%s962] ss:$2 sm:$0xff]
      %s964 = scalar_lea.vmem [#allocation3], 33
      %v965 = vld [vmem:[%s964] ss:$2 sm:$0xff]
      %s966 = scalar_lea.vmem [#allocation3], 49
      %v967 = vld [vmem:[%s966] ss:$2 sm:$0xff]
      %v968 = vmax.f32 %v953, %v961
      %v969 = vmax.f32 %v955, %v963
      %v970 = vmax.f32 %v957, %v965
      %v971 = vmax.f32 %v959, %v967
      %972 = vst.msk [vmem:[#allocation4] sm:$0xff] %vm226, %v968
      %973 = vst.msk [vmem:[#allocation4 + $0x8] sm:$0xff] %vm226, %v969
      %974 = vst.msk [vmem:[#allocation4 + $0x10] sm:$0xff] %vm226, %v970
      %975 = vst.msk [vmem:[#allocation4 + $0x18] sm:$0xff] %vm226, %v971
      %v976 = vld [vmem:[#allocation4] sm:$0xf]
      %v977 = vld [vmem:[#allocation4 + $0x8] sm:$0xf]
      %v978 = vmax.f32 %v976, %v977
      %v979 = vpack.c.bf16 %v978, %v978
      %vm980 = vcmask 254976
      %981 = vst.msk [vmem:[%s192] sm:$0x3] %vm980, %v979
      %v982 = vld [vmem:[#allocation4 + $0x10] sm:$0xf]
      %v983 = vld [vmem:[#allocation4 + $0x18] sm:$0xf]
      %v984 = vmax.f32 %v982, %v983
      %v985 = vpack.c.bf16 %v984, %v984
      %s986 = scalar_lea.vmem %s192, 2
      %987 = vst.msk [vmem:[%s986] sm:$0x3] %vm980, %v985
      %s988 = smul.u32 2, %s19
      %p989 = scmp.lt.s32.totalorder %s18, 1
      %s990 = scalar_select %p989, %s18, 1
      %p991 = scmp.lt.s32.totalorder %s988, 3
      %s992 = scalar_select %p991, %s988, 3
      %s993 = smul.addr %s990, 4
      %s994 = sadd.s32 %s992, %s993
      %s995 = smul.addr %s994, 2
      %s996 = scalar_lea.vmem %s3, %s995
      // Predicated region
      $region33: #{_lambda_.8} parent=31 // pred_check
        %p997 = pneg %p114
      $region34: #{_lambda_.8} parent=31 // pred_check_branch
        %999 = sbr.rel (%p997) target = $region36
      $region35: #{_lambda_.8} parent=31 // pred_region
        %s1000 = smul.u32 2, %s19
      $region36: #{_lambda_.8} parent=31 // pred_fallthru
        _
    $region32: #{_lambda_.8} parent=5 // pred_fallthru
      _
    %p1001 = scmp.le.s32.totalorder 2, %s9
    // Predicated region
    $region37: #{_lambda_.8} parent=5 // pred_check
      %p1002 = pneg %p1001
    $region38: #{_lambda_.8} parent=5 // pred_check_branch
      %1004 = sbr.rel (%p1002) target = $region40
    $region39: #{_lambda_.8} parent=5 // pred_region
      %s1005 = ssub.s32 %s9, 2
      // Predicated region
      $region41: #{_lambda_.8} parent=39 // pred_check
        %p1006 = pneg %p120
      $region42: #{_lambda_.8} parent=39 // pred_check_branch
        %1008 = sbr.rel (%p1006) target = $region44
      $region43: #{_lambda_.8} parent=39 // pred_region
        %s1009 = smul.u32 2, %s21
        %p1010 = scmp.lt.s32.totalorder %s20, 1
        %s1011 = scalar_select %p1010, %s20, 1
        %p1012 = scmp.lt.s32.totalorder %s1009, 3
        %s1013 = scalar_select %p1012, %s1009, 3
        %s1014 = smul.addr %s1011, 4
        %s1015 = sadd.s32 %s1013, %s1014
        %s1016 = smul.addr %s1015, 2
        %s1017 = scalar_lea.vmem %s3, %s1016
      $region44: #{_lambda_.8} parent=39 // pred_fallthru
        _
    $region40: #{_lambda_.8} parent=5 // pred_fallthru
      _
  $region6: #{_lambda_.8} parent=0 // loop_footer
    %s13 = sadd.s32 1, %s9
  $region7: #{_lambda_.8} parent=0 // loop_footer_branch
    %8 = sbr.rel target = $region3
  $region8: #{_lambda_.8} parent=0 // loop_exit
    _

// kernel: _lambda_.11
$region0: #{_lambda_.11}
  #allocation0 [shape = 'u32[]', space=smem, size = 0x4, offset = 0x4, fixed_abs, tag = 'smem constant byte address 0x4 - core index']
  #allocation1 [shape = 'u32[72,128]{1,0:T(1,128)}', space=vmem, size = 0x9000, scoped, tag = 'internal scratch']
  %s0 = inlined_call_operand.vmem [shape: bf16[2,256], index: 0, kind: input, shape index: {}]
  %s1 = inlined_call_operand.vmem [shape: bf16[256,128], index: 1, kind: input, shape index: {}]
  %s2 = inlined_call_operand.vmem [shape: f32[1,128], index: 2, kind: input, shape index: {}]
  %s3 = inlined_call_operand.hbm [shape: f32[2,128], index: 3, kind: output, shape index: {}]
  %s4 = sld [smem:[#allocation0]]
  $region22: #{_lambda_.11} parent=0
    _
  %s6 = ssub.s32 1, %s4
  %s7 = scalar_select 0, %s6, %s4
  $region1: #{_lambda_.11} parent=0
    #allocation2 [shape = 'u8[1024]{0}', space=vmem, size = 0x400, scoped, tag = 'output window, operand 0, single buffered']
    #allocation3 [shape = 's32[1]{0}', space=sflag, size = 0x4, scoped, tag = 'scoped memory for _lambda_.11']
    %8 = vsyncpa [#allocation3], 0
    // Predicated region
    $region2: #{_lambda_.11} parent=1 // pred_check
      _
    $region3: #{_lambda_.11} parent=1 // pred_check_branch
      %10 = sbr.rel (0) target = $region5
    $region4: #{_lambda_.11} parent=1 // pred_region
      _
    $region5: #{_lambda_.11} parent=1 // pred_fallthru
      _
    // Predicated region
    $region6: #{_lambda_.11} parent=1 // pred_check
      _
    $region7: #{_lambda_.11} parent=1 // pred_check_branch
      %12 = sbr.rel (0) target = $region9
    $region8: #{_lambda_.11} parent=1 // pred_region
      _
    $region9: #{_lambda_.11} parent=1 // pred_fallthru
      _
    // Predicated region
    $region10: #{_lambda_.11} parent=1 // pred_check
      _
    $region11: #{_lambda_.11} parent=1 // pred_check_branch
      %14 = sbr.rel (0) target = $region13
    $region12: #{_lambda_.11} parent=1 // pred_region
      _
    $region13: #{_lambda_.11} parent=1 // pred_fallthru
      _
    %v15 = vld [vmem:[%s0] sm:$0x3]
    %v16 = vld [vmem:[%s1] sm:$0xf]
    %v17 = vld [vmem:[%s1 + $0x4] sm:$0xf]
    %v18 = vld [vmem:[%s1 + $0x8] sm:$0xf]
    %v19 = vld [vmem:[%s1 + $0xc] sm:$0xf]
    %v20 = vld [vmem:[%s1 + $0x10] sm:$0xf]
    %v21 = vld [vmem:[%s1 + $0x14] sm:$0xf]
    %v22 = vld [vmem:[%s1 + $0x18] sm:$0xf]
    %v23 = vld [vmem:[%s1 + $0x1c] sm:$0xf]
    %v24 = vld [vmem:[%s1 + $0x20] sm:$0xf]
    %v25 = vld [vmem:[%s1 + $0x24] sm:$0xf]
    %v26 = vld [vmem:[%s1 + $0x28] sm:$0xf]
    %v27 = vld [vmem:[%s1 + $0x2c] sm:$0xf]
    %v28 = vld [vmem:[%s1 + $0x30] sm:$0xf]
    %v29 = vld [vmem:[%s1 + $0x34] sm:$0xf]
    %v30 = vld [vmem:[%s1 + $0x38] sm:$0xf]
    %v31 = vld [vmem:[%s1 + $0x3c] sm:$0xf]
    %v32 = vld [vmem:[%s1 + $0x40] sm:$0xf]
    %v33 = vld [vmem:[%s1 + $0x44] sm:$0xf]
    %v34 = vld [vmem:[%s1 + $0x48] sm:$0xf]
    %v35 = vld [vmem:[%s1 + $0x4c] sm:$0xf]
    %v36 = vld [vmem:[%s1 + $0x50] sm:$0xf]
    %v37 = vld [vmem:[%s1 + $0x54] sm:$0xf]
    %v38 = vld [vmem:[%s1 + $0x58] sm:$0xf]
    %v39 = vld [vmem:[%s1 + $0x5c] sm:$0xf]
    %v40 = vld [vmem:[%s1 + $0x60] sm:$0xf]
    %v41 = vld [vmem:[%s1 + $0x64] sm:$0xf]
    %v42 = vld [vmem:[%s1 + $0x68] sm:$0xf]
    %v43 = vld [vmem:[%s1 + $0x6c] sm:$0xf]
    %v44 = vld [vmem:[%s1 + $0x70] sm:$0xf]
    %v45 = vld [vmem:[%s1 + $0x74] sm:$0xf]
    %v46 = vld [vmem:[%s1 + $0x78] sm:$0xf]
    %v47 = vld [vmem:[%s1 + $0x7c] sm:$0xf]
    %v48 = vld [vmem:[%s2] sm:$0x1]
    %v50 = vperm.slane %v48, 0
    %53 = vst [vmem:[#allocation1] ss:$9 sm:$0xff] %v15
    %v54 = vld [vmem:[#allocation1] sm:$0xff]
    %v55 = vld [vmem:[#allocation1 + $0x9] sm:$0xff]
    %v90 = vunpack.c.l.b16 %v16
    %v91 = vunpack.c.l.b16 %v17
    %v92 = vunpack.c.l.b16 %v18
    %v93 = vunpack.c.l.b16 %v19
    %v94 = vunpack.c.l.b16 %v20
    %v95 = vunpack.c.l.b16 %v21
    %v96 = vunpack.c.l.b16 %v22
    %v97 = vunpack.c.l.b16 %v23
    %v98 = vunpack.c.l.b16 %v24
    %v99 = vunpack.c.l.b16 %v25
    %v100 = vunpack.c.l.b16 %v26
    %v101 = vunpack.c.l.b16 %v27
    %v102 = vunpack.c.l.b16 %v28
    %v103 = vunpack.c.l.b16 %v29
    %v104 = vunpack.c.l.b16 %v30
    %v105 = vunpack.c.l.b16 %v31
    %v106 = vunpack.c.l.b16 %v32
    %v107 = vunpack.c.l.b16 %v33
    %v108 = vunpack.c.l.b16 %v34
    %v109 = vunpack.c.l.b16 %v35
    %v110 = vunpack.c.l.b16 %v36
    %v111 = vunpack.c.l.b16 %v37
    %v112 = vunpack.c.l.b16 %v38
    %v113 = vunpack.c.l.b16 %v39
    %v114 = vunpack.c.l.b16 %v40
    %v115 = vunpack.c.l.b16 %v41
    %v116 = vunpack.c.l.b16 %v42
    %v117 = vunpack.c.l.b16 %v43
    %v118 = vunpack.c.l.b16 %v44
    %v119 = vunpack.c.l.b16 %v45
    %v120 = vunpack.c.l.b16 %v46
    %v121 = vunpack.c.l.b16 %v47
    %v122 = vpack.c.b16 %v91, %v90
    %v123 = vpack.c.b16 %v93, %v92
    %v124 = vpack.c.b16 %v95, %v94
    %v125 = vpack.c.b16 %v97, %v96
    %v126 = vpack.c.b16 %v99, %v98
    %v127 = vpack.c.b16 %v101, %v100
    %v128 = vpack.c.b16 %v103, %v102
    %v129 = vpack.c.b16 %v105, %v104
    %v130 = vpack.c.b16 %v107, %v106
    %v131 = vpack.c.b16 %v109, %v108
    %v132 = vpack.c.b16 %v111, %v110
    %v133 = vpack.c.b16 %v113, %v112
    %v134 = vpack.c.b16 %v115, %v114
    %v135 = vpack.c.b16 %v117, %v116
    %v136 = vpack.c.b16 %v119, %v118
    %v137 = vpack.c.b16 %v121, %v120
    %154 = vmatpush.bf16.msra.mxu0 %v129
    %155 = vmatpush.bf16.msra.mxu0 %v128
    %156 = vmatpush.bf16.msra.mxu0 %v127
    %157 = vmatpush.bf16.msra.mxu0 %v126
    %158 = vmatpush.bf16.msra.mxu0 %v125
    %159 = vmatpush.bf16.msra.mxu0 %v124
    %160 = vmatpush.bf16.msra.mxu0 %v123
    %161 = vmatpush.bf16.msra.mxu0 %v122
    %162 = vmatmul.bf16.gmra.mxu0 %v54
    %v163 = vpop.f32.mrf.mxu0
    %v164 = vadd.f32 %v50, %v163
    %v165 = vpop.f32.mrf.mxu0
    %166 = vdwg.mxu0
    %167 = vmatpush.bf16.msra.mxu0 %v137
    %168 = vmatpush.bf16.msra.mxu0 %v136
    %169 = vmatpush.bf16.msra.mxu0 %v135
    %170 = vmatpush.bf16.msra.mxu0 %v134
    %171 = vmatpush.bf16.msra.mxu0 %v133
    %172 = vmatpush.bf16.msra.mxu0 %v132
    %173 = vmatpush.bf16.msra.mxu0 %v131
    %174 = vmatpush.bf16.msra.mxu0 %v130
    %175 = vmatmul.bf16.gmra.mxu0 %v55
    %v176 = vpop.f32.mrf.mxu0
    %v177 = vadd.f32 %v164, %v176
    %v178 = vpop.f32.mrf.mxu0
    %179 = vdwg.mxu0
    %180 = vst [vmem:[#allocation2] sm:$0x3] %v177
    // Predicated region
    $region14: #{_lambda_.11} parent=1 // pred_check
      _
    $region15: #{_lambda_.11} parent=1 // pred_check_branch
      %182 = sbr.rel (0) target = $region17
    $region16: #{_lambda_.11} parent=1 // pred_region
      %184 = vsyncadd [#allocation3], 0
      %s186 = sshll.u32 [#allocation2], 4
      %s187 = int_to_ptr.vmem [resolvable:$true] %s186
      %s188 = sshll.u32 %s3, 4
      %s189 = int_to_ptr.hbm [resolvable:$true] %s188
      %191 = dma.vmem_to_hbm [thread:$0]  %s187, 32, %s189, [#allocation3]
    $region17: #{_lambda_.11} parent=1 // pred_fallthru
      _
    // Predicated region
    $region18: #{_lambda_.11} parent=1 // pred_check
      _
    $region19: #{_lambda_.11} parent=1 // pred_check_branch
      %193 = sbr.rel (0) target = $region21
    $region20: #{_lambda_.11} parent=1 // pred_region
      %195 = dma.done [#allocation3], 32
    $region21: #{_lambda_.11} parent=1 // pred_fallthru
      _
    %196 = vsyncpa [#allocation3], 1

</llo_original>
